<compile_context>
chip_gen: v6e
topology: v6e:2x2x1
jax: 0.10.0
libtpu: 0.0.40
codegen_flags: <defaults>
</compile_context>

<pallas_src>
import functools

import jax
import jax.numpy as jnp
from jax import lax
from jax.experimental import pallas as pl
from jax.experimental.pallas import tpu as pltpu


# ----------------------------- small helpers ------------------------------- #

def _round_up(v, m):
    return ((v + m - 1) // m) * m


@functools.lru_cache(maxsize=None)
def _device_kind():
    try:
        return jax.devices()[0].device_kind.lower()
    except Exception:
        return ""


@functools.lru_cache(maxsize=None)
def _vmem_limit_bytes():
    cap = 128 * 1024 * 1024
    try:
        cap = int(pltpu.get_tpu_info().vmem_capacity_bytes)   # 64 MiB on v7x
    except Exception:
        pass
    return min((cap * 3) // 4, 96 * 1024 * 1024)


def _pick_tn(cpad, lr):
    """Output-channel tile: lane-dense, MXU-width and VMEM aware."""
    if cpad % 256 != 0:
        return 128
    if "v5" in _device_kind():
        return 128                     # v5e MXU is 128x128: tn=256 buys nothing
    # double-buffered bf16 out + f32 accumulator + dot temporaries per tile
    need = lr * 256 * (2 * 2 + 4 + 4)
    return 256 if 3 * need < _vmem_limit_bytes() else 128


def _tap_group_size(cin):
    """Taps merged per MXU matmul.  Only lane-aligned (multiple of 128) channel
    counts are merged so the in-kernel lane-concatenate is an aligned copy."""
    if cin % 128 != 0 or cin >= 256:
        return 1
    return 3 if 3 * cin >= 256 else 9


def _group_taps(taps, g):
    return tuple(tuple(taps[i:i + g]) for i in range(0, len(taps), g))


# ----------------------------- Pallas kernels ------------------------------ #

def _accumulate_taps(x_ref, w_ref, tap_groups, lr, tn):
    """sum_t x_slab(t) @ w[t], f32 accumulation (consecutive dots feed one
    accumulator before any elementwise use).

    x_ref:  (P, 1, R, Cin) bf16 phase-split, row-flattened input of one image
    w_ref:  (G, K, tn)     bf16 weights, K = taps_per_group * Cin
    tap_groups: static ((phase, row_offset), ...) per group; taps inside a
                group are lane-concatenated in VMEM only so the MXU sees a
                deeper contraction.
    """
    acc = jnp.zeros((lr, tn), jnp.float32)
    for gi, group in enumerate(tap_groups):
        slabs = [x_ref[p, 0, pl.ds(r0, lr), :] for (p, r0) in group]
        lhs = slabs[0] if len(slabs) == 1 else jnp.concatenate(slabs, axis=-1)
        acc = acc + jnp.dot(lhs, w_ref[gi], preferred_element_type=jnp.float32)
    return acc


def _conv1_scatter_kernel(x_ref, w_ref, b_ref, o_ref, *,
                          tap_groups, lr, wg, wo, off, rtot):
    """3x3 conv (+stride) + folded-BN bias + ReLU.  Wrap columns are zeroed and
    the result is stored at row `off` of a zero-bordered block, so the output
    already IS the zero-padded, row-flattened layout conv2 consumes."""
    tn = o_ref.shape[-1]
    acc = _accumulate_taps(x_ref, w_ref, tap_groups, lr, tn)
    y = jnp.maximum(acc + b_ref[...], 0.0)
    col = lax.broadcasted_iota(jnp.int32, (lr, 1), 0) % wg
    y = jnp.where(col < wo, y, 0.0).astype(o_ref.dtype)
    o_ref[0, pl.ds(0, off), :] = jnp.zeros((off, tn), o_ref.dtype)
    o_ref[0, pl.ds(off, lr), :] = y
    tail = rtot - off - lr
    o_ref[0, pl.ds(off + lr, tail), :] = jnp.zeros((tail, tn), o_ref.dtype)


def _conv_bn_add_kernel(x_ref, w_ref, b_ref, r_ref, o_ref, *, tap_groups, lr):
    """3x3 conv (stride 1) + folded-BN bias + identity shortcut + final ReLU."""
    acc = _accumulate_taps(x_ref, w_ref, tap_groups, lr, o_ref.shape[-1])
    y = acc + b_ref[...] + r_ref[0].astype(jnp.float32)
    o_ref[0] = jnp.maximum(y, 0.0).astype(o_ref.dtype)


def _conv_bn_proj_kernel(x_ref, w_ref, b_ref, xs_ref, wsc_ref, bsc_ref, o_ref,
                         *, tap_groups, lr):
    """3x3 conv (stride 1) + folded-BN bias + fused (1x1 conv + BN) projection
    shortcut + final ReLU."""
    acc = _accumulate_taps(x_ref, w_ref, tap_groups, lr, o_ref.shape[-1])
    sc = jnp.dot(xs_ref[0], wsc_ref[...], preferred_element_type=jnp.float32)
    y = acc + b_ref[...] + sc + bsc_ref[...]
    o_ref[0] = jnp.maximum(y, 0.0).astype(o_ref.dtype)


def _conv_call(kernel, args, in_specs, *, n, out_rows, cpad, tn, flops, out_dtype):
    """Shared pallas_call wrapper.  Grid = (cout_tile, image): the weight block
    (index_map independent of the inner axis) stays resident in VMEM while the
    per-image activation blocks stream."""
    n_ct = cpad // tn
    bytes_accessed = n_ct * int(args[0].size) * args[0].dtype.itemsize
    bytes_accessed += sum(int(a.size) * a.dtype.itemsize for a in args[1:])
    bytes_accessed += n * out_rows * cpad * jnp.dtype(out_dtype).itemsize
    return pl.pallas_call(
        kernel,
        out_shape=jax.ShapeDtypeStruct((n, out_rows, cpad), out_dtype),
        grid_spec=pltpu.PrefetchScalarGridSpec(
            num_scalar_prefetch=0,
            grid=(n_ct, n),
            in_specs=in_specs,
            out_specs=pl.BlockSpec((1, out_rows, tn), lambda j, b: (b, 0, j)),
        ),
        compiler_params=pltpu.CompilerParams(
            dimension_semantics=("parallel", "parallel"),
            vmem_limit_bytes=_vmem_limit_bytes()),
        cost_estimate=pl.CostEstimate(flops=int(flops), transcendentals=0,
                                      bytes_accessed=int(bytes_accessed)),
    )(*args)


# ------------------------------- JAX glue ---------------------------------- #

def _fold_bn(bn, eps=1e-5):
    gamma, beta, mean, var = bn
    scale = gamma / jnp.sqrt(var + eps)
    bias = beta - mean * scale
    return scale, bias


def _pad_c(v, cpad):
    return jnp.pad(v.astype(jnp.float32), (0, cpad - v.shape[0])).reshape(1, cpad)


def _w3x3_to_taps(w_oihw, scale, cin_pad, cout_pad, group):
    """(Cout, Cin, 3, 3) -> (9//group, group*cin_pad, cout_pad) bf16, tap index
    kh*3+kw, BN scale folded into the output channels, zero-padded channels."""
    cout, cin, kh, kw = w_oihw.shape
    w = jnp.transpose(w_oihw, (2, 3, 1, 0)).reshape(kh * kw, cin, cout)
    w = w * scale.reshape(1, 1, cout)
    w = jnp.pad(w, ((0, 0), (0, cin_pad - cin), (0, cout_pad - cout)))
    return w.reshape(kh * kw // group, group * cin_pad, cout_pad).astype(jnp.bfloat16)


def _w1x1_to_mat(w_oihw, scale, cout_pad):
    cout, cin, _, _ = w_oihw.shape
    w = jnp.transpose(w_oihw, (2, 3, 1, 0)).reshape(cin, cout) * scale.reshape(1, cout)
    return jnp.pad(w, ((0, 0), (0, cout_pad - cout))).astype(jnp.bfloat16)


def _prep_conv_input(x_nhwc, stride, wg):
    """Pad (1,1) spatially, split into stride x stride phases and flatten each
    phase's (height, wg) grid into rows (no data expansion).  Each 3x3 tap is
    then a contiguous row-slab of one phase."""
    n, h, w, c = x_nhwc.shape
    s = stride
    hp, wp = h + 2, w + 2
    hps = -(-hp // s)
    xp = jnp.pad(x_nhwc,
                 ((0, 0), (1, 1 + hps * s - hp), (1, 1 + wg * s - wp), (0, 0)))
    ph = xp.reshape(n, hps, s, wg, s, c).transpose(2, 4, 0, 1, 3, 5)
    ph = ph.reshape(s * s, n, hps * wg, c)
    r = _round_up(hps * wg + 2 * wg + 3, 8)        # cover the largest tap offset
    ph = jnp.pad(ph, ((0, 0), (0, 0), (0, r - hps * wg), (0, 0)))
    taps = tuple(((kh % s) * s + (kw % s), (kh // s) * wg + (kw // s))
                 for kh in range(3) for kw in range(3))
    return ph, taps


def block_forward(x_nchw, params, stride):
    """Pallas implementation of Block.forward (inference-mode BatchNorm)."""
    # TODO(synk): in a full network keep activations NHWC/bf16 between blocks
    # and drop these layout transposes / the final f32 cast.
    x = jnp.transpose(x_nchw, (0, 2, 3, 1)).astype(jnp.bfloat16)   # NCHW -> NHWC
    n, h, w, cin = x.shape
    cout = params["w1"].shape[0]
    cpad = _round_up(cout, 128)                    # lane-dense output channels

    ho = (h - 1) // stride + 1
    wo = (w - 1) // stride + 1
    # common row-grid width: conv1's phase-grid width == conv2's padded width
    wg = max(-(-(w + 2) // stride), wo + 2)
    lr = ho * wg                                   # conv output rows per image
    delta = (-(wg + 1)) % 16                       # 16-align conv1's interior rows
    off = wg + 1 + delta
    r2 = _round_up(lr + 2 * wg + 2 + delta, 8)     # rows of conv2's input layout

    s1, b1 = _fold_bn(params["bn1"])
    s2, b2 = _fold_bn(params["bn2"])

    # ---- conv1: 3x3/stride + BN + ReLU, scattered straight into the padded,
    #      row-flattened layout conv2 consumes (no XLA relayout of y1) -------
    xf1, taps1 = _prep_conv_input(x, stride, wg)
    p1, _, r1, _ = xf1.shape
    g1 = _tap_group_size(cin)
    w1 = _w3x3_to_taps(params["w1"], s1, cin, cpad, g1)
    tn1 = _pick_tn(cpad, lr)
    kern1 = functools.partial(
        _conv1_scatter_kernel, tap_groups=_group_taps(taps1, g1),
        lr=lr, wg=wg, wo=wo, off=off, rtot=r2)
    in_specs1 = [
        pl.BlockSpec((p1, 1, r1, cin), lambda j, b: (0, b, 0, 0)),
        pl.BlockSpec((9 // g1, g1 * cin, tn1), lambda j, b: (0, 0, j)),
        pl.BlockSpec((1, tn1), lambda j, b: (0, j)),
    ]
    y1 = _conv_call(kern1, [xf1, w1, _pad_c(b1, cpad)], in_specs1,
                    n=n, out_rows=r2, cpad=cpad, tn=tn1,
                    flops=2 * n * lr * cpad * 9 * cin, out_dtype=jnp.bfloat16)
    xf2 = y1.reshape(1, n, r2, cpad)               # metadata-only reshape

    # ---- conv2: 3x3/1 + BN, fused shortcut add + final ReLU ----------------
    cin2 = cpad                                    # conv1's (padded) channels
    g2 = _tap_group_size(cin2)
    w2 = _w3x3_to_taps(params["w2"], s2, cin2, cpad, g2)
    taps2 = tuple((0, delta + kh * wg + kw) for kh in range(3) for kw in range(3))
    tn2 = _pick_tn(cpad, lr)
    in_specs2 = [
        pl.BlockSpec((1, 1, r2, cin2), lambda j, b: (0, b, 0, 0)),
        pl.BlockSpec((9 // g2, g2 * cin2, tn2), lambda j, b: (0, 0, j)),
        pl.BlockSpec((1, tn2), lambda j, b: (0, j)),
    ]
    args2 = [xf2, w2, _pad_c(b2, cpad)]
    flops2 = 2 * n * lr * cpad * 9 * cin2

    if stride != 1 or cin != cout:
        # projection shortcut: 1x1 conv (stride) + BN, scale folded, fused
        xs = x[:, ::stride, ::stride, :][:, :ho, :wo, :]
        xs = jnp.pad(xs, ((0, 0), (0, 0), (0, wg - wo), (0, 0))).reshape(n, lr, cin)
        ssc, bsc = _fold_bn(params["bn_sc"])
        wsc = _w1x1_to_mat(params["w_sc"], ssc, cpad)
        in_specs2 += [
            pl.BlockSpec((1, lr, cin), lambda j, b: (b, 0, 0)),
            pl.BlockSpec((cin, tn2), lambda j, b: (0, j)),
            pl.BlockSpec((1, tn2), lambda j, b: (0, j)),
        ]
        args2 += [xs, wsc, _pad_c(bsc, cpad)]
        kern2 = functools.partial(_conv_bn_proj_kernel,
                                  tap_groups=_group_taps(taps2, g2), lr=lr)
        flops2 += 2 * n * lr * cpad * cin
    else:
        # identity shortcut aligned to the (ho, wg) output row grid
        res = jnp.pad(x, ((0, 0), (0, 0), (0, wg - wo), (0, cpad - cout)))
        in_specs2.append(pl.BlockSpec((1, lr, tn2), lambda j, b: (b, 0, j)))
        args2.append(res.reshape(n, lr, cpad))
        kern2 = functools.partial(_conv_bn_add_kernel,
                                  tap_groups=_group_taps(taps2, g2), lr=lr)

    out = _conv_call(kern2, args2, in_specs2, n=n, out_rows=lr, cpad=cpad,
                     tn=tn2, flops=flops2, out_dtype=jnp.bfloat16)

    out = out.reshape(n, ho, wg, cpad)[:, :, :wo, :cout]
    return jnp.transpose(out, (0, 3, 1, 2)).astype(jnp.float32)   # NHWC -> NCHW


# --------------------------- pure-JAX reference ----------------------------- #

def _ref_conv(x, w, stride):
    return lax.conv_general_dilated(
        x, w, window_strides=(stride, stride),
        padding=((w.shape[2] // 2,) * 2, (w.shape[3] // 2,) * 2),
        dimension_numbers=("NCHW", "OIHW", "NCHW"))


def _ref_bn(x, bn, eps=1e-5):
    gamma, beta, mean, var = (p.reshape(1, -1, 1, 1) for p in bn)
    return (x - mean) / jnp.sqrt(var + eps) * gamma + beta


def block_forward_ref(x, params, stride):
    out = _ref_bn(_ref_conv(x, params["w1"], stride), params["bn1"])
    out = jnp.maximum(out, 0.0)
    out = _ref_bn(_ref_conv(out, params["w2"], 1), params["bn2"])
    cin, cout = params["w1"].shape[1], params["w1"].shape[0]
    if stride != 1 or cin != cout:
        sc = _ref_bn(_ref_conv(x, params["w_sc"], stride), params["bn_sc"])
    else:
        sc = x
    return jnp.maximum(out + sc, 0.0)


# --------------------------------- main ------------------------------------- #

def make_params(key, inchannel, outchannel, stride):
    ks = jax.random.split(key, 12)

    def bn(k, c):
        k0, k1, k2, k3 = jax.random.split(k, 4)
        return (jax.random.uniform(k0, (c,), jnp.float32, 0.5, 1.5),   # gamma
                0.1 * jax.random.normal(k1, (c,), jnp.float32),        # beta
                0.1 * jax.random.normal(k2, (c,), jnp.float32),        # running_mean
                jax.random.uniform(k3, (c,), jnp.float32, 0.5, 1.5))   # running_var

    params = {
        "w1": 0.1 * jax.random.normal(ks[0], (outchannel, inchannel, 3, 3), jnp.float32),
        "bn1": bn(ks[1], outchannel),
        "w2": 0.1 * jax.random.normal(ks[2], (outchannel, outchannel, 3, 3), jnp.float32),
        "bn2": bn(ks[3], outchannel),
    }
    if stride != 1 or inchannel != outchannel:
        params["w_sc"] = 0.1 * jax.random.normal(
            ks[4], (outchannel, inchannel, 1, 1), jnp.float32)
        params["bn_sc"] = bn(ks[5], outchannel)
    return params


def _q_bf16(a):
    # quantize to bf16-representable values so the bf16 kernel path and the
    # f32 reference see identical inputs (remaining diff: bf16 y1/out, folded
    # scale rounding, accumulation order)
    return a.astype(jnp.bfloat16).astype(jnp.float32)


def _run_case(key, N, Cin, Cout, H, W, stride, tag):
    kx, kp = jax.random.split(key)
    x = _q_bf16(jax.random.normal(kx, (N, Cin, H, W), jnp.float32))
    params = make_params(kp, Cin, Cout, stride)
    params["w1"] = _q_bf16(params["w1"])
    params["w2"] = _q_bf16(params["w2"])
    if "w_sc" in params:
        params["w_sc"] = _q_bf16(params["w_sc"])

    fwd = jax.jit(block_forward, static_argnames="stride")
    out = jax.block_until_ready(fwd(x, params, stride=stride))
    ref = jax.block_until_ready(block_forward_ref(x, params, stride))

    Ho = (H + 2 - 3) // stride + 1
    Wo = (W + 2 - 3) // stride + 1
    assert out.shape == (N, Cout, Ho, Wo), (tag, out.shape)
    err = float(jnp.max(jnp.abs(out - ref)))
    assert jnp.allclose(out, ref, atol=5e-2, rtol=5e-2), (tag, err)


if __name__ == "__main__":
    key = jax.random.PRNGKey(0)
    k1, k2 = jax.random.split(key)
    _run_case(k1, 2, 4, 8, 16, 16, 2, "projection_shortcut")   # stride 2, Cin != Cout
    _run_case(k2, 2, 8, 8, 8, 8, 1, "identity_shortcut")       # stride 1, Cin == Cout
    print("KERNEL_OK")
</pallas_src>

<mosaic_0001>
module attributes {stable_mosaic.version = 11 : i64} {
  func.func @_conv1_scatter_kernel(%arg0: i32, %arg1: i32, %arg2: memref<4x1x120x4xbf16, #tpu.memory_space<vmem>>, %arg3: memref<9x4x128xbf16, #tpu.memory_space<vmem>>, %arg4: memref<1x128xf32, #tpu.memory_space<vmem>>, %arg5: memref<1x112x128xbf16, #tpu.memory_space<vmem>>) attributes {dimension_semantics = [#tpu.dimension_semantics<parallel>, #tpu.dimension_semantics<parallel>], iteration_bounds = array<i64: 1, 2>, scalar_prefetch = 0 : i64, scratch_operands = 0 : i64, tpu.core_type = #tpu.core_type<tc>, window_params = [{transform_indices = @transform_0, window_bounds = array<i64: 4, 1, 120, 4>}, {transform_indices = @transform_1, window_bounds = array<i64: 9, 4, 128>}, {transform_indices = @transform_2, window_bounds = array<i64: 1, 128>}, {transform_indices = @transform_3, window_bounds = array<i64: 1, 112, 128>}]} {
    %cst = arith.constant 0.000000e+00 : f32
    %0 = vector.broadcast %cst : f32 to vector<80x128xf32>
    %c0 = arith.constant 0 : index
    %c0_0 = arith.constant 0 : index
    %c0_1 = arith.constant 0 : index
    %c0_2 = arith.constant 0 : index
    %1 = vector.load %arg2[%c0, %c0_0, %c0_1, %c0_2] : memref<4x1x120x4xbf16, #tpu.memory_space<vmem>>, vector<1x1x80x4xbf16>
    %2 = vector.shape_cast %1 : vector<1x1x80x4xbf16> to vector<80x4xbf16>
    %c0_3 = arith.constant 0 : index
    %c0_4 = arith.constant 0 : index
    %c0_5 = arith.constant 0 : index
    %3 = vector.load %arg3[%c0_3, %c0_4, %c0_5] : memref<9x4x128xbf16, #tpu.memory_space<vmem>>, vector<1x4x128xbf16>
    %4 = vector.shape_cast %3 : vector<1x4x128xbf16> to vector<4x128xbf16>
    %cst_6 = arith.constant dense<0.000000e+00> : vector<80x128xf32>
    %5 = tpu.matmul %2, %4, %cst_6 {dimension_numbers = #tpu.dot_dimension_numbers<[1], [0], [0], [1], [0, 0, 1, 1], [], []>} : vector<80x4xbf16>, vector<4x128xbf16>, vector<80x128xf32> -> vector<80x128xf32>
    %6 = arith.addf %0, %5 : vector<80x128xf32>
    %c1 = arith.constant 1 : index
    %c0_7 = arith.constant 0 : index
    %c0_8 = arith.constant 0 : index
    %c0_9 = arith.constant 0 : index
    %7 = vector.load %arg2[%c1, %c0_7, %c0_8, %c0_9] : memref<4x1x120x4xbf16, #tpu.memory_space<vmem>>, vector<1x1x80x4xbf16>
    %8 = vector.shape_cast %7 : vector<1x1x80x4xbf16> to vector<80x4xbf16>
    %c1_10 = arith.constant 1 : index
    %c0_11 = arith.constant 0 : index
    %c0_12 = arith.constant 0 : index
    %9 = vector.load %arg3[%c1_10, %c0_11, %c0_12] : memref<9x4x128xbf16, #tpu.memory_space<vmem>>, vector<1x4x128xbf16>
    %10 = vector.shape_cast %9 : vector<1x4x128xbf16> to vector<4x128xbf16>
    %cst_13 = arith.constant dense<0.000000e+00> : vector<80x128xf32>
    %11 = tpu.matmul %8, %10, %cst_13 {dimension_numbers = #tpu.dot_dimension_numbers<[1], [0], [0], [1], [0, 0, 1, 1], [], []>} : vector<80x4xbf16>, vector<4x128xbf16>, vector<80x128xf32> -> vector<80x128xf32>
    %12 = arith.addf %6, %11 : vector<80x128xf32>
    %c0_14 = arith.constant 0 : index
    %c0_15 = arith.constant 0 : index
    %c1_16 = arith.constant 1 : index
    %c0_17 = arith.constant 0 : index
    %13 = vector.load %arg2[%c0_14, %c0_15, %c1_16, %c0_17] : memref<4x1x120x4xbf16, #tpu.memory_space<vmem>>, vector<1x1x80x4xbf16>
    %14 = vector.shape_cast %13 : vector<1x1x80x4xbf16> to vector<80x4xbf16>
    %c2 = arith.constant 2 : index
    %c0_18 = arith.constant 0 : index
    %c0_19 = arith.constant 0 : index
    %15 = vector.load %arg3[%c2, %c0_18, %c0_19] : memref<9x4x128xbf16, #tpu.memory_space<vmem>>, vector<1x4x128xbf16>
    %16 = vector.shape_cast %15 : vector<1x4x128xbf16> to vector<4x128xbf16>
    %cst_20 = arith.constant dense<0.000000e+00> : vector<80x128xf32>
    %17 = tpu.matmul %14, %16, %cst_20 {dimension_numbers = #tpu.dot_dimension_numbers<[1], [0], [0], [1], [0, 0, 1, 1], [], []>} : vector<80x4xbf16>, vector<4x128xbf16>, vector<80x128xf32> -> vector<80x128xf32>
    %18 = arith.addf %12, %17 : vector<80x128xf32>
    %c2_21 = arith.constant 2 : index
    %c0_22 = arith.constant 0 : index
    %c0_23 = arith.constant 0 : index
    %c0_24 = arith.constant 0 : index
    %19 = vector.load %arg2[%c2_21, %c0_22, %c0_23, %c0_24] : memref<4x1x120x4xbf16, #tpu.memory_space<vmem>>, vector<1x1x80x4xbf16>
    %20 = vector.shape_cast %19 : vector<1x1x80x4xbf16> to vector<80x4xbf16>
    %c3 = arith.constant 3 : index
    %c0_25 = arith.constant 0 : index
    %c0_26 = arith.constant 0 : index
    %21 = vector.load %arg3[%c3, %c0_25, %c0_26] : memref<9x4x128xbf16, #tpu.memory_space<vmem>>, vector<1x4x128xbf16>
    %22 = vector.shape_cast %21 : vector<1x4x128xbf16> to vector<4x128xbf16>
    %cst_27 = arith.constant dense<0.000000e+00> : vector<80x128xf32>
    %23 = tpu.matmul %20, %22, %cst_27 {dimension_numbers = #tpu.dot_dimension_numbers<[1], [0], [0], [1], [0, 0, 1, 1], [], []>} : vector<80x4xbf16>, vector<4x128xbf16>, vector<80x128xf32> -> vector<80x128xf32>
    %24 = arith.addf %18, %23 : vector<80x128xf32>
    %c3_28 = arith.constant 3 : index
    %c0_29 = arith.constant 0 : index
    %c0_30 = arith.constant 0 : index
    %c0_31 = arith.constant 0 : index
    %25 = vector.load %arg2[%c3_28, %c0_29, %c0_30, %c0_31] : memref<4x1x120x4xbf16, #tpu.memory_space<vmem>>, vector<1x1x80x4xbf16>
    %26 = vector.shape_cast %25 : vector<1x1x80x4xbf16> to vector<80x4xbf16>
    %c4 = arith.constant 4 : index
    %c0_32 = arith.constant 0 : index
    %c0_33 = arith.constant 0 : index
    %27 = vector.load %arg3[%c4, %c0_32, %c0_33] : memref<9x4x128xbf16, #tpu.memory_space<vmem>>, vector<1x4x128xbf16>
    %28 = vector.shape_cast %27 : vector<1x4x128xbf16> to vector<4x128xbf16>
    %cst_34 = arith.constant dense<0.000000e+00> : vector<80x128xf32>
    %29 = tpu.matmul %26, %28, %cst_34 {dimension_numbers = #tpu.dot_dimension_numbers<[1], [0], [0], [1], [0, 0, 1, 1], [], []>} : vector<80x4xbf16>, vector<4x128xbf16>, vector<80x128xf32> -> vector<80x128xf32>
    %30 = arith.addf %24, %29 : vector<80x128xf32>
    %c2_35 = arith.constant 2 : index
    %c0_36 = arith.constant 0 : index
    %c1_37 = arith.constant 1 : index
    %c0_38 = arith.constant 0 : index
    %31 = vector.load %arg2[%c2_35, %c0_36, %c1_37, %c0_38] : memref<4x1x120x4xbf16, #tpu.memory_space<vmem>>, vector<1x1x80x4xbf16>
    %32 = vector.shape_cast %31 : vector<1x1x80x4xbf16> to vector<80x4xbf16>
    %c5 = arith.constant 5 : index
    %c0_39 = arith.constant 0 : index
    %c0_40 = arith.constant 0 : index
    %33 = vector.load %arg3[%c5, %c0_39, %c0_40] : memref<9x4x128xbf16, #tpu.memory_space<vmem>>, vector<1x4x128xbf16>
    %34 = vector.shape_cast %33 : vector<1x4x128xbf16> to vector<4x128xbf16>
    %cst_41 = arith.constant dense<0.000000e+00> : vector<80x128xf32>
    %35 = tpu.matmul %32, %34, %cst_41 {dimension_numbers = #tpu.dot_dimension_numbers<[1], [0], [0], [1], [0, 0, 1, 1], [], []>} : vector<80x4xbf16>, vector<4x128xbf16>, vector<80x128xf32> -> vector<80x128xf32>
    %36 = arith.addf %30, %35 : vector<80x128xf32>
    %c0_42 = arith.constant 0 : index
    %c0_43 = arith.constant 0 : index
    %c10 = arith.constant 10 : index
    %c0_44 = arith.constant 0 : index
    %37 = vector.load %arg2[%c0_42, %c0_43, %c10, %c0_44] : memref<4x1x120x4xbf16, #tpu.memory_space<vmem>>, vector<1x1x80x4xbf16>
    %38 = vector.shape_cast %37 : vector<1x1x80x4xbf16> to vector<80x4xbf16>
    %c6 = arith.constant 6 : index
    %c0_45 = arith.constant 0 : index
    %c0_46 = arith.constant 0 : index
    %39 = vector.load %arg3[%c6, %c0_45, %c0_46] : memref<9x4x128xbf16, #tpu.memory_space<vmem>>, vector<1x4x128xbf16>
    %40 = vector.shape_cast %39 : vector<1x4x128xbf16> to vector<4x128xbf16>
    %cst_47 = arith.constant dense<0.000000e+00> : vector<80x128xf32>
    %41 = tpu.matmul %38, %40, %cst_47 {dimension_numbers = #tpu.dot_dimension_numbers<[1], [0], [0], [1], [0, 0, 1, 1], [], []>} : vector<80x4xbf16>, vector<4x128xbf16>, vector<80x128xf32> -> vector<80x128xf32>
    %42 = arith.addf %36, %41 : vector<80x128xf32>
    %c1_48 = arith.constant 1 : index
    %c0_49 = arith.constant 0 : index
    %c10_50 = arith.constant 10 : index
    %c0_51 = arith.constant 0 : index
    %43 = vector.load %arg2[%c1_48, %c0_49, %c10_50, %c0_51] : memref<4x1x120x4xbf16, #tpu.memory_space<vmem>>, vector<1x1x80x4xbf16>
    %44 = vector.shape_cast %43 : vector<1x1x80x4xbf16> to vector<80x4xbf16>
    %c7 = arith.constant 7 : index
    %c0_52 = arith.constant 0 : index
    %c0_53 = arith.constant 0 : index
    %45 = vector.load %arg3[%c7, %c0_52, %c0_53] : memref<9x4x128xbf16, #tpu.memory_space<vmem>>, vector<1x4x128xbf16>
    %46 = vector.shape_cast %45 : vector<1x4x128xbf16> to vector<4x128xbf16>
    %cst_54 = arith.constant dense<0.000000e+00> : vector<80x128xf32>
    %47 = tpu.matmul %44, %46, %cst_54 {dimension_numbers = #tpu.dot_dimension_numbers<[1], [0], [0], [1], [0, 0, 1, 1], [], []>} : vector<80x4xbf16>, vector<4x128xbf16>, vector<80x128xf32> -> vector<80x128xf32>
    %48 = arith.addf %42, %47 : vector<80x128xf32>
    %c0_55 = arith.constant 0 : index
    %c0_56 = arith.constant 0 : index
    %c11 = arith.constant 11 : index
    %c0_57 = arith.constant 0 : index
    %49 = vector.load %arg2[%c0_55, %c0_56, %c11, %c0_57] : memref<4x1x120x4xbf16, #tpu.memory_space<vmem>>, vector<1x1x80x4xbf16>
    %50 = vector.shape_cast %49 : vector<1x1x80x4xbf16> to vector<80x4xbf16>
    %c8 = arith.constant 8 : index
    %c0_58 = arith.constant 0 : index
    %c0_59 = arith.constant 0 : index
    %51 = vector.load %arg3[%c8, %c0_58, %c0_59] : memref<9x4x128xbf16, #tpu.memory_space<vmem>>, vector<1x4x128xbf16>
    %52 = vector.shape_cast %51 : vector<1x4x128xbf16> to vector<4x128xbf16>
    %cst_60 = arith.constant dense<0.000000e+00> : vector<80x128xf32>
    %53 = tpu.matmul %50, %52, %cst_60 {dimension_numbers = #tpu.dot_dimension_numbers<[1], [0], [0], [1], [0, 0, 1, 1], [], []>} : vector<80x4xbf16>, vector<4x128xbf16>, vector<80x128xf32> -> vector<80x128xf32>
    %54 = arith.addf %48, %53 : vector<80x128xf32>
    %c0_61 = arith.constant 0 : index
    %c0_62 = arith.constant 0 : index
    %55 = vector.load %arg4[%c0_61, %c0_62] : memref<1x128xf32, #tpu.memory_space<vmem>>, vector<1x128xf32>
    %56 = vector.broadcast %55 : vector<1x128xf32> to vector<80x128xf32>
    %57 = arith.addf %54, %56 : vector<80x128xf32>
    %cst_63 = arith.constant 0.000000e+00 : f32
    %58 = vector.broadcast %cst_63 : f32 to vector<80x128xf32>
    %59 = arith.maximumf %57, %58 : vector<80x128xf32>
    %60 = tpu.iota {dimensions = array<i32: 0>} : vector<80x1xi32>
    %c10_i32 = arith.constant 10 : i32
    %c0_i32 = arith.constant 0 : i32
    %61 = arith.cmpi eq, %c10_i32, %c0_i32 : i32
    %c1_i32 = arith.constant 1 : i32
    %62 = arith.select %61, %c1_i32, %c10_i32 : i32
    %63 = vector.broadcast %62 : i32 to vector<80x1xi32>
    %64 = arith.remsi %60, %63 : vector<80x1xi32>
    %c0_i32_64 = arith.constant 0 : i32
    %65 = vector.broadcast %c0_i32_64 : i32 to vector<80x1xi32>
    %66 = arith.cmpi ne, %64, %65 : vector<80x1xi32>
    %c0_i32_65 = arith.constant 0 : i32
    %67 = vector.broadcast %c0_i32_65 : i32 to vector<80x1xi32>
    %68 = arith.cmpi slt, %64, %67 : vector<80x1xi32>
    %c0_i32_66 = arith.constant 0 : i32
    %69 = arith.cmpi slt, %62, %c0_i32_66 : i32
    %70 = vector.broadcast %69 : i1 to vector<80x1xi1>
    %71 = vector.broadcast %70 : vector<80x1xi1> to vector<80x1xi1>
    %72 = arith.xori %68, %71 : vector<80x1xi1>
    %73 = arith.andi %72, %66 : vector<80x1xi1>
    %74 = vector.broadcast %62 : i32 to vector<80x1xi32>
    %75 = arith.addi %64, %74 : vector<80x1xi32>
    %76 = arith.select %73, %75, %64 : vector<80x1xi1>, vector<80x1xi32>
    %c8_i32 = arith.constant 8 : i32
    %77 = vector.broadcast %c8_i32 : i32 to vector<80x1xi32>
    %78 = arith.cmpi slt, %76, %77 : vector<80x1xi32>
    %cst_67 = arith.constant 0.000000e+00 : f32
    %79 = vector.shape_cast %78 : vector<80x1xi1> to vector<80x1xi1>
    %80 = vector.broadcast %79 : vector<80x1xi1> to vector<80x128xi1>
    %81 = vector.broadcast %cst_67 : f32 to vector<80x128xf32>
    %82 = arith.select %80, %59, %81 : vector<80x128xi1>, vector<80x128xf32>
    %83 = arith.truncf %82 : vector<80x128xf32> to vector<80x128xbf16>
    %cst_68 = arith.constant 0.000000e+00 : bf16
    %84 = vector.broadcast %cst_68 : bf16 to vector<16x128xbf16>
    %c0_69 = arith.constant 0 : index
    %c0_70 = arith.constant 0 : index
    %c0_71 = arith.constant 0 : index
    %85 = vector.load %arg5[%c0_69, %c0_70, %c0_71] : memref<1x112x128xbf16, #tpu.memory_space<vmem>>, vector<1x16x128xbf16>
    %86 = vector.shape_cast %85 : vector<1x16x128xbf16> to vector<16x128xbf16>
    %87 = vector.shape_cast %84 : vector<16x128xbf16> to vector<1x16x128xbf16>
    tpu.vector_store %arg5[%c0_69, %c0_70, %c0_71], %87 {strides = array<i32>} : memref<1x112x128xbf16, #tpu.memory_space<vmem>>, vector<1x16x128xbf16>,
    %c0_72 = arith.constant 0 : index
    %c16 = arith.constant 16 : index
    %c0_73 = arith.constant 0 : index
    %88 = vector.load %arg5[%c0_72, %c16, %c0_73] : memref<1x112x128xbf16, #tpu.memory_space<vmem>>, vector<1x80x128xbf16>
    %89 = vector.shape_cast %88 : vector<1x80x128xbf16> to vector<80x128xbf16>
    %90 = vector.shape_cast %83 : vector<80x128xbf16> to vector<1x80x128xbf16>
    tpu.vector_store %arg5[%c0_72, %c16, %c0_73], %90 {strides = array<i32>} : memref<1x112x128xbf16, #tpu.memory_space<vmem>>, vector<1x80x128xbf16>,
    %cst_74 = arith.constant 0.000000e+00 : bf16
    %91 = vector.broadcast %cst_74 : bf16 to vector<16x128xbf16>
    %c0_75 = arith.constant 0 : index
    %c96 = arith.constant 96 : index
    %c0_76 = arith.constant 0 : index
    %92 = vector.load %arg5[%c0_75, %c96, %c0_76] : memref<1x112x128xbf16, #tpu.memory_space<vmem>>, vector<1x16x128xbf16>
    %93 = vector.shape_cast %92 : vector<1x16x128xbf16> to vector<16x128xbf16>
    %94 = vector.shape_cast %91 : vector<16x128xbf16> to vector<1x16x128xbf16>
    tpu.vector_store %arg5[%c0_75, %c96, %c0_76], %94 {strides = array<i32>} : memref<1x112x128xbf16, #tpu.memory_space<vmem>>, vector<1x16x128xbf16>,
    return
  }
  func.func @transform_0(%arg0: i32, %arg1: i32) -> (i32, i32, i32, i32) {
    %c0_i32 = arith.constant 0 : i32
    %c0_i32_0 = arith.constant 0 : i32
    %c0_i32_1 = arith.constant 0 : i32
    %c0_i32_2 = arith.constant 0 : i32
    return %c0_i32, %arg1, %c0_i32_0, %c0_i32_1 : i32, i32, i32, i32
  }
  func.func @transform_1(%arg0: i32, %arg1: i32) -> (i32, i32, i32) {
    %c0_i32 = arith.constant 0 : i32
    %c0_i32_0 = arith.constant 0 : i32
    %c0_i32_1 = arith.constant 0 : i32
    return %c0_i32, %c0_i32_0, %arg0 : i32, i32, i32
  }
  func.func @transform_2(%arg0: i32, %arg1: i32) -> (i32, i32) {
    %c0_i32 = arith.constant 0 : i32
    %c0_i32_0 = arith.constant 0 : i32
    return %c0_i32, %arg0 : i32, i32
  }
  func.func @transform_3(%arg0: i32, %arg1: i32) -> (i32, i32, i32) {
    %c0_i32 = arith.constant 0 : i32
    %c0_i32_0 = arith.constant 0 : i32
    return %arg1, %c0_i32, %arg0 : i32, i32, i32
  }
}

module attributes {stable_mosaic.version = 11 : i64} {
  func.func @_conv_bn_proj_kernel(%arg0: i32, %arg1: i32, %arg2: memref<1x1x112x128xbf16, #tpu.memory_space<vmem>>, %arg3: memref<3x384x128xbf16, #tpu.memory_space<vmem>>, %arg4: memref<1x128xf32, #tpu.memory_space<vmem>>, %arg5: memref<1x80x4xbf16, #tpu.memory_space<vmem>>, %arg6: memref<4x128xbf16, #tpu.memory_space<vmem>>, %arg7: memref<1x128xf32, #tpu.memory_space<vmem>>, %arg8: memref<1x80x128xbf16, #tpu.memory_space<vmem>>) attributes {dimension_semantics = [#tpu.dimension_semantics<parallel>, #tpu.dimension_semantics<parallel>], iteration_bounds = array<i64: 1, 2>, scalar_prefetch = 0 : i64, scratch_operands = 0 : i64, tpu.core_type = #tpu.core_type<tc>, window_params = [{transform_indices = @transform_0, window_bounds = array<i64: 1, 1, 112, 128>}, {transform_indices = @transform_1, window_bounds = array<i64: 3, 384, 128>}, {transform_indices = @transform_2, window_bounds = array<i64: 1, 128>}, {transform_indices = @transform_3, window_bounds = array<i64: 1, 80, 4>}, {transform_indices = @transform_4, window_bounds = array<i64: 4, 128>}, {transform_indices = @transform_5, window_bounds = array<i64: 1, 128>}, {transform_indices = @transform_6, window_bounds = array<i64: 1, 80, 128>}]} {
    %cst = arith.constant 0.000000e+00 : f32
    %0 = vector.broadcast %cst : f32 to vector<80x128xf32>
    %c0 = arith.constant 0 : index
    %c0_0 = arith.constant 0 : index
    %c5 = arith.constant 5 : index
    %c0_1 = arith.constant 0 : index
    %1 = vector.load %arg2[%c0, %c0_0, %c5, %c0_1] : memref<1x1x112x128xbf16, #tpu.memory_space<vmem>>, vector<1x1x80x128xbf16>
    %2 = vector.shape_cast %1 : vector<1x1x80x128xbf16> to vector<80x128xbf16>
    %c0_2 = arith.constant 0 : index
    %c0_3 = arith.constant 0 : index
    %c6 = arith.constant 6 : index
    %c0_4 = arith.constant 0 : index
    %3 = vector.load %arg2[%c0_2, %c0_3, %c6, %c0_4] : memref<1x1x112x128xbf16, #tpu.memory_space<vmem>>, vector<1x1x80x128xbf16>
    %4 = vector.shape_cast %3 : vector<1x1x80x128xbf16> to vector<80x128xbf16>
    %c0_5 = arith.constant 0 : index
    %c0_6 = arith.constant 0 : index
    %c7 = arith.constant 7 : index
    %c0_7 = arith.constant 0 : index
    %5 = vector.load %arg2[%c0_5, %c0_6, %c7, %c0_7] : memref<1x1x112x128xbf16, #tpu.memory_space<vmem>>, vector<1x1x80x128xbf16>
    %6 = vector.shape_cast %5 : vector<1x1x80x128xbf16> to vector<80x128xbf16>
    %7 = tpu.concatenate %2, %4, %6 in 1 : vector<80x128xbf16>, vector<80x128xbf16>, vector<80x128xbf16> -> vector<80x384xbf16>
    %c0_8 = arith.constant 0 : index
    %c0_9 = arith.constant 0 : index
    %c0_10 = arith.constant 0 : index
    %8 = vector.load %arg3[%c0_8, %c0_9, %c0_10] : memref<3x384x128xbf16, #tpu.memory_space<vmem>>, vector<1x384x128xbf16>
    %9 = vector.shape_cast %8 : vector<1x384x128xbf16> to vector<384x128xbf16>
    %cst_11 = arith.constant dense<0.000000e+00> : vector<80x128xf32>
    %10 = tpu.matmul %7, %9, %cst_11 {dimension_numbers = #tpu.dot_dimension_numbers<[1], [0], [0], [1], [0, 0, 1, 1], [], []>} : vector<80x384xbf16>, vector<384x128xbf16>, vector<80x128xf32> -> vector<80x128xf32>
    %11 = arith.addf %0, %10 : vector<80x128xf32>
    %c0_12 = arith.constant 0 : index
    %c0_13 = arith.constant 0 : index
    %c15 = arith.constant 15 : index
    %c0_14 = arith.constant 0 : index
    %12 = vector.load %arg2[%c0_12, %c0_13, %c15, %c0_14] : memref<1x1x112x128xbf16, #tpu.memory_space<vmem>>, vector<1x1x80x128xbf16>
    %13 = vector.shape_cast %12 : vector<1x1x80x128xbf16> to vector<80x128xbf16>
    %c0_15 = arith.constant 0 : index
    %c0_16 = arith.constant 0 : index
    %c16 = arith.constant 16 : index
    %c0_17 = arith.constant 0 : index
    %14 = vector.load %arg2[%c0_15, %c0_16, %c16, %c0_17] : memref<1x1x112x128xbf16, #tpu.memory_space<vmem>>, vector<1x1x80x128xbf16>
    %15 = vector.shape_cast %14 : vector<1x1x80x128xbf16> to vector<80x128xbf16>
    %c0_18 = arith.constant 0 : index
    %c0_19 = arith.constant 0 : index
    %c17 = arith.constant 17 : index
    %c0_20 = arith.constant 0 : index
    %16 = vector.load %arg2[%c0_18, %c0_19, %c17, %c0_20] : memref<1x1x112x128xbf16, #tpu.memory_space<vmem>>, vector<1x1x80x128xbf16>
    %17 = vector.shape_cast %16 : vector<1x1x80x128xbf16> to vector<80x128xbf16>
    %18 = tpu.concatenate %13, %15, %17 in 1 : vector<80x128xbf16>, vector<80x128xbf16>, vector<80x128xbf16> -> vector<80x384xbf16>
    %c1 = arith.constant 1 : index
    %c0_21 = arith.constant 0 : index
    %c0_22 = arith.constant 0 : index
    %19 = vector.load %arg3[%c1, %c0_21, %c0_22] : memref<3x384x128xbf16, #tpu.memory_space<vmem>>, vector<1x384x128xbf16>
    %20 = vector.shape_cast %19 : vector<1x384x128xbf16> to vector<384x128xbf16>
    %cst_23 = arith.constant dense<0.000000e+00> : vector<80x128xf32>
    %21 = tpu.matmul %18, %20, %cst_23 {dimension_numbers = #tpu.dot_dimension_numbers<[1], [0], [0], [1], [0, 0, 1, 1], [], []>} : vector<80x384xbf16>, vector<384x128xbf16>, vector<80x128xf32> -> vector<80x128xf32>
    %22 = arith.addf %11, %21 : vector<80x128xf32>
    %c0_24 = arith.constant 0 : index
    %c0_25 = arith.constant 0 : index
    %c25 = arith.constant 25 : index
    %c0_26 = arith.constant 0 : index
    %23 = vector.load %arg2[%c0_24, %c0_25, %c25, %c0_26] : memref<1x1x112x128xbf16, #tpu.memory_space<vmem>>, vector<1x1x80x128xbf16>
    %24 = vector.shape_cast %23 : vector<1x1x80x128xbf16> to vector<80x128xbf16>
    %c0_27 = arith.constant 0 : index
    %c0_28 = arith.constant 0 : index
    %c26 = arith.constant 26 : index
    %c0_29 = arith.constant 0 : index
    %25 = vector.load %arg2[%c0_27, %c0_28, %c26, %c0_29] : memref<1x1x112x128xbf16, #tpu.memory_space<vmem>>, vector<1x1x80x128xbf16>
    %26 = vector.shape_cast %25 : vector<1x1x80x128xbf16> to vector<80x128xbf16>
    %c0_30 = arith.constant 0 : index
    %c0_31 = arith.constant 0 : index
    %c27 = arith.constant 27 : index
    %c0_32 = arith.constant 0 : index
    %27 = vector.load %arg2[%c0_30, %c0_31, %c27, %c0_32] : memref<1x1x112x128xbf16, #tpu.memory_space<vmem>>, vector<1x1x80x128xbf16>
    %28 = vector.shape_cast %27 : vector<1x1x80x128xbf16> to vector<80x128xbf16>
    %29 = tpu.concatenate %24, %26, %28 in 1 : vector<80x128xbf16>, vector<80x128xbf16>, vector<80x128xbf16> -> vector<80x384xbf16>
    %c2 = arith.constant 2 : index
    %c0_33 = arith.constant 0 : index
    %c0_34 = arith.constant 0 : index
    %30 = vector.load %arg3[%c2, %c0_33, %c0_34] : memref<3x384x128xbf16, #tpu.memory_space<vmem>>, vector<1x384x128xbf16>
    %31 = vector.shape_cast %30 : vector<1x384x128xbf16> to vector<384x128xbf16>
    %cst_35 = arith.constant dense<0.000000e+00> : vector<80x128xf32>
    %32 = tpu.matmul %29, %31, %cst_35 {dimension_numbers = #tpu.dot_dimension_numbers<[1], [0], [0], [1], [0, 0, 1, 1], [], []>} : vector<80x384xbf16>, vector<384x128xbf16>, vector<80x128xf32> -> vector<80x128xf32>
    %33 = arith.addf %22, %32 : vector<80x128xf32>
    %c0_36 = arith.constant 0 : index
    %c0_37 = arith.constant 0 : index
    %c0_38 = arith.constant 0 : index
    %34 = vector.load %arg5[%c0_36, %c0_37, %c0_38] : memref<1x80x4xbf16, #tpu.memory_space<vmem>>, vector<1x80x4xbf16>
    %35 = vector.shape_cast %34 : vector<1x80x4xbf16> to vector<80x4xbf16>
    %c0_39 = arith.constant 0 : index
    %c0_40 = arith.constant 0 : index
    %36 = vector.load %arg6[%c0_39, %c0_40] : memref<4x128xbf16, #tpu.memory_space<vmem>>, vector<4x128xbf16>
    %cst_41 = arith.constant dense<0.000000e+00> : vector<80x128xf32>
    %37 = tpu.matmul %35, %36, %cst_41 {dimension_numbers = #tpu.dot_dimension_numbers<[1], [0], [0], [1], [0, 0, 1, 1], [], []>} : vector<80x4xbf16>, vector<4x128xbf16>, vector<80x128xf32> -> vector<80x128xf32>
    %c0_42 = arith.constant 0 : index
    %c0_43 = arith.constant 0 : index
    %38 = vector.load %arg4[%c0_42, %c0_43] : memref<1x128xf32, #tpu.memory_space<vmem>>, vector<1x128xf32>
    %39 = vector.broadcast %38 : vector<1x128xf32> to vector<80x128xf32>
    %40 = arith.addf %33, %39 : vector<80x128xf32>
    %41 = arith.addf %40, %37 : vector<80x128xf32>
    %c0_44 = arith.constant 0 : index
    %c0_45 = arith.constant 0 : index
    %42 = vector.load %arg7[%c0_44, %c0_45] : memref<1x128xf32, #tpu.memory_space<vmem>>, vector<1x128xf32>
    %43 = vector.broadcast %42 : vector<1x128xf32> to vector<80x128xf32>
    %44 = arith.addf %41, %43 : vector<80x128xf32>
    %cst_46 = arith.constant 0.000000e+00 : f32
    %45 = vector.broadcast %cst_46 : f32 to vector<80x128xf32>
    %46 = arith.maximumf %44, %45 : vector<80x128xf32>
    %47 = arith.truncf %46 : vector<80x128xf32> to vector<80x128xbf16>
    %c0_47 = arith.constant 0 : index
    %c0_48 = arith.constant 0 : index
    %c0_49 = arith.constant 0 : index
    %48 = vector.load %arg8[%c0_47, %c0_48, %c0_49] : memref<1x80x128xbf16, #tpu.memory_space<vmem>>, vector<1x80x128xbf16>
    %49 = vector.shape_cast %48 : vector<1x80x128xbf16> to vector<80x128xbf16>
    %50 = vector.shape_cast %47 : vector<80x128xbf16> to vector<1x80x128xbf16>
    tpu.vector_store %arg8[%c0_47, %c0_48, %c0_49], %50 {strides = array<i32>} : memref<1x80x128xbf16, #tpu.memory_space<vmem>>, vector<1x80x128xbf16>,
    return
  }
  func.func @transform_0(%arg0: i32, %arg1: i32) -> (i32, i32, i32, i32) {
    %c0_i32 = arith.constant 0 : i32
    %c0_i32_0 = arith.constant 0 : i32
    %c0_i32_1 = arith.constant 0 : i32
    %c0_i32_2 = arith.constant 0 : i32
    return %c0_i32, %arg1, %c0_i32_0, %c0_i32_1 : i32, i32, i32, i32
  }
  func.func @transform_1(%arg0: i32, %arg1: i32) -> (i32, i32, i32) {
    %c0_i32 = arith.constant 0 : i32
    %c0_i32_0 = arith.constant 0 : i32
    %c0_i32_1 = arith.constant 0 : i32
    return %c0_i32, %c0_i32_0, %arg0 : i32, i32, i32
  }
  func.func @transform_2(%arg0: i32, %arg1: i32) -> (i32, i32) {
    %c0_i32 = arith.constant 0 : i32
    %c0_i32_0 = arith.constant 0 : i32
    return %c0_i32, %arg0 : i32, i32
  }
  func.func @transform_3(%arg0: i32, %arg1: i32) -> (i32, i32, i32) {
    %c0_i32 = arith.constant 0 : i32
    %c0_i32_0 = arith.constant 0 : i32
    %c0_i32_1 = arith.constant 0 : i32
    return %arg1, %c0_i32, %c0_i32_0 : i32, i32, i32
  }
  func.func @transform_4(%arg0: i32, %arg1: i32) -> (i32, i32) {
    %c0_i32 = arith.constant 0 : i32
    %c0_i32_0 = arith.constant 0 : i32
    return %c0_i32, %arg0 : i32, i32
  }
  func.func @transform_5(%arg0: i32, %arg1: i32) -> (i32, i32) {
    %c0_i32 = arith.constant 0 : i32
    %c0_i32_0 = arith.constant 0 : i32
    return %c0_i32, %arg0 : i32, i32
  }
  func.func @transform_6(%arg0: i32, %arg1: i32) -> (i32, i32, i32) {
    %c0_i32 = arith.constant 0 : i32
    %c0_i32_0 = arith.constant 0 : i32
    return %arg1, %c0_i32, %arg0 : i32, i32, i32
  }
}

</mosaic_0001>

<llo_original>
// kernel: block_forward.2
$region0: #{block_forward.2}
  #allocation0 [shape = 'u32[]', space=smem, size = 0x4, offset = 0x4, fixed_abs, tag = 'smem constant byte address 0x4 - core index']
  #allocation1 [shape = 'u32[144,128]{1,0:T(1,128)}', space=vmem, size = 0x12000, scoped, tag = 'internal scratch']
  %s0 = inlined_call_operand.vmem [shape: bf16[4,2,120,4], index: 0, kind: input, shape index: {}]
  %s1 = inlined_call_operand.vmem [shape: bf16[9,4,128], index: 1, kind: input, shape index: {}]
  %s2 = inlined_call_operand.vmem [shape: f32[1,128], index: 2, kind: input, shape index: {}]
  %s3 = inlined_call_operand.vmem [shape: bf16[2,112,128], index: 3, kind: output, shape index: {}]
  %s4 = sld [smem:[#allocation0]]
  $region86: #{block_forward.2} parent=0
    _
  %s6 = ssub.s32 1, %s4
  %s7 = scalar_select 0, %s6, %s4
  $region1: #{block_forward.2} parent=0
    #allocation2 [shape = 'u8[245760]{0}', space=vmem, size = 0x3c000, scoped, tag = 'input window, operand 0']
    loop: start=0, step=1, limit=4
    $region2: #{block_forward.2} parent=1 // loop_pre_header
      _
    $region3: #{block_forward.2} parent=1 // loop_header
      %s9 = sphi 0, %s13
      %p10 = scmp.ge.s32.totalorder %s9, 4
      %s16 = sphi 0, %s28
      %s17 = sphi 0, %s24
      %s18 = sphi 0, %s16
      %s19 = sphi 0, %s17
      %s20 = sphi 0, %s18
      %s21 = sphi 0, %s19
      %s31 = sphi 0, %s33
      %s34 = sphi 0, %s31
      %s35 = sphi 0, %s34
      %s51 = sphi 0, %s35
      %s57 = sphi 0, %s59
      %s60 = sphi 0, %s57
      %s61 = sphi 0, %s60
      %s77 = sphi 0, %s61
      %s83 = sphi 0, %s85
      %s86 = sphi 0, %s83
      %s87 = sphi 0, %s86
      %s103 = sphi 0, %s87
      %s111 = sphi 0, %s113
      %s114 = sphi 0, %s111
      %s115 = sphi 0, %s114
      %s131 = sphi 0, %s115
    $region4: #{block_forward.2} parent=1 // loop_header_branch
      %12 = sbr.rel (%p10) target = $region8
    $region5: #{block_forward.2} parent=1 // loop_body
      %s14 = ssub.s32 %s9, 1
      %s15 = ssub.s32 %s9, 2
      %s22 = sadd.s32 1, %s17
      %p23 = scmp.ge.s32.totalorder %s22, 2
      %s24 = scalar_select %p23, 0, %s22
      %s25 = sadd.s32 1, %s16
      %s26 = scalar_select %p23, %s25, %s16
      %p27 = scmp.ge.s32.totalorder %s26, 1
      %s28 = scalar_select %p27, 0, %s26
      %s29 = ssub.s32 %s17, %s24
      %p30 = scmp.eq.s32.totalorder %s29, 0
      %s32 = sadd.s32 %s31, 1
      %s33 = scalar_select %p30, %s31, %s32
      %p36 = pneg %p30
      %p37 = scmp.eq.s32.totalorder %s9, 1
      %p38 = por %p36, %p37
      %p39 = scmp.ne.s32.totalorder %s31, %s34
      %p40 = scmp.eq.s32.totalorder %s9, 0
      %p41 = por %p39, %p40
      %p42 = scmp.ne.s32.totalorder %s31, %s34
      %p43 = scmp.eq.s32.totalorder %s14, 1
      %p44 = por %p42, %p43
      %p45 = scmp.ne.s32.totalorder %s34, %s35
      %p46 = scmp.eq.s32.totalorder %s14, 0
      %p47 = por %p45, %p46
      %p48 = scmp.ne.s32.totalorder %s34, %s35
      %p49 = scmp.eq.s32.totalorder %s15, 1
      %p50 = por %p48, %p49
      %p52 = scmp.ne.s32.totalorder %s35, %s51
      %p53 = scmp.eq.s32.totalorder %s15, 0
      %p54 = por %p52, %p53
      %s55 = ssub.s32 %s16, %s28
      %p56 = scmp.eq.s32.totalorder %s55, 0
      %s58 = sadd.s32 %s57, 1
      %s59 = scalar_select %p56, %s57, %s58
      %p62 = pneg %p56
      %p63 = scmp.eq.s32.totalorder %s9, 1
      %p64 = por %p62, %p63
      %p65 = scmp.ne.s32.totalorder %s57, %s60
      %p66 = scmp.eq.s32.totalorder %s9, 0
      %p67 = por %p65, %p66
      %p68 = scmp.ne.s32.totalorder %s57, %s60
      %p69 = scmp.eq.s32.totalorder %s14, 1
      %p70 = por %p68, %p69
      %p71 = scmp.ne.s32.totalorder %s60, %s61
      %p72 = scmp.eq.s32.totalorder %s14, 0
      %p73 = por %p71, %p72
      %p74 = scmp.ne.s32.totalorder %s60, %s61
      %p75 = scmp.eq.s32.totalorder %s15, 1
      %p76 = por %p74, %p75
      %p78 = scmp.ne.s32.totalorder %s61, %s77
      %p79 = scmp.eq.s32.totalorder %s15, 0
      %p80 = por %p78, %p79
      %s81 = ssub.s32 %s16, %s28
      %p82 = scmp.eq.s32.totalorder %s81, 0
      %s84 = sadd.s32 %s83, 1
      %s85 = scalar_select %p82, %s83, %s84
      %p88 = pneg %p82
      %p89 = scmp.eq.s32.totalorder %s9, 1
      %p90 = por %p88, %p89
      %p91 = scmp.ne.s32.totalorder %s83, %s86
      %p92 = scmp.eq.s32.totalorder %s9, 0
      %p93 = por %p91, %p92
      %p94 = scmp.ne.s32.totalorder %s83, %s86
      %p95 = scmp.eq.s32.totalorder %s14, 1
      %p96 = por %p94, %p95
      %p97 = scmp.ne.s32.totalorder %s86, %s87
      %p98 = scmp.eq.s32.totalorder %s14, 0
      %p99 = por %p97, %p98
      %p100 = scmp.ne.s32.totalorder %s86, %s87
      %p101 = scmp.eq.s32.totalorder %s15, 1
      %p102 = por %p100, %p101
      %p104 = scmp.ne.s32.totalorder %s87, %s103
      %p105 = scmp.eq.s32.totalorder %s15, 0
      %p106 = por %p104, %p105
      %s107 = ssub.s32 %s17, %s24
      %s108 = ssub.s32 %s16, %s28
      %s109 = sor.u32 %s107, %s108
      %p110 = scmp.eq.s32.totalorder %s109, 0
      %s112 = sadd.s32 %s111, 1
      %s113 = scalar_select %p110, %s111, %s112
      %p116 = pneg %p110
      %p117 = scmp.eq.s32.totalorder %s9, 1
      %p118 = por %p116, %p117
      %p119 = scmp.ne.s32.totalorder %s111, %s114
      %p120 = scmp.eq.s32.totalorder %s9, 0
      %p121 = por %p119, %p120
      %p122 = scmp.ne.s32.totalorder %s111, %s114
      %p123 = scmp.eq.s32.totalorder %s14, 1
      %p124 = por %p122, %p123
      %p125 = scmp.ne.s32.totalorder %s114, %s115
      %p126 = scmp.eq.s32.totalorder %s14, 0
      %p127 = por %p125, %p126
      %p128 = scmp.ne.s32.totalorder %s114, %s115
      %p129 = scmp.eq.s32.totalorder %s15, 1
      %p130 = por %p128, %p129
      %p132 = scmp.ne.s32.totalorder %s115, %s131
      %p133 = scmp.eq.s32.totalorder %s15, 0
      %p134 = por %p132, %p133
      %p135 = scmp.le.s32.totalorder 1, %s9
      %p136 = scmp.lt.s32.totalorder %s9, 3
      %p137 = pnand %p135, %p136
      %p138 = pneg %p137
      // Predicated region
      $region9: #{block_forward.2} parent=5 // pred_check
        _
      $region10: #{block_forward.2} parent=5 // pred_check_branch
        %140 = sbr.rel (%p137) target = $region12
      $region11: #{block_forward.2} parent=5 // pred_region
        %s141 = ssub.s32 %s9, 1
        // Predicated region
        $region13: #{block_forward.2} parent=11 // pred_check
          %p142 = pneg %p73
        $region14: #{block_forward.2} parent=11 // pred_check_branch
          %144 = sbr.rel (%p142) target = $region16
        $region15: #{block_forward.2} parent=11 // pred_region
          %p145 = scmp.lt.s32.totalorder %s18, 0
          %s146 = scalar_select %p145, %s18, 0
          %s147 = smul.addr %s146, 2
          %s148 = scalar_lea.vmem %s1, %s147
        $region16: #{block_forward.2} parent=11 // pred_fallthru
          _
        // Predicated region
        $region17: #{block_forward.2} parent=11 // pred_check
          %p149 = pneg %p99
        $region18: #{block_forward.2} parent=11 // pred_check_branch
          %151 = sbr.rel (%p149) target = $region20
        $region19: #{block_forward.2} parent=11 // pred_region
          %p152 = scmp.lt.s32.totalorder %s18, 0
          %s153 = scalar_select %p152, %s18, 0
          %s154 = scalar_lea.vmem %s2, %s153
        $region20: #{block_forward.2} parent=11 // pred_fallthru
          _
      $region12: #{block_forward.2} parent=5 // pred_fallthru
        _
      %p155 = scmp.lt.s32.totalorder %s9, 2
      // Predicated region
      $region21: #{block_forward.2} parent=5 // pred_check
        %p156 = pneg %p155
      $region22: #{block_forward.2} parent=5 // pred_check_branch
        %158 = sbr.rel (%p156) target = $region24
      $region23: #{block_forward.2} parent=5 // pred_region
        // Predicated region
        $region25: #{block_forward.2} parent=23 // pred_check
          %p159 = pneg %p41
        $region26: #{block_forward.2} parent=23 // pred_check_branch
          %161 = sbr.rel (%p159) target = $region28
        $region27: #{block_forward.2} parent=23 // pred_region
          %s162 = sand.u32 %s31, 1
          %s163 = sand.u32 %s31, 1
          %s164 = smul.addr %s163, 240
          %s165 = scalar_lea.vmem [#allocation2], %s164
          %s166 = smul.addr %s17, 15
          %s167 = smul.addr %s166, 4
          %s168 = scalar_lea.vmem %s0, %s167
          // Predicated region
          $region29: #{block_forward.2} parent=27 // pred_check
            _
          $region30: #{block_forward.2} parent=27 // pred_check_branch
            %170 = sbr.rel (0) target = $region32
          $region31: #{block_forward.2} parent=27 // pred_region
            // Predicated region
            $region33: #{block_forward.2} parent=31 // pred_check
              _
            $region34: #{block_forward.2} parent=31 // pred_check_branch
              %172 = sbr.rel target = $region36
            $region35: #{block_forward.2} parent=31 // pred_region
              // Predicated region
              $region48: #{block_forward.2} parent=35 // pred_check
                _
              $region49: #{block_forward.2} parent=35 // pred_check_branch
                %306 = sbr.rel (0) target = $region51
              $region50: #{block_forward.2} parent=35 // pred_region
                loop: start=0, step=1, limit=1
                $region52: #{block_forward.2} parent=50 // loop_pre_header
                  _
                $region53: #{block_forward.2} parent=50 // loop_header
                  %s308 = sphi 0, %s312
                  %p309 = scmp.ge.s32.totalorder %s308, 1
                  %s313 = sphi %s168, %s168
                  %s314 = sphi %s165, %s165
                $region54: #{block_forward.2} parent=50 // loop_header_branch
                  %311 = sbr.rel (%p309) target = $region58
                $region55: #{block_forward.2} parent=50 // loop_body
                  _
                $region56: #{block_forward.2} parent=50 // loop_footer
                  %s312 = sadd.s32 1, %s308
                $region57: #{block_forward.2} parent=50 // loop_footer_branch
                  %307 = sbr.rel target = $region53
                $region58: #{block_forward.2} parent=50 // loop_exit
                  _
                %s316 = ssub.s32 16, 1
                loop: start=0, step=1, limit=1
                $region59: #{block_forward.2} parent=50 // loop_pre_header
                  _
                $region60: #{block_forward.2} parent=50 // loop_header
                  %s318 = sphi 0, %s322
                  %p319 = scmp.ge.s32.totalorder %s318, 1
                  %s323 = sphi %s168, %s168
                  %s324 = sphi %s165, %s165
                $region61: #{block_forward.2} parent=50 // loop_header_branch
                  %321 = sbr.rel (%p319) target = $region65
                $region62: #{block_forward.2} parent=50 // loop_body
                  %v325 = vld [vmem:[%s323] sm:%s316]
                  %326 = vst [vmem:[%s324] sm:%s316] %v325
                  %v327 = vld [vmem:[%s323 + $0x4] sm:%s316]
                  %328 = vst [vmem:[%s324 + $0x4] sm:%s316] %v327
                  %v329 = vld [vmem:[%s323 + $0x8] sm:%s316]
                  %330 = vst [vmem:[%s324 + $0x8] sm:%s316] %v329
                  %v331 = vld [vmem:[%s323 + $0xc] sm:%s316]
                  %332 = vst [vmem:[%s324 + $0xc] sm:%s316] %v331
                  %v333 = vld [vmem:[%s323 + $0x10] sm:%s316]
                  %334 = vst [vmem:[%s324 + $0x10] sm:%s316] %v333
                  %v335 = vld [vmem:[%s323 + $0x14] sm:%s316]
                  %336 = vst [vmem:[%s324 + $0x14] sm:%s316] %v335
                  %v337 = vld [vmem:[%s323 + $0x18] sm:%s316]
                  %338 = vst [vmem:[%s324 + $0x18] sm:%s316] %v337
                  %v339 = vld [vmem:[%s323 + $0x1c] sm:%s316]
                  %340 = vst [vmem:[%s324 + $0x1c] sm:%s316] %v339
                  %v341 = vld [vmem:[%s323 + $0x20] sm:%s316]
                  %342 = vst [vmem:[%s324 + $0x20] sm:%s316] %v341
                  %v343 = vld [vmem:[%s323 + $0x24] sm:%s316]
                  %344 = vst [vmem:[%s324 + $0x24] sm:%s316] %v343
                  %v345 = vld [vmem:[%s323 + $0x28] sm:%s316]
                  %346 = vst [vmem:[%s324 + $0x28] sm:%s316] %v345
                  %v347 = vld [vmem:[%s323 + $0x2c] sm:%s316]
                  %348 = vst [vmem:[%s324 + $0x2c] sm:%s316] %v347
                  %v349 = vld [vmem:[%s323 + $0x30] sm:%s316]
                  %350 = vst [vmem:[%s324 + $0x30] sm:%s316] %v349
                  %v351 = vld [vmem:[%s323 + $0x34] sm:%s316]
                  %352 = vst [vmem:[%s324 + $0x34] sm:%s316] %v351
                  %v353 = vld [vmem:[%s323 + $0x38] sm:%s316]
                  %354 = vst [vmem:[%s324 + $0x38] sm:%s316] %v353
                  %v355 = vld [vmem:[%s323 + $0x78] sm:%s316]
                  %356 = vst [vmem:[%s324 + $0x3c] sm:%s316] %v355
                  %v357 = vld [vmem:[%s323 + $0x7c] sm:%s316]
                  %358 = vst [vmem:[%s324 + $0x40] sm:%s316] %v357
                  %v359 = vld [vmem:[%s323 + $0x80] sm:%s316]
                  %360 = vst [vmem:[%s324 + $0x44] sm:%s316] %v359
                  %v361 = vld [vmem:[%s323 + $0x84] sm:%s316]
                  %362 = vst [vmem:[%s324 + $0x48] sm:%s316] %v361
                  %v363 = vld [vmem:[%s323 + $0x88] sm:%s316]
                  %364 = vst [vmem:[%s324 + $0x4c] sm:%s316] %v363
                  %v365 = vld [vmem:[%s323 + $0x8c] sm:%s316]
                  %366 = vst [vmem:[%s324 + $0x50] sm:%s316] %v365
                  %v367 = vld [vmem:[%s323 + $0x90] sm:%s316]
                  %368 = vst [vmem:[%s324 + $0x54] sm:%s316] %v367
                  %v369 = vld [vmem:[%s323 + $0x94] sm:%s316]
                  %370 = vst [vmem:[%s324 + $0x58] sm:%s316] %v369
                  %v371 = vld [vmem:[%s323 + $0x98] sm:%s316]
                  %372 = vst [vmem:[%s324 + $0x5c] sm:%s316] %v371
                  %v373 = vld [vmem:[%s323 + $0x9c] sm:%s316]
                  %374 = vst [vmem:[%s324 + $0x60] sm:%s316] %v373
                  %v375 = vld [vmem:[%s323 + $0xa0] sm:%s316]
                  %376 = vst [vmem:[%s324 + $0x64] sm:%s316] %v375
                  %v377 = vld [vmem:[%s323 + $0xa4] sm:%s316]
                  %378 = vst [vmem:[%s324 + $0x68] sm:%s316] %v377
                  %v379 = vld [vmem:[%s323 + $0xa8] sm:%s316]
                  %380 = vst [vmem:[%s324 + $0x6c] sm:%s316] %v379
                  %v381 = vld [vmem:[%s323 + $0xac] sm:%s316]
                  %382 = vst [vmem:[%s324 + $0x70] sm:%s316] %v381
                  %v383 = vld [vmem:[%s323 + $0xb0] sm:%s316]
                  %384 = vst [vmem:[%s324 + $0x74] sm:%s316] %v383
                  %v385 = vld [vmem:[%s323 + $0xf0] sm:%s316]
                  %386 = vst [vmem:[%s324 + $0x78] sm:%s316] %v385
                  %v387 = vld [vmem:[%s323 + $0xf4] sm:%s316]
                  %388 = vst [vmem:[%s324 + $0x7c] sm:%s316] %v387
                  %v389 = vld [vmem:[%s323 + $0xf8] sm:%s316]
                  %390 = vst [vmem:[%s324 + $0x80] sm:%s316] %v389
                  %v391 = vld [vmem:[%s323 + $0xfc] sm:%s316]
                  %392 = vst [vmem:[%s324 + $0x84] sm:%s316] %v391
                  %v393 = vld [vmem:[%s323 + $0x100] sm:%s316]
                  %394 = vst [vmem:[%s324 + $0x88] sm:%s316] %v393
                  %v395 = vld [vmem:[%s323 + $0x104] sm:%s316]
                  %396 = vst [vmem:[%s324 + $0x8c] sm:%s316] %v395
                  %v397 = vld [vmem:[%s323 + $0x108] sm:%s316]
                  %398 = vst [vmem:[%s324 + $0x90] sm:%s316] %v397
                  %v399 = vld [vmem:[%s323 + $0x10c] sm:%s316]
                  %400 = vst [vmem:[%s324 + $0x94] sm:%s316] %v399
                  %v401 = vld [vmem:[%s323 + $0x110] sm:%s316]
                  %402 = vst [vmem:[%s324 + $0x98] sm:%s316] %v401
                  %v403 = vld [vmem:[%s323 + $0x114] sm:%s316]
                  %404 = vst [vmem:[%s324 + $0x9c] sm:%s316] %v403
                  %v405 = vld [vmem:[%s323 + $0x118] sm:%s316]
                  %406 = vst [vmem:[%s324 + $0xa0] sm:%s316] %v405
                  %v407 = vld [vmem:[%s323 + $0x11c] sm:%s316]
                  %408 = vst [vmem:[%s324 + $0xa4] sm:%s316] %v407
                  %v409 = vld [vmem:[%s323 + $0x120] sm:%s316]
                  %410 = vst [vmem:[%s324 + $0xa8] sm:%s316] %v409
                  %v411 = vld [vmem:[%s323 + $0x124] sm:%s316]
                  %412 = vst [vmem:[%s324 + $0xac] sm:%s316] %v411
                  %v413 = vld [vmem:[%s323 + $0x128] sm:%s316]
                  %414 = vst [vmem:[%s324 + $0xb0] sm:%s316] %v413
                  %v415 = vld [vmem:[%s323 + $0x168] sm:%s316]
                  %416 = vst [vmem:[%s324 + $0xb4] sm:%s316] %v415
                  %v417 = vld [vmem:[%s323 + $0x16c] sm:%s316]
                  %418 = vst [vmem:[%s324 + $0xb8] sm:%s316] %v417
                  %v419 = vld [vmem:[%s323 + $0x170] sm:%s316]
                  %420 = vst [vmem:[%s324 + $0xbc] sm:%s316] %v419
                  %v421 = vld [vmem:[%s323 + $0x174] sm:%s316]
                  %422 = vst [vmem:[%s324 + $0xc0] sm:%s316] %v421
                  %v423 = vld [vmem:[%s323 + $0x178] sm:%s316]
                  %424 = vst [vmem:[%s324 + $0xc4] sm:%s316] %v423
                  %v425 = vld [vmem:[%s323 + $0x17c] sm:%s316]
                  %426 = vst [vmem:[%s324 + $0xc8] sm:%s316] %v425
                  %v427 = vld [vmem:[%s323 + $0x180] sm:%s316]
                  %428 = vst [vmem:[%s324 + $0xcc] sm:%s316] %v427
                  %v429 = vld [vmem:[%s323 + $0x184] sm:%s316]
                  %430 = vst [vmem:[%s324 + $0xd0] sm:%s316] %v429
                  %v431 = vld [vmem:[%s323 + $0x188] sm:%s316]
                  %432 = vst [vmem:[%s324 + $0xd4] sm:%s316] %v431
                  %v433 = vld [vmem:[%s323 + $0x18c] sm:%s316]
                  %434 = vst [vmem:[%s324 + $0xd8] sm:%s316] %v433
                  %v435 = vld [vmem:[%s323 + $0x190] sm:%s316]
                  %436 = vst [vmem:[%s324 + $0xdc] sm:%s316] %v435
                  %v437 = vld [vmem:[%s323 + $0x194] sm:%s316]
                  %438 = vst [vmem:[%s324 + $0xe0] sm:%s316] %v437
                  %v439 = vld [vmem:[%s323 + $0x198] sm:%s316]
                  %440 = vst [vmem:[%s324 + $0xe4] sm:%s316] %v439
                  %v441 = vld [vmem:[%s323 + $0x19c] sm:%s316]
                  %442 = vst [vmem:[%s324 + $0xe8] sm:%s316] %v441
                  %v443 = vld [vmem:[%s323 + $0x1a0] sm:%s316]
                  %444 = vst [vmem:[%s324 + $0xec] sm:%s316] %v443
                $region63: #{block_forward.2} parent=50 // loop_footer
                  %s322 = sadd.s32 1, %s318
                $region64: #{block_forward.2} parent=50 // loop_footer_branch
                  %317 = sbr.rel target = $region60
                $region65: #{block_forward.2} parent=50 // loop_exit
                  _
              $region51: #{block_forward.2} parent=35 // pred_fallthru
                _
            $region36: #{block_forward.2} parent=31 // pred_fallthru
              _
            // Predicated region
            $region37: #{block_forward.2} parent=31 // pred_check
              _
            $region38: #{block_forward.2} parent=31 // pred_check_branch
              %174 = sbr.rel (0) target = $region40
            $region39: #{block_forward.2} parent=31 // pred_region
              %s176 = ssub.s32 16, 1
              loop: start=0, step=1, limit=1
              $region41: #{block_forward.2} parent=39 // loop_pre_header
                _
              $region42: #{block_forward.2} parent=39 // loop_header
                %s178 = sphi 0, %s182
                %p179 = scmp.ge.s32.totalorder %s178, 1
                %s183 = sphi %s168, %s168
                %s184 = sphi %s165, %s165
              $region43: #{block_forward.2} parent=39 // loop_header_branch
                %181 = sbr.rel (%p179) target = $region47
              $region44: #{block_forward.2} parent=39 // loop_body
                %v185 = vld [vmem:[%s183] sm:%s176]
                %186 = vst [vmem:[%s184] sm:%s176] %v185
                %v187 = vld [vmem:[%s183 + $0x4] sm:%s176]
                %188 = vst [vmem:[%s184 + $0x4] sm:%s176] %v187
                %v189 = vld [vmem:[%s183 + $0x8] sm:%s176]
                %190 = vst [vmem:[%s184 + $0x8] sm:%s176] %v189
                %v191 = vld [vmem:[%s183 + $0xc] sm:%s176]
                %192 = vst [vmem:[%s184 + $0xc] sm:%s176] %v191
                %v193 = vld [vmem:[%s183 + $0x10] sm:%s176]
                %194 = vst [vmem:[%s184 + $0x10] sm:%s176] %v193
                %v195 = vld [vmem:[%s183 + $0x14] sm:%s176]
                %196 = vst [vmem:[%s184 + $0x14] sm:%s176] %v195
                %v197 = vld [vmem:[%s183 + $0x18] sm:%s176]
                %198 = vst [vmem:[%s184 + $0x18] sm:%s176] %v197
                %v199 = vld [vmem:[%s183 + $0x1c] sm:%s176]
                %200 = vst [vmem:[%s184 + $0x1c] sm:%s176] %v199
                %v201 = vld [vmem:[%s183 + $0x20] sm:%s176]
                %202 = vst [vmem:[%s184 + $0x20] sm:%s176] %v201
                %v203 = vld [vmem:[%s183 + $0x24] sm:%s176]
                %204 = vst [vmem:[%s184 + $0x24] sm:%s176] %v203
                %v205 = vld [vmem:[%s183 + $0x28] sm:%s176]
                %206 = vst [vmem:[%s184 + $0x28] sm:%s176] %v205
                %v207 = vld [vmem:[%s183 + $0x2c] sm:%s176]
                %208 = vst [vmem:[%s184 + $0x2c] sm:%s176] %v207
                %v209 = vld [vmem:[%s183 + $0x30] sm:%s176]
                %210 = vst [vmem:[%s184 + $0x30] sm:%s176] %v209
                %v211 = vld [vmem:[%s183 + $0x34] sm:%s176]
                %212 = vst [vmem:[%s184 + $0x34] sm:%s176] %v211
                %v213 = vld [vmem:[%s183 + $0x38] sm:%s176]
                %214 = vst [vmem:[%s184 + $0x38] sm:%s176] %v213
                %v215 = vld [vmem:[%s183 + $0x78] sm:%s176]
                %216 = vst [vmem:[%s184 + $0x3c] sm:%s176] %v215
                %v217 = vld [vmem:[%s183 + $0x7c] sm:%s176]
                %218 = vst [vmem:[%s184 + $0x40] sm:%s176] %v217
                %v219 = vld [vmem:[%s183 + $0x80] sm:%s176]
                %220 = vst [vmem:[%s184 + $0x44] sm:%s176] %v219
                %v221 = vld [vmem:[%s183 + $0x84] sm:%s176]
                %222 = vst [vmem:[%s184 + $0x48] sm:%s176] %v221
                %v223 = vld [vmem:[%s183 + $0x88] sm:%s176]
                %224 = vst [vmem:[%s184 + $0x4c] sm:%s176] %v223
                %v225 = vld [vmem:[%s183 + $0x8c] sm:%s176]
                %226 = vst [vmem:[%s184 + $0x50] sm:%s176] %v225
                %v227 = vld [vmem:[%s183 + $0x90] sm:%s176]
                %228 = vst [vmem:[%s184 + $0x54] sm:%s176] %v227
                %v229 = vld [vmem:[%s183 + $0x94] sm:%s176]
                %230 = vst [vmem:[%s184 + $0x58] sm:%s176] %v229
                %v231 = vld [vmem:[%s183 + $0x98] sm:%s176]
                %232 = vst [vmem:[%s184 + $0x5c] sm:%s176] %v231
                %v233 = vld [vmem:[%s183 + $0x9c] sm:%s176]
                %234 = vst [vmem:[%s184 + $0x60] sm:%s176] %v233
                %v235 = vld [vmem:[%s183 + $0xa0] sm:%s176]
                %236 = vst [vmem:[%s184 + $0x64] sm:%s176] %v235
                %v237 = vld [vmem:[%s183 + $0xa4] sm:%s176]
                %238 = vst [vmem:[%s184 + $0x68] sm:%s176] %v237
                %v239 = vld [vmem:[%s183 + $0xa8] sm:%s176]
                %240 = vst [vmem:[%s184 + $0x6c] sm:%s176] %v239
                %v241 = vld [vmem:[%s183 + $0xac] sm:%s176]
                %242 = vst [vmem:[%s184 + $0x70] sm:%s176] %v241
                %v243 = vld [vmem:[%s183 + $0xb0] sm:%s176]
                %244 = vst [vmem:[%s184 + $0x74] sm:%s176] %v243
                %v245 = vld [vmem:[%s183 + $0xf0] sm:%s176]
                %246 = vst [vmem:[%s184 + $0x78] sm:%s176] %v245
                %v247 = vld [vmem:[%s183 + $0xf4] sm:%s176]
                %248 = vst [vmem:[%s184 + $0x7c] sm:%s176] %v247
                %v249 = vld [vmem:[%s183 + $0xf8] sm:%s176]
                %250 = vst [vmem:[%s184 + $0x80] sm:%s176] %v249
                %v251 = vld [vmem:[%s183 + $0xfc] sm:%s176]
                %252 = vst [vmem:[%s184 + $0x84] sm:%s176] %v251
                %v253 = vld [vmem:[%s183 + $0x100] sm:%s176]
                %254 = vst [vmem:[%s184 + $0x88] sm:%s176] %v253
                %v255 = vld [vmem:[%s183 + $0x104] sm:%s176]
                %256 = vst [vmem:[%s184 + $0x8c] sm:%s176] %v255
                %v257 = vld [vmem:[%s183 + $0x108] sm:%s176]
                %258 = vst [vmem:[%s184 + $0x90] sm:%s176] %v257
                %v259 = vld [vmem:[%s183 + $0x10c] sm:%s176]
                %260 = vst [vmem:[%s184 + $0x94] sm:%s176] %v259
                %v261 = vld [vmem:[%s183 + $0x110] sm:%s176]
                %262 = vst [vmem:[%s184 + $0x98] sm:%s176] %v261
                %v263 = vld [vmem:[%s183 + $0x114] sm:%s176]
                %264 = vst [vmem:[%s184 + $0x9c] sm:%s176] %v263
                %v265 = vld [vmem:[%s183 + $0x118] sm:%s176]
                %266 = vst [vmem:[%s184 + $0xa0] sm:%s176] %v265
                %v267 = vld [vmem:[%s183 + $0x11c] sm:%s176]
                %268 = vst [vmem:[%s184 + $0xa4] sm:%s176] %v267
                %v269 = vld [vmem:[%s183 + $0x120] sm:%s176]
                %270 = vst [vmem:[%s184 + $0xa8] sm:%s176] %v269
                %v271 = vld [vmem:[%s183 + $0x124] sm:%s176]
                %272 = vst [vmem:[%s184 + $0xac] sm:%s176] %v271
                %v273 = vld [vmem:[%s183 + $0x128] sm:%s176]
                %274 = vst [vmem:[%s184 + $0xb0] sm:%s176] %v273
                %v275 = vld [vmem:[%s183 + $0x168] sm:%s176]
                %276 = vst [vmem:[%s184 + $0xb4] sm:%s176] %v275
                %v277 = vld [vmem:[%s183 + $0x16c] sm:%s176]
                %278 = vst [vmem:[%s184 + $0xb8] sm:%s176] %v277
                %v279 = vld [vmem:[%s183 + $0x170] sm:%s176]
                %280 = vst [vmem:[%s184 + $0xbc] sm:%s176] %v279
                %v281 = vld [vmem:[%s183 + $0x174] sm:%s176]
                %282 = vst [vmem:[%s184 + $0xc0] sm:%s176] %v281
                %v283 = vld [vmem:[%s183 + $0x178] sm:%s176]
                %284 = vst [vmem:[%s184 + $0xc4] sm:%s176] %v283
                %v285 = vld [vmem:[%s183 + $0x17c] sm:%s176]
                %286 = vst [vmem:[%s184 + $0xc8] sm:%s176] %v285
                %v287 = vld [vmem:[%s183 + $0x180] sm:%s176]
                %288 = vst [vmem:[%s184 + $0xcc] sm:%s176] %v287
                %v289 = vld [vmem:[%s183 + $0x184] sm:%s176]
                %290 = vst [vmem:[%s184 + $0xd0] sm:%s176] %v289
                %v291 = vld [vmem:[%s183 + $0x188] sm:%s176]
                %292 = vst [vmem:[%s184 + $0xd4] sm:%s176] %v291
                %v293 = vld [vmem:[%s183 + $0x18c] sm:%s176]
                %294 = vst [vmem:[%s184 + $0xd8] sm:%s176] %v293
                %v295 = vld [vmem:[%s183 + $0x190] sm:%s176]
                %296 = vst [vmem:[%s184 + $0xdc] sm:%s176] %v295
                %v297 = vld [vmem:[%s183 + $0x194] sm:%s176]
                %298 = vst [vmem:[%s184 + $0xe0] sm:%s176] %v297
                %v299 = vld [vmem:[%s183 + $0x198] sm:%s176]
                %300 = vst [vmem:[%s184 + $0xe4] sm:%s176] %v299
                %v301 = vld [vmem:[%s183 + $0x19c] sm:%s176]
                %302 = vst [vmem:[%s184 + $0xe8] sm:%s176] %v301
                %v303 = vld [vmem:[%s183 + $0x1a0] sm:%s176]
                %304 = vst [vmem:[%s184 + $0xec] sm:%s176] %v303
              $region45: #{block_forward.2} parent=39 // loop_footer
                %s182 = sadd.s32 1, %s178
              $region46: #{block_forward.2} parent=39 // loop_footer_branch
                %177 = sbr.rel target = $region42
              $region47: #{block_forward.2} parent=39 // loop_exit
                _
            $region40: #{block_forward.2} parent=31 // pred_fallthru
              _
          $region32: #{block_forward.2} parent=27 // pred_fallthru
            _
          %445 = vnop
        $region28: #{block_forward.2} parent=23 // pred_fallthru
          _
      $region24: #{block_forward.2} parent=5 // pred_fallthru
        _
      %p446 = scmp.le.s32.totalorder 1, %s9
      %p447 = scmp.lt.s32.totalorder %s9, 3
      %p448 = pnand %p446, %p447
      %p449 = pneg %p448
      // Predicated region
      $region66: #{block_forward.2} parent=5 // pred_check
        _
      $region67: #{block_forward.2} parent=5 // pred_check_branch
        %451 = sbr.rel (%p448) target = $region69
      $region68: #{block_forward.2} parent=5 // pred_region
        %s452 = ssub.s32 %s9, 1
        %s453 = sand.u32 %s34, 1
        %s454 = sand.u32 %s34, 1
        %s455 = smul.addr %s454, 240
        %s456 = scalar_lea.vmem [#allocation2], %s455
        // Predicated region
        $region70: #{block_forward.2} parent=68 // pred_check
          %p457 = pneg %p47
        $region71: #{block_forward.2} parent=68 // pred_check_branch
          %459 = sbr.rel (%p457) target = $region73
        $region72: #{block_forward.2} parent=68 // pred_region
          _
        $region73: #{block_forward.2} parent=68 // pred_fallthru
          _
        %s460 = sand.u32 %s34, 1
        %s461 = sand.u32 %s34, 1
        %s462 = smul.addr %s461, 240
        %s463 = scalar_lea.vmem [#allocation2], %s462
        %p464 = pneg %p47
        %p465 = pneg %p44
        %p466 = scmp.lt.s32.totalorder %s18, 0
        %s467 = scalar_select %p466, %s18, 0
        %s468 = smul.addr %s467, 2
        %s469 = scalar_lea.vmem %s1, %s468
        %p470 = pneg %p73
        %p471 = pneg %p70
        %p472 = scmp.lt.s32.totalorder %s18, 0
        %s473 = scalar_select %p472, %s18, 0
        %s474 = scalar_lea.vmem %s2, %s473
        %p475 = pneg %p99
        %p476 = pneg %p96
        %p477 = pneg %p127
        %p478 = pneg %p124
        %p479 = scmp.lt.s32.totalorder %s19, 1
        %s480 = scalar_select %p479, %s19, 1
        %p481 = scmp.lt.s32.totalorder %s18, 0
        %s482 = scalar_select %p481, %s18, 0
        %s483 = smul.addr %s480, 14
        %s484 = sadd.s32 %s482, %s483
        %s485 = smul.addr %s484, 4
        %s486 = scalar_lea.vmem %s3, %s485
        %p487 = scmp.lt.s32.totalorder %s18, 0
        %s488 = scalar_select %p487, %s18, 0
        %s489 = smul.addr %s488, 2
        %s490 = scalar_lea.vmem %s1, %s489
        %p491 = scmp.lt.s32.totalorder %s18, 0
        %s492 = scalar_select %p491, %s18, 0
        %s493 = scalar_lea.vmem %s2, %s492
        %p494 = scmp.lt.s32.totalorder %s19, 1
        %s495 = scalar_select %p494, %s19, 1
        %p496 = scmp.lt.s32.totalorder %s18, 0
        %s497 = scalar_select %p496, %s18, 0
        %s498 = smul.addr %s495, 14
        %s499 = sadd.s32 %s497, %s498
        %s500 = smul.addr %s499, 4
        %s501 = scalar_lea.vmem %s3, %s500
        %v503 = vld [vmem:[%s456] sm:$0xf]
        %v504 = vld [vmem:[%s456 + $0x4] sm:$0xf]
        %v505 = vld [vmem:[%s456 + $0x8] sm:$0xf]
        %v506 = vld [vmem:[%s456 + $0xc] sm:$0xf]
        %v507 = vld [vmem:[%s456 + $0x10] sm:$0xf]
        %v508 = vld [vmem:[%s456 + $0x14] sm:$0xf]
        %v509 = vld [vmem:[%s456 + $0x18] sm:$0xf]
        %v510 = vld [vmem:[%s456 + $0x1c] sm:$0xf]
        %v511 = vld [vmem:[%s456 + $0x20] sm:$0xf]
        %v512 = vld [vmem:[%s456 + $0x24] sm:$0xf]
        %v513 = vld [vmem:[%s490] sm:$0x3]
        %s514 = scalar_lea.vmem %s456, 60 [#allocation2]
        %v515 = vld [vmem:[%s514] sm:$0xf]
        %v516 = vld [vmem:[%s514 + $0x4] sm:$0xf]
        %v517 = vld [vmem:[%s514 + $0x8] sm:$0xf]
        %v518 = vld [vmem:[%s514 + $0xc] sm:$0xf]
        %v519 = vld [vmem:[%s514 + $0x10] sm:$0xf]
        %v520 = vld [vmem:[%s514 + $0x14] sm:$0xf]
        %v521 = vld [vmem:[%s514 + $0x18] sm:$0xf]
        %v522 = vld [vmem:[%s514 + $0x1c] sm:$0xf]
        %v523 = vld [vmem:[%s514 + $0x20] sm:$0xf]
        %v524 = vld [vmem:[%s514 + $0x24] sm:$0xf]
        %s525 = scalar_lea.vmem %s490, 2
        %v526 = vld [vmem:[%s525] sm:$0x3]
        %v537 = vunpack.c.l.b16 %v515
        %v538 = vunpack.c.l.b16 %v516
        %v539 = vunpack.c.l.b16 %v517
        %v540 = vunpack.c.l.b16 %v518
        %v541 = vunpack.c.l.b16 %v519
        %v542 = vunpack.c.l.b16 %v520
        %v543 = vunpack.c.l.b16 %v521
        %v544 = vunpack.c.l.b16 %v522
        %v545 = vunpack.c.l.b16 %v523
        %v546 = vunpack.c.l.b16 %v524
        %v547 = vpack.c.b16 %v538, %v537
        %v548 = vpack.c.b16 %v540, %v539
        %v549 = vpack.c.b16 %v542, %v541
        %v550 = vpack.c.b16 %v544, %v543
        %v551 = vpack.c.b16 %v546, %v545
        %vm552 = vcmask 31744
        %v554 = vsel %vm552, %v547, 0
        %v557 = vsel %vm552, %v548, 0
        %v560 = vsel %vm552, %v549, 0
        %v563 = vsel %vm552, %v550, 0
        %v566 = vsel %vm552, %v551, 0
        %vm568 = vcmask 1041408
        %v570 = vsel %vm568, %v526, 0
        %572 = vmatprep.subr.bf16.mxu0 0
        %573 = vmatpush1.bf16.msra.mxu0 0
        %574 = vmatprep.subr.bf16.mxu0 0
        %575 = vmatpush1.bf16.msra.mxu0 0
        %576 = vmatprep.subr.bf16.mxu0 0
        %577 = vmatpush1.bf16.msra.mxu0 0
        %578 = vmatprep.subr.bf16.mxu0 0
        %579 = vmatpush1.bf16.msra.mxu0 0
        %580 = vmatprep.subr.bf16.mxu0 0
        %581 = vmatpush1.bf16.msra.mxu0 0
        %582 = vmatprep.subr.bf16.mxu0 0
        %583 = vmatpush1.bf16.msra.mxu0 0
        %584 = vmatprep.subr.bf16.mxu0 0
        %585 = vmatpush1.bf16.msra.mxu0 0
        %586 = vmatprep.subr.bf16.mxu0 0
        %587 = vmatpush1.bf16.msra.mxu0 %v570
        %588 = vmatprep.subr.bf16.mxu0 0
        %589 = vmatpush2.bf16.msra.mxu0 0
        %590 = vmatprep.subr.bf16.mxu0 0
        %591 = vmatpush2.bf16.msra.mxu0 0
        %592 = vmatprep.subr.bf16.mxu0 0
        %593 = vmatpush2.bf16.msra.mxu0 0
        %594 = vmatprep.subr.bf16.mxu0 0
        %595 = vmatpush2.bf16.msra.mxu0 0
        %596 = vmatprep.subr.bf16.mxu0 0
        %597 = vmatpush2.bf16.msra.mxu0 0
        %598 = vmatprep.subr.bf16.mxu0 0
        %599 = vmatpush2.bf16.msra.mxu0 0
        %600 = vmatprep.subr.bf16.mxu0 0
        %601 = vmatpush2.bf16.msra.mxu0 0
        %602 = vmatprep.subr.bf16.mxu0 0
        %603 = vmatpush2.bf16.msra.mxu0 0
        %604 = vmatprep.mubr.bf16.mxu0 0
        %605 = vmatmul.mubr.bf16.gmra.mxu0 %v554
        %v606 = vpop.f32.mrf.mxu0
        %v607 = vadd.f32 0.0, %v606
        %v608 = vpop.f32.mrf.mxu0
        %v609 = vpop.f32.mrf.mxu0
        %v610 = vadd.f32 0.0, %v609
        %v611 = vpop.f32.mrf.mxu0
        %612 = vmatprep.mubr.bf16.mxu0 0
        %613 = vmatmul.mubr.bf16.gmra.mxu0 %v557
        %v614 = vpop.f32.mrf.mxu0
        %v615 = vadd.f32 0.0, %v614
        %v616 = vpop.f32.mrf.mxu0
        %v617 = vpop.f32.mrf.mxu0
        %v618 = vadd.f32 0.0, %v617
        %v619 = vpop.f32.mrf.mxu0
        %620 = vmatprep.mubr.bf16.mxu0 0
        %621 = vmatmul.mubr.bf16.gmra.mxu0 %v560
        %v622 = vpop.f32.mrf.mxu0
        %v623 = vadd.f32 0.0, %v622
        %v624 = vpop.f32.mrf.mxu0
        %v625 = vpop.f32.mrf.mxu0
        %v626 = vadd.f32 0.0, %v625
        %v627 = vpop.f32.mrf.mxu0
        %628 = vmatprep.mubr.bf16.mxu0 0
        %629 = vmatmul.mubr.bf16.gmra.mxu0 %v563
        %v630 = vpop.f32.mrf.mxu0
        %v631 = vadd.f32 0.0, %v630
        %v632 = vpop.f32.mrf.mxu0
        %v633 = vpop.f32.mrf.mxu0
        %v634 = vadd.f32 0.0, %v633
        %v635 = vpop.f32.mrf.mxu0
        %636 = vmatprep.mubr.bf16.mxu0 0
        %637 = vmatmul.mubr.bf16.gmra.mxu0 %v566
        %v638 = vpop.f32.mrf.mxu0
        %v639 = vadd.f32 0.0, %v638
        %v640 = vpop.f32.mrf.mxu0
        %v641 = vpop.f32.mrf.mxu0
        %v642 = vadd.f32 0.0, %v641
        %v643 = vpop.f32.mrf.mxu0
        %644 = vdwg.mxu0
        %v655 = vunpack.c.l.b16 %v503
        %v656 = vunpack.c.l.b16 %v504
        %v657 = vunpack.c.l.b16 %v505
        %v658 = vunpack.c.l.b16 %v506
        %v659 = vunpack.c.l.b16 %v507
        %v660 = vunpack.c.l.b16 %v508
        %v661 = vunpack.c.l.b16 %v509
        %v662 = vunpack.c.l.b16 %v510
        %v663 = vunpack.c.l.b16 %v511
        %v664 = vunpack.c.l.b16 %v512
        %v665 = vpack.c.b16 %v656, %v655
        %v666 = vpack.c.b16 %v658, %v657
        %v667 = vpack.c.b16 %v660, %v659
        %v668 = vpack.c.b16 %v662, %v661
        %v669 = vpack.c.b16 %v664, %v663
        %v671 = vsel %vm552, %v665, 0
        %v674 = vsel %vm552, %v666, 0
        %v677 = vsel %vm552, %v667, 0
        %v680 = vsel %vm552, %v668, 0
        %v683 = vsel %vm552, %v669, 0
        %v686 = vsel %vm568, %v513, 0
        %688 = vmatprep.subr.bf16.mxu0 0
        %689 = vmatpush1.bf16.msra.mxu0 0
        %690 = vmatprep.subr.bf16.mxu0 0
        %691 = vmatpush1.bf16.msra.mxu0 0
        %692 = vmatprep.subr.bf16.mxu0 0
        %693 = vmatpush1.bf16.msra.mxu0 0
        %694 = vmatprep.subr.bf16.mxu0 0
        %695 = vmatpush1.bf16.msra.mxu0 0
        %696 = vmatprep.subr.bf16.mxu0 0
        %697 = vmatpush1.bf16.msra.mxu0 0
        %698 = vmatprep.subr.bf16.mxu0 0
        %699 = vmatpush1.bf16.msra.mxu0 0
        %700 = vmatprep.subr.bf16.mxu0 0
        %701 = vmatpush1.bf16.msra.mxu0 0
        %702 = vmatprep.subr.bf16.mxu0 0
        %703 = vmatpush1.bf16.msra.mxu0 %v686
        %704 = vmatprep.subr.bf16.mxu0 0
        %705 = vmatpush2.bf16.msra.mxu0 0
        %706 = vmatprep.subr.bf16.mxu0 0
        %707 = vmatpush2.bf16.msra.mxu0 0
        %708 = vmatprep.subr.bf16.mxu0 0
        %709 = vmatpush2.bf16.msra.mxu0 0
        %710 = vmatprep.subr.bf16.mxu0 0
        %711 = vmatpush2.bf16.msra.mxu0 0
        %712 = vmatprep.subr.bf16.mxu0 0
        %713 = vmatpush2.bf16.msra.mxu0 0
        %714 = vmatprep.subr.bf16.mxu0 0
        %715 = vmatpush2.bf16.msra.mxu0 0
        %716 = vmatprep.subr.bf16.mxu0 0
        %717 = vmatpush2.bf16.msra.mxu0 0
        %718 = vmatprep.subr.bf16.mxu0 0
        %719 = vmatpush2.bf16.msra.mxu0 0
        %720 = vmatprep.mubr.bf16.mxu0 0
        %721 = vmatmul.mubr.bf16.gmra.mxu0 %v671
        %v722 = vpop.f32.mrf.mxu0
        %v723 = vadd.f32 %v607, %v722
        %v724 = vpop.f32.mrf.mxu0
        %v725 = vpop.f32.mrf.mxu0
        %v726 = vadd.f32 %v610, %v725
        %v727 = vpop.f32.mrf.mxu0
        %728 = vmatprep.mubr.bf16.mxu0 0
        %729 = vmatmul.mubr.bf16.gmra.mxu0 %v674
        %v730 = vpop.f32.mrf.mxu0
        %v731 = vadd.f32 %v615, %v730
        %v732 = vpop.f32.mrf.mxu0
        %v733 = vpop.f32.mrf.mxu0
        %v734 = vadd.f32 %v618, %v733
        %v735 = vpop.f32.mrf.mxu0
        %736 = vmatprep.mubr.bf16.mxu0 0
        %737 = vmatmul.mubr.bf16.gmra.mxu0 %v677
        %v738 = vpop.f32.mrf.mxu0
        %v739 = vadd.f32 %v623, %v738
        %v740 = vpop.f32.mrf.mxu0
        %v741 = vpop.f32.mrf.mxu0
        %v742 = vadd.f32 %v626, %v741
        %v743 = vpop.f32.mrf.mxu0
        %744 = vmatprep.mubr.bf16.mxu0 0
        %745 = vmatmul.mubr.bf16.gmra.mxu0 %v680
        %v746 = vpop.f32.mrf.mxu0
        %v747 = vadd.f32 %v631, %v746
        %v748 = vpop.f32.mrf.mxu0
        %v749 = vpop.f32.mrf.mxu0
        %v750 = vadd.f32 %v634, %v749
        %v751 = vpop.f32.mrf.mxu0
        %752 = vmatprep.mubr.bf16.mxu0 0
        %753 = vmatmul.mubr.bf16.gmra.mxu0 %v683
        %v754 = vpop.f32.mrf.mxu0
        %v755 = vadd.f32 %v639, %v754
        %v756 = vpop.f32.mrf.mxu0
        %v757 = vpop.f32.mrf.mxu0
        %v758 = vadd.f32 %v642, %v757
        %v759 = vpop.f32.mrf.mxu0
        %760 = vdwg.mxu0
        %v761 = vld [vmem:[%s456] sm:$0xf]
        %v762 = vld [vmem:[%s456 + $0x4] sm:$0xf]
        %v763 = vld [vmem:[%s456 + $0x8] sm:$0xf]
        %v764 = vld [vmem:[%s456 + $0xc] sm:$0xf]
        %v765 = vld [vmem:[%s456 + $0x10] sm:$0xf]
        %v766 = vld [vmem:[%s456 + $0x14] sm:$0xf]
        %v767 = vld [vmem:[%s456 + $0x18] sm:$0xf]
        %v768 = vld [vmem:[%s456 + $0x1c] sm:$0xf]
        %v769 = vld [vmem:[%s456 + $0x20] sm:$0xf]
        %v770 = vld [vmem:[%s456 + $0x24] sm:$0xf]
        %v771 = vld [vmem:[%s456 + $0x28] sm:$0x1]
        %s772 = scalar_lea.vmem %s490, 4
        %v773 = vld [vmem:[%s772] sm:$0x3]
        %v785 = vunpack.c.l.b16 %v761
        %v786 = vunpack.c.l.b16 %v762
        %v787 = vunpack.c.l.b16 %v763
        %v788 = vunpack.c.l.b16 %v764
        %v789 = vunpack.c.l.b16 %v765
        %v790 = vunpack.c.l.b16 %v766
        %v791 = vunpack.c.l.b16 %v767
        %v792 = vunpack.c.l.b16 %v768
        %v793 = vunpack.c.l.b16 %v769
        %v794 = vunpack.c.l.b16 %v770
        %v795 = vunpack.c.l.b16 %v771
        %v796 = vpack.c.b16 %v786, %v785
        %v797 = vpack.c.b16 %v788, %v787
        %v798 = vpack.c.b16 %v790, %v789
        %v799 = vpack.c.b16 %v792, %v791
        %v800 = vpack.c.b16 %v794, %v793
        %v801 = vpack.c.b16 %v795, %v795
        %vm802 = vsmask.f32 7424
        %v804 = vshrl.u32 %v796, 16
        %v806 = vshll.u32 %v796, 16
        %v808 = vrot.slane %v806, 1
        %v809 = vor.u32 %v804, %v808
        %v811 = vshll.u32 %v797, 16
        %v813 = vrot.slane %v811, 1
        %v814 = vsel %vm802, %v809, %v813
        %v815 = vshrl.u32 %v797, 16
        %v817 = vor.u32 %v815, %v813
        %v819 = vshll.u32 %v798, 16
        %v821 = vrot.slane %v819, 1
        %v822 = vsel %vm802, %v817, %v821
        %v823 = vshrl.u32 %v798, 16
        %v825 = vor.u32 %v823, %v821
        %v827 = vshll.u32 %v799, 16
        %v829 = vrot.slane %v827, 1
        %v830 = vsel %vm802, %v825, %v829
        %v831 = vshrl.u32 %v799, 16
        %v833 = vor.u32 %v831, %v829
        %v835 = vshll.u32 %v800, 16
        %v837 = vrot.slane %v835, 1
        %v838 = vsel %vm802, %v833, %v837
        %v839 = vshrl.u32 %v800, 16
        %v841 = vor.u32 %v839, %v837
        %v843 = vshll.u32 %v801, 16
        %v845 = vrot.slane %v843, 1
        %v846 = vsel %vm802, %v841, %v845
        %v848 = vsel %vm552, %v814, 0
        %v851 = vsel %vm552, %v822, 0
        %v854 = vsel %vm552, %v830, 0
        %v857 = vsel %vm552, %v838, 0
        %v860 = vsel %vm552, %v846, 0
        %v863 = vsel %vm568, %v773, 0
        %865 = vmatprep.subr.bf16.mxu0 0
        %866 = vmatpush1.bf16.msra.mxu0 0
        %867 = vmatprep.subr.bf16.mxu0 0
        %868 = vmatpush1.bf16.msra.mxu0 0
        %869 = vmatprep.subr.bf16.mxu0 0
        %870 = vmatpush1.bf16.msra.mxu0 0
        %871 = vmatprep.subr.bf16.mxu0 0
        %872 = vmatpush1.bf16.msra.mxu0 0
        %873 = vmatprep.subr.bf16.mxu0 0
        %874 = vmatpush1.bf16.msra.mxu0 0
        %875 = vmatprep.subr.bf16.mxu0 0
        %876 = vmatpush1.bf16.msra.mxu0 0
        %877 = vmatprep.subr.bf16.mxu0 0
        %878 = vmatpush1.bf16.msra.mxu0 0
        %879 = vmatprep.subr.bf16.mxu0 0
        %880 = vmatpush1.bf16.msra.mxu0 %v863
        %881 = vmatprep.subr.bf16.mxu0 0
        %882 = vmatpush2.bf16.msra.mxu0 0
        %883 = vmatprep.subr.bf16.mxu0 0
        %884 = vmatpush2.bf16.msra.mxu0 0
        %885 = vmatprep.subr.bf16.mxu0 0
        %886 = vmatpush2.bf16.msra.mxu0 0
        %887 = vmatprep.subr.bf16.mxu0 0
        %888 = vmatpush2.bf16.msra.mxu0 0
        %889 = vmatprep.subr.bf16.mxu0 0
        %890 = vmatpush2.bf16.msra.mxu0 0
        %891 = vmatprep.subr.bf16.mxu0 0
        %892 = vmatpush2.bf16.msra.mxu0 0
        %893 = vmatprep.subr.bf16.mxu0 0
        %894 = vmatpush2.bf16.msra.mxu0 0
        %895 = vmatprep.subr.bf16.mxu0 0
        %896 = vmatpush2.bf16.msra.mxu0 0
        %897 = vmatprep.mubr.bf16.mxu0 0
        %898 = vmatmul.mubr.bf16.gmra.mxu0 %v848
        %v899 = vpop.f32.mrf.mxu0
        %v900 = vadd.f32 0.0, %v899
        %v901 = vpop.f32.mrf.mxu0
        %v902 = vpop.f32.mrf.mxu0
        %v903 = vadd.f32 0.0, %v902
        %v904 = vpop.f32.mrf.mxu0
        %905 = vmatprep.mubr.bf16.mxu0 0
        %906 = vmatmul.mubr.bf16.gmra.mxu0 %v851
        %v907 = vpop.f32.mrf.mxu0
        %v908 = vadd.f32 0.0, %v907
        %v909 = vpop.f32.mrf.mxu0
        %v910 = vpop.f32.mrf.mxu0
        %v911 = vadd.f32 0.0, %v910
        %v912 = vpop.f32.mrf.mxu0
        %913 = vmatprep.mubr.bf16.mxu0 0
        %914 = vmatmul.mubr.bf16.gmra.mxu0 %v854
        %v915 = vpop.f32.mrf.mxu0
        %v916 = vadd.f32 0.0, %v915
        %v917 = vpop.f32.mrf.mxu0
        %v918 = vpop.f32.mrf.mxu0
        %v919 = vadd.f32 0.0, %v918
        %v920 = vpop.f32.mrf.mxu0
        %921 = vmatprep.mubr.bf16.mxu0 0
        %922 = vmatmul.mubr.bf16.gmra.mxu0 %v857
        %v923 = vpop.f32.mrf.mxu0
        %v924 = vadd.f32 0.0, %v923
        %v925 = vpop.f32.mrf.mxu0
        %v926 = vpop.f32.mrf.mxu0
        %v927 = vadd.f32 0.0, %v926
        %v928 = vpop.f32.mrf.mxu0
        %929 = vmatprep.mubr.bf16.mxu0 0
        %930 = vmatmul.mubr.bf16.gmra.mxu0 %v860
        %v931 = vpop.f32.mrf.mxu0
        %v932 = vadd.f32 0.0, %v931
        %v933 = vpop.f32.mrf.mxu0
        %v934 = vpop.f32.mrf.mxu0
        %v935 = vadd.f32 0.0, %v934
        %v936 = vpop.f32.mrf.mxu0
        %937 = vdwg.mxu0
        %v938 = vadd.f32 %v723, %v900
        %v939 = vadd.f32 %v726, %v903
        %v940 = vadd.f32 %v731, %v908
        %v941 = vadd.f32 %v734, %v911
        %v942 = vadd.f32 %v739, %v916
        %v943 = vadd.f32 %v742, %v919
        %v944 = vadd.f32 %v747, %v924
        %v945 = vadd.f32 %v750, %v927
        %v946 = vadd.f32 %v755, %v932
        %v947 = vadd.f32 %v758, %v935
        %s948 = scalar_lea.vmem %s456, 120 [#allocation2]
        %v949 = vld [vmem:[%s948] sm:$0xf]
        %v950 = vld [vmem:[%s948 + $0x4] sm:$0xf]
        %v951 = vld [vmem:[%s948 + $0x8] sm:$0xf]
        %v952 = vld [vmem:[%s948 + $0xc] sm:$0xf]
        %v953 = vld [vmem:[%s948 + $0x10] sm:$0xf]
        %v954 = vld [vmem:[%s948 + $0x14] sm:$0xf]
        %v955 = vld [vmem:[%s948 + $0x18] sm:$0xf]
        %v956 = vld [vmem:[%s948 + $0x1c] sm:$0xf]
        %v957 = vld [vmem:[%s948 + $0x20] sm:$0xf]
        %v958 = vld [vmem:[%s948 + $0x24] sm:$0xf]
        %s959 = scalar_lea.vmem %s490, 6
        %v960 = vld [vmem:[%s959] sm:$0x3]
        %v971 = vunpack.c.l.b16 %v949
        %v972 = vunpack.c.l.b16 %v950
        %v973 = vunpack.c.l.b16 %v951
        %v974 = vunpack.c.l.b16 %v952
        %v975 = vunpack.c.l.b16 %v953
        %v976 = vunpack.c.l.b16 %v954
        %v977 = vunpack.c.l.b16 %v955
        %v978 = vunpack.c.l.b16 %v956
        %v979 = vunpack.c.l.b16 %v957
        %v980 = vunpack.c.l.b16 %v958
        %v981 = vpack.c.b16 %v972, %v971
        %v982 = vpack.c.b16 %v974, %v973
        %v983 = vpack.c.b16 %v976, %v975
        %v984 = vpack.c.b16 %v978, %v977
        %v985 = vpack.c.b16 %v980, %v979
        %v987 = vsel %vm552, %v981, 0
        %v990 = vsel %vm552, %v982, 0
        %v993 = vsel %vm552, %v983, 0
        %v996 = vsel %vm552, %v984, 0
        %v999 = vsel %vm552, %v985, 0
        %v1002 = vsel %vm568, %v960, 0
        %1004 = vmatprep.subr.bf16.mxu0 0
        %1005 = vmatpush1.bf16.msra.mxu0 0
        %1006 = vmatprep.subr.bf16.mxu0 0
        %1007 = vmatpush1.bf16.msra.mxu0 0
        %1008 = vmatprep.subr.bf16.mxu0 0
        %1009 = vmatpush1.bf16.msra.mxu0 0
        %1010 = vmatprep.subr.bf16.mxu0 0
        %1011 = vmatpush1.bf16.msra.mxu0 0
        %1012 = vmatprep.subr.bf16.mxu0 0
        %1013 = vmatpush1.bf16.msra.mxu0 0
        %1014 = vmatprep.subr.bf16.mxu0 0
        %1015 = vmatpush1.bf16.msra.mxu0 0
        %1016 = vmatprep.subr.bf16.mxu0 0
        %1017 = vmatpush1.bf16.msra.mxu0 0
        %1018 = vmatprep.subr.bf16.mxu0 0
        %1019 = vmatpush1.bf16.msra.mxu0 %v1002
        %1020 = vmatprep.subr.bf16.mxu0 0
        %1021 = vmatpush2.bf16.msra.mxu0 0
        %1022 = vmatprep.subr.bf16.mxu0 0
        %1023 = vmatpush2.bf16.msra.mxu0 0
        %1024 = vmatprep.subr.bf16.mxu0 0
        %1025 = vmatpush2.bf16.msra.mxu0 0
        %1026 = vmatprep.subr.bf16.mxu0 0
        %1027 = vmatpush2.bf16.msra.mxu0 0
        %1028 = vmatprep.subr.bf16.mxu0 0
        %1029 = vmatpush2.bf16.msra.mxu0 0
        %1030 = vmatprep.subr.bf16.mxu0 0
        %1031 = vmatpush2.bf16.msra.mxu0 0
        %1032 = vmatprep.subr.bf16.mxu0 0
        %1033 = vmatpush2.bf16.msra.mxu0 0
        %1034 = vmatprep.subr.bf16.mxu0 0
        %1035 = vmatpush2.bf16.msra.mxu0 0
        %1036 = vmatprep.mubr.bf16.mxu0 0
        %1037 = vmatmul.mubr.bf16.gmra.mxu0 %v987
        %v1038 = vpop.f32.mrf.mxu0
        %v1039 = vadd.f32 0.0, %v1038
        %v1040 = vpop.f32.mrf.mxu0
        %v1041 = vpop.f32.mrf.mxu0
        %v1042 = vadd.f32 0.0, %v1041
        %v1043 = vpop.f32.mrf.mxu0
        %1044 = vmatprep.mubr.bf16.mxu0 0
        %1045 = vmatmul.mubr.bf16.gmra.mxu0 %v990
        %v1046 = vpop.f32.mrf.mxu0
        %v1047 = vadd.f32 0.0, %v1046
        %v1048 = vpop.f32.mrf.mxu0
        %v1049 = vpop.f32.mrf.mxu0
        %v1050 = vadd.f32 0.0, %v1049
        %v1051 = vpop.f32.mrf.mxu0
        %1052 = vmatprep.mubr.bf16.mxu0 0
        %1053 = vmatmul.mubr.bf16.gmra.mxu0 %v993
        %v1054 = vpop.f32.mrf.mxu0
        %v1055 = vadd.f32 0.0, %v1054
        %v1056 = vpop.f32.mrf.mxu0
        %v1057 = vpop.f32.mrf.mxu0
        %v1058 = vadd.f32 0.0, %v1057
        %v1059 = vpop.f32.mrf.mxu0
        %1060 = vmatprep.mubr.bf16.mxu0 0
        %1061 = vmatmul.mubr.bf16.gmra.mxu0 %v996
        %v1062 = vpop.f32.mrf.mxu0
        %v1063 = vadd.f32 0.0, %v1062
        %v1064 = vpop.f32.mrf.mxu0
        %v1065 = vpop.f32.mrf.mxu0
        %v1066 = vadd.f32 0.0, %v1065
        %v1067 = vpop.f32.mrf.mxu0
        %1068 = vmatprep.mubr.bf16.mxu0 0
        %1069 = vmatmul.mubr.bf16.gmra.mxu0 %v999
        %v1070 = vpop.f32.mrf.mxu0
        %v1071 = vadd.f32 0.0, %v1070
        %v1072 = vpop.f32.mrf.mxu0
        %v1073 = vpop.f32.mrf.mxu0
        %v1074 = vadd.f32 0.0, %v1073
        %v1075 = vpop.f32.mrf.mxu0
        %1076 = vdwg.mxu0
        %v1077 = vadd.f32 %v938, %v1039
        %v1078 = vadd.f32 %v939, %v1042
        %v1079 = vadd.f32 %v940, %v1047
        %v1080 = vadd.f32 %v941, %v1050
        %v1081 = vadd.f32 %v942, %v1055
        %v1082 = vadd.f32 %v943, %v1058
        %v1083 = vadd.f32 %v944, %v1063
        %v1084 = vadd.f32 %v945, %v1066
        %v1085 = vadd.f32 %v946, %v1071
        %v1086 = vadd.f32 %v947, %v1074
        %s1087 = scalar_lea.vmem %s456, 180 [#allocation2]
        %v1088 = vld [vmem:[%s1087] sm:$0xf]
        %v1089 = vld [vmem:[%s1087 + $0x4] sm:$0xf]
        %v1090 = vld [vmem:[%s1087 + $0x8] sm:$0xf]
        %v1091 = vld [vmem:[%s1087 + $0xc] sm:$0xf]
        %v1092 = vld [vmem:[%s1087 + $0x10] sm:$0xf]
        %v1093 = vld [vmem:[%s1087 + $0x14] sm:$0xf]
        %v1094 = vld [vmem:[%s1087 + $0x18] sm:$0xf]
        %v1095 = vld [vmem:[%s1087 + $0x1c] sm:$0xf]
        %v1096 = vld [vmem:[%s1087 + $0x20] sm:$0xf]
        %v1097 = vld [vmem:[%s1087 + $0x24] sm:$0xf]
        %s1098 = scalar_lea.vmem %s490, 8
        %v1099 = vld [vmem:[%s1098] sm:$0x3]
        %v1110 = vunpack.c.l.b16 %v1088
        %v1111 = vunpack.c.l.b16 %v1089
        %v1112 = vunpack.c.l.b16 %v1090
        %v1113 = vunpack.c.l.b16 %v1091
        %v1114 = vunpack.c.l.b16 %v1092
        %v1115 = vunpack.c.l.b16 %v1093
        %v1116 = vunpack.c.l.b16 %v1094
        %v1117 = vunpack.c.l.b16 %v1095
        %v1118 = vunpack.c.l.b16 %v1096
        %v1119 = vunpack.c.l.b16 %v1097
        %v1120 = vpack.c.b16 %v1111, %v1110
        %v1121 = vpack.c.b16 %v1113, %v1112
        %v1122 = vpack.c.b16 %v1115, %v1114
        %v1123 = vpack.c.b16 %v1117, %v1116
        %v1124 = vpack.c.b16 %v1119, %v1118
        %v1126 = vsel %vm552, %v1120, 0
        %v1129 = vsel %vm552, %v1121, 0
        %v1132 = vsel %vm552, %v1122, 0
        %v1135 = vsel %vm552, %v1123, 0
        %v1138 = vsel %vm552, %v1124, 0
        %v1141 = vsel %vm568, %v1099, 0
        %1143 = vmatprep.subr.bf16.mxu0 0
        %1144 = vmatpush1.bf16.msra.mxu0 0
        %1145 = vmatprep.subr.bf16.mxu0 0
        %1146 = vmatpush1.bf16.msra.mxu0 0
        %1147 = vmatprep.subr.bf16.mxu0 0
        %1148 = vmatpush1.bf16.msra.mxu0 0
        %1149 = vmatprep.subr.bf16.mxu0 0
        %1150 = vmatpush1.bf16.msra.mxu0 0
        %1151 = vmatprep.subr.bf16.mxu0 0
        %1152 = vmatpush1.bf16.msra.mxu0 0
        %1153 = vmatprep.subr.bf16.mxu0 0
        %1154 = vmatpush1.bf16.msra.mxu0 0
        %1155 = vmatprep.subr.bf16.mxu0 0
        %1156 = vmatpush1.bf16.msra.mxu0 0
        %1157 = vmatprep.subr.bf16.mxu0 0
        %1158 = vmatpush1.bf16.msra.mxu0 %v1141
        %1159 = vmatprep.subr.bf16.mxu0 0
        %1160 = vmatpush2.bf16.msra.mxu0 0
        %1161 = vmatprep.subr.bf16.mxu0 0
        %1162 = vmatpush2.bf16.msra.mxu0 0
        %1163 = vmatprep.subr.bf16.mxu0 0
        %1164 = vmatpush2.bf16.msra.mxu0 0
        %1165 = vmatprep.subr.bf16.mxu0 0
        %1166 = vmatpush2.bf16.msra.mxu0 0
        %1167 = vmatprep.subr.bf16.mxu0 0
        %1168 = vmatpush2.bf16.msra.mxu0 0
        %1169 = vmatprep.subr.bf16.mxu0 0
        %1170 = vmatpush2.bf16.msra.mxu0 0
        %1171 = vmatprep.subr.bf16.mxu0 0
        %1172 = vmatpush2.bf16.msra.mxu0 0
        %1173 = vmatprep.subr.bf16.mxu0 0
        %1174 = vmatpush2.bf16.msra.mxu0 0
        %1175 = vmatprep.mubr.bf16.mxu0 0
        %1176 = vmatmul.mubr.bf16.gmra.mxu0 %v1126
        %v1177 = vpop.f32.mrf.mxu0
        %v1178 = vadd.f32 0.0, %v1177
        %v1179 = vpop.f32.mrf.mxu0
        %v1180 = vpop.f32.mrf.mxu0
        %v1181 = vadd.f32 0.0, %v1180
        %v1182 = vpop.f32.mrf.mxu0
        %1183 = vmatprep.mubr.bf16.mxu0 0
        %1184 = vmatmul.mubr.bf16.gmra.mxu0 %v1129
        %v1185 = vpop.f32.mrf.mxu0
        %v1186 = vadd.f32 0.0, %v1185
        %v1187 = vpop.f32.mrf.mxu0
        %v1188 = vpop.f32.mrf.mxu0
        %v1189 = vadd.f32 0.0, %v1188
        %v1190 = vpop.f32.mrf.mxu0
        %1191 = vmatprep.mubr.bf16.mxu0 0
        %1192 = vmatmul.mubr.bf16.gmra.mxu0 %v1132
        %v1193 = vpop.f32.mrf.mxu0
        %v1194 = vadd.f32 0.0, %v1193
        %v1195 = vpop.f32.mrf.mxu0
        %v1196 = vpop.f32.mrf.mxu0
        %v1197 = vadd.f32 0.0, %v1196
        %v1198 = vpop.f32.mrf.mxu0
        %1199 = vmatprep.mubr.bf16.mxu0 0
        %1200 = vmatmul.mubr.bf16.gmra.mxu0 %v1135
        %v1201 = vpop.f32.mrf.mxu0
        %v1202 = vadd.f32 0.0, %v1201
        %v1203 = vpop.f32.mrf.mxu0
        %v1204 = vpop.f32.mrf.mxu0
        %v1205 = vadd.f32 0.0, %v1204
        %v1206 = vpop.f32.mrf.mxu0
        %1207 = vmatprep.mubr.bf16.mxu0 0
        %1208 = vmatmul.mubr.bf16.gmra.mxu0 %v1138
        %v1209 = vpop.f32.mrf.mxu0
        %v1210 = vadd.f32 0.0, %v1209
        %v1211 = vpop.f32.mrf.mxu0
        %v1212 = vpop.f32.mrf.mxu0
        %v1213 = vadd.f32 0.0, %v1212
        %v1214 = vpop.f32.mrf.mxu0
        %1215 = vdwg.mxu0
        %v1216 = vadd.f32 %v1077, %v1178
        %v1217 = vadd.f32 %v1078, %v1181
        %v1218 = vadd.f32 %v1079, %v1186
        %v1219 = vadd.f32 %v1080, %v1189
        %v1220 = vadd.f32 %v1081, %v1194
        %v1221 = vadd.f32 %v1082, %v1197
        %v1222 = vadd.f32 %v1083, %v1202
        %v1223 = vadd.f32 %v1084, %v1205
        %v1224 = vadd.f32 %v1085, %v1210
        %v1225 = vadd.f32 %v1086, %v1213
        %v1226 = vld [vmem:[%s948] sm:$0xf]
        %v1227 = vld [vmem:[%s948 + $0x4] sm:$0xf]
        %v1228 = vld [vmem:[%s948 + $0x8] sm:$0xf]
        %v1229 = vld [vmem:[%s948 + $0xc] sm:$0xf]
        %v1230 = vld [vmem:[%s948 + $0x10] sm:$0xf]
        %v1231 = vld [vmem:[%s948 + $0x14] sm:$0xf]
        %v1232 = vld [vmem:[%s948 + $0x18] sm:$0xf]
        %v1233 = vld [vmem:[%s948 + $0x1c] sm:$0xf]
        %v1234 = vld [vmem:[%s948 + $0x20] sm:$0xf]
        %v1235 = vld [vmem:[%s948 + $0x24] sm:$0xf]
        %v1236 = vld [vmem:[%s948 + $0x28] sm:$0x1]
        %s1237 = scalar_lea.vmem %s490, 10
        %v1238 = vld [vmem:[%s1237] sm:$0x3]
        %v1250 = vunpack.c.l.b16 %v1226
        %v1251 = vunpack.c.l.b16 %v1227
        %v1252 = vunpack.c.l.b16 %v1228
        %v1253 = vunpack.c.l.b16 %v1229
        %v1254 = vunpack.c.l.b16 %v1230
        %v1255 = vunpack.c.l.b16 %v1231
        %v1256 = vunpack.c.l.b16 %v1232
        %v1257 = vunpack.c.l.b16 %v1233
        %v1258 = vunpack.c.l.b16 %v1234
        %v1259 = vunpack.c.l.b16 %v1235
        %v1260 = vunpack.c.l.b16 %v1236
        %v1261 = vpack.c.b16 %v1251, %v1250
        %v1262 = vpack.c.b16 %v1253, %v1252
        %v1263 = vpack.c.b16 %v1255, %v1254
        %v1264 = vpack.c.b16 %v1257, %v1256
        %v1265 = vpack.c.b16 %v1259, %v1258
        %v1266 = vpack.c.b16 %v1260, %v1260
        %v1268 = vshrl.u32 %v1261, 16
        %v1270 = vshll.u32 %v1261, 16
        %v1272 = vrot.slane %v1270, 1
        %v1273 = vor.u32 %v1268, %v1272
        %v1275 = vshll.u32 %v1262, 16
        %v1277 = vrot.slane %v1275, 1
        %v1278 = vsel %vm802, %v1273, %v1277
        %v1279 = vshrl.u32 %v1262, 16
        %v1281 = vor.u32 %v1279, %v1277
        %v1283 = vshll.u32 %v1263, 16
        %v1285 = vrot.slane %v1283, 1
        %v1286 = vsel %vm802, %v1281, %v1285
        %v1287 = vshrl.u32 %v1263, 16
        %v1289 = vor.u32 %v1287, %v1285
        %v1291 = vshll.u32 %v1264, 16
        %v1293 = vrot.slane %v1291, 1
        %v1294 = vsel %vm802, %v1289, %v1293
        %v1295 = vshrl.u32 %v1264, 16
        %v1297 = vor.u32 %v1295, %v1293
        %v1299 = vshll.u32 %v1265, 16
        %v1301 = vrot.slane %v1299, 1
        %v1302 = vsel %vm802, %v1297, %v1301
        %v1303 = vshrl.u32 %v1265, 16
        %v1305 = vor.u32 %v1303, %v1301
        %v1307 = vshll.u32 %v1266, 16
        %v1309 = vrot.slane %v1307, 1
        %v1310 = vsel %vm802, %v1305, %v1309
        %v1312 = vsel %vm552, %v1278, 0
        %v1315 = vsel %vm552, %v1286, 0
        %v1318 = vsel %vm552, %v1294, 0
        %v1321 = vsel %vm552, %v1302, 0
        %v1324 = vsel %vm552, %v1310, 0
        %v1327 = vsel %vm568, %v1238, 0
        %1329 = vmatprep.subr.bf16.mxu0 0
        %1330 = vmatpush1.bf16.msra.mxu0 0
        %1331 = vmatprep.subr.bf16.mxu0 0
        %1332 = vmatpush1.bf16.msra.mxu0 0
        %1333 = vmatprep.subr.bf16.mxu0 0
        %1334 = vmatpush1.bf16.msra.mxu0 0
        %1335 = vmatprep.subr.bf16.mxu0 0
        %1336 = vmatpush1.bf16.msra.mxu0 0
        %1337 = vmatprep.subr.bf16.mxu0 0
        %1338 = vmatpush1.bf16.msra.mxu0 0
        %1339 = vmatprep.subr.bf16.mxu0 0
        %1340 = vmatpush1.bf16.msra.mxu0 0
        %1341 = vmatprep.subr.bf16.mxu0 0
        %1342 = vmatpush1.bf16.msra.mxu0 0
        %1343 = vmatprep.subr.bf16.mxu0 0
        %1344 = vmatpush1.bf16.msra.mxu0 %v1327
        %1345 = vmatprep.subr.bf16.mxu0 0
        %1346 = vmatpush2.bf16.msra.mxu0 0
        %1347 = vmatprep.subr.bf16.mxu0 0
        %1348 = vmatpush2.bf16.msra.mxu0 0
        %1349 = vmatprep.subr.bf16.mxu0 0
        %1350 = vmatpush2.bf16.msra.mxu0 0
        %1351 = vmatprep.subr.bf16.mxu0 0
        %1352 = vmatpush2.bf16.msra.mxu0 0
        %1353 = vmatprep.subr.bf16.mxu0 0
        %1354 = vmatpush2.bf16.msra.mxu0 0
        %1355 = vmatprep.subr.bf16.mxu0 0
        %1356 = vmatpush2.bf16.msra.mxu0 0
        %1357 = vmatprep.subr.bf16.mxu0 0
        %1358 = vmatpush2.bf16.msra.mxu0 0
        %1359 = vmatprep.subr.bf16.mxu0 0
        %1360 = vmatpush2.bf16.msra.mxu0 0
        %1361 = vmatprep.mubr.bf16.mxu0 0
        %1362 = vmatmul.mubr.bf16.gmra.mxu0 %v1312
        %v1363 = vpop.f32.mrf.mxu0
        %v1364 = vadd.f32 0.0, %v1363
        %v1365 = vpop.f32.mrf.mxu0
        %v1366 = vpop.f32.mrf.mxu0
        %v1367 = vadd.f32 0.0, %v1366
        %v1368 = vpop.f32.mrf.mxu0
        %1369 = vmatprep.mubr.bf16.mxu0 0
        %1370 = vmatmul.mubr.bf16.gmra.mxu0 %v1315
        %v1371 = vpop.f32.mrf.mxu0
        %v1372 = vadd.f32 0.0, %v1371
        %v1373 = vpop.f32.mrf.mxu0
        %v1374 = vpop.f32.mrf.mxu0
        %v1375 = vadd.f32 0.0, %v1374
        %v1376 = vpop.f32.mrf.mxu0
        %1377 = vmatprep.mubr.bf16.mxu0 0
        %1378 = vmatmul.mubr.bf16.gmra.mxu0 %v1318
        %v1379 = vpop.f32.mrf.mxu0
        %v1380 = vadd.f32 0.0, %v1379
        %v1381 = vpop.f32.mrf.mxu0
        %v1382 = vpop.f32.mrf.mxu0
        %v1383 = vadd.f32 0.0, %v1382
        %v1384 = vpop.f32.mrf.mxu0
        %1385 = vmatprep.mubr.bf16.mxu0 0
        %1386 = vmatmul.mubr.bf16.gmra.mxu0 %v1321
        %v1387 = vpop.f32.mrf.mxu0
        %v1388 = vadd.f32 0.0, %v1387
        %v1389 = vpop.f32.mrf.mxu0
        %v1390 = vpop.f32.mrf.mxu0
        %v1391 = vadd.f32 0.0, %v1390
        %v1392 = vpop.f32.mrf.mxu0
        %1393 = vmatprep.mubr.bf16.mxu0 0
        %1394 = vmatmul.mubr.bf16.gmra.mxu0 %v1324
        %v1395 = vpop.f32.mrf.mxu0
        %v1396 = vadd.f32 0.0, %v1395
        %v1397 = vpop.f32.mrf.mxu0
        %v1398 = vpop.f32.mrf.mxu0
        %v1399 = vadd.f32 0.0, %v1398
        %v1400 = vpop.f32.mrf.mxu0
        %1401 = vdwg.mxu0
        %v1402 = vadd.f32 %v1216, %v1364
        %v1403 = vadd.f32 %v1217, %v1367
        %v1404 = vadd.f32 %v1218, %v1372
        %v1405 = vadd.f32 %v1219, %v1375
        %v1406 = vadd.f32 %v1220, %v1380
        %v1407 = vadd.f32 %v1221, %v1383
        %v1408 = vadd.f32 %v1222, %v1388
        %v1409 = vadd.f32 %v1223, %v1391
        %v1410 = vadd.f32 %v1224, %v1396
        %v1411 = vadd.f32 %v1225, %v1399
        %v1412 = vld [vmem:[%s456 + $0x4] sm:$0xe]
        %v1413 = vld [vmem:[%s456 + $0x8] sm:$0xf]
        %v1414 = vld [vmem:[%s456 + $0xc] sm:$0xf]
        %v1415 = vld [vmem:[%s456 + $0x10] sm:$0xf]
        %v1416 = vld [vmem:[%s456 + $0x14] sm:$0xf]
        %v1417 = vld [vmem:[%s456 + $0x18] sm:$0xf]
        %v1418 = vld [vmem:[%s456 + $0x1c] sm:$0xf]
        %v1419 = vld [vmem:[%s456 + $0x20] sm:$0xf]
        %v1420 = vld [vmem:[%s456 + $0x24] sm:$0xf]
        %v1421 = vld [vmem:[%s456 + $0x28] sm:$0xf]
        %v1422 = vld [vmem:[%s456 + $0x2c] sm:$0x1]
        %s1423 = scalar_lea.vmem %s490, 12
        %v1424 = vld [vmem:[%s1423] sm:$0x3]
        %v1436 = vunpack.c.l.b16 %v1412
        %v1437 = vunpack.c.l.b16 %v1413
        %v1438 = vunpack.c.l.b16 %v1414
        %v1439 = vunpack.c.l.b16 %v1415
        %v1440 = vunpack.c.l.b16 %v1416
        %v1441 = vunpack.c.l.b16 %v1417
        %v1442 = vunpack.c.l.b16 %v1418
        %v1443 = vunpack.c.l.b16 %v1419
        %v1444 = vunpack.c.l.b16 %v1420
        %v1445 = vunpack.c.l.b16 %v1421
        %v1446 = vunpack.c.l.b16 %v1422
        %v1447 = vpack.c.b16 %v1437, %v1436
        %v1448 = vpack.c.b16 %v1439, %v1438
        %v1449 = vpack.c.b16 %v1441, %v1440
        %v1450 = vpack.c.b16 %v1443, %v1442
        %v1451 = vpack.c.b16 %v1445, %v1444
        %v1452 = vpack.c.b16 %v1446, %v1446
        %vm1453 = vcmask 1046528
        %v1454 = vrot.slane %v1447, 1
        %v1455 = vrot.slane %v1448, 1
        %v1456 = vsel %vm1453, %v1454, %v1455
        %v1457 = vrot.slane %v1449, 1
        %v1458 = vsel %vm1453, %v1455, %v1457
        %v1459 = vrot.slane %v1450, 1
        %v1460 = vsel %vm1453, %v1457, %v1459
        %v1461 = vrot.slane %v1451, 1
        %v1462 = vsel %vm1453, %v1459, %v1461
        %v1463 = vrot.slane %v1452, 1
        %v1464 = vsel %vm1453, %v1461, %v1463
        %v1466 = vsel %vm552, %v1456, 0
        %v1469 = vsel %vm552, %v1458, 0
        %v1472 = vsel %vm552, %v1460, 0
        %v1475 = vsel %vm552, %v1462, 0
        %v1478 = vsel %vm552, %v1464, 0
        %v1481 = vsel %vm568, %v1424, 0
        %1483 = vmatprep.subr.bf16.mxu0 0
        %1484 = vmatpush1.bf16.msra.mxu0 0
        %1485 = vmatprep.subr.bf16.mxu0 0
        %1486 = vmatpush1.bf16.msra.mxu0 0
        %1487 = vmatprep.subr.bf16.mxu0 0
        %1488 = vmatpush1.bf16.msra.mxu0 0
        %1489 = vmatprep.subr.bf16.mxu0 0
        %1490 = vmatpush1.bf16.msra.mxu0 0
        %1491 = vmatprep.subr.bf16.mxu0 0
        %1492 = vmatpush1.bf16.msra.mxu0 0
        %1493 = vmatprep.subr.bf16.mxu0 0
        %1494 = vmatpush1.bf16.msra.mxu0 0
        %1495 = vmatprep.subr.bf16.mxu0 0
        %1496 = vmatpush1.bf16.msra.mxu0 0
        %1497 = vmatprep.subr.bf16.mxu0 0
        %1498 = vmatpush1.bf16.msra.mxu0 %v1481
        %1499 = vmatprep.subr.bf16.mxu0 0
        %1500 = vmatpush2.bf16.msra.mxu0 0
        %1501 = vmatprep.subr.bf16.mxu0 0
        %1502 = vmatpush2.bf16.msra.mxu0 0
        %1503 = vmatprep.subr.bf16.mxu0 0
        %1504 = vmatpush2.bf16.msra.mxu0 0
        %1505 = vmatprep.subr.bf16.mxu0 0
        %1506 = vmatpush2.bf16.msra.mxu0 0
        %1507 = vmatprep.subr.bf16.mxu0 0
        %1508 = vmatpush2.bf16.msra.mxu0 0
        %1509 = vmatprep.subr.bf16.mxu0 0
        %1510 = vmatpush2.bf16.msra.mxu0 0
        %1511 = vmatprep.subr.bf16.mxu0 0
        %1512 = vmatpush2.bf16.msra.mxu0 0
        %1513 = vmatprep.subr.bf16.mxu0 0
        %1514 = vmatpush2.bf16.msra.mxu0 0
        %1515 = vmatprep.mubr.bf16.mxu0 0
        %1516 = vmatmul.mubr.bf16.gmra.mxu0 %v1466
        %v1517 = vpop.f32.mrf.mxu0
        %v1518 = vadd.f32 0.0, %v1517
        %v1519 = vpop.f32.mrf.mxu0
        %v1520 = vpop.f32.mrf.mxu0
        %v1521 = vadd.f32 0.0, %v1520
        %v1522 = vpop.f32.mrf.mxu0
        %1523 = vmatprep.mubr.bf16.mxu0 0
        %1524 = vmatmul.mubr.bf16.gmra.mxu0 %v1469
        %v1525 = vpop.f32.mrf.mxu0
        %v1526 = vadd.f32 0.0, %v1525
        %v1527 = vpop.f32.mrf.mxu0
        %v1528 = vpop.f32.mrf.mxu0
        %v1529 = vadd.f32 0.0, %v1528
        %v1530 = vpop.f32.mrf.mxu0
        %1531 = vmatprep.mubr.bf16.mxu0 0
        %1532 = vmatmul.mubr.bf16.gmra.mxu0 %v1472
        %v1533 = vpop.f32.mrf.mxu0
        %v1534 = vadd.f32 0.0, %v1533
        %v1535 = vpop.f32.mrf.mxu0
        %v1536 = vpop.f32.mrf.mxu0
        %v1537 = vadd.f32 0.0, %v1536
        %v1538 = vpop.f32.mrf.mxu0
        %1539 = vmatprep.mubr.bf16.mxu0 0
        %1540 = vmatmul.mubr.bf16.gmra.mxu0 %v1475
        %v1541 = vpop.f32.mrf.mxu0
        %v1542 = vadd.f32 0.0, %v1541
        %v1543 = vpop.f32.mrf.mxu0
        %v1544 = vpop.f32.mrf.mxu0
        %v1545 = vadd.f32 0.0, %v1544
        %v1546 = vpop.f32.mrf.mxu0
        %1547 = vmatprep.mubr.bf16.mxu0 0
        %1548 = vmatmul.mubr.bf16.gmra.mxu0 %v1478
        %v1549 = vpop.f32.mrf.mxu0
        %v1550 = vadd.f32 0.0, %v1549
        %v1551 = vpop.f32.mrf.mxu0
        %v1552 = vpop.f32.mrf.mxu0
        %v1553 = vadd.f32 0.0, %v1552
        %v1554 = vpop.f32.mrf.mxu0
        %1555 = vdwg.mxu0
        %v1556 = vadd.f32 %v1402, %v1518
        %v1557 = vadd.f32 %v1403, %v1521
        %v1558 = vadd.f32 %v1404, %v1526
        %v1559 = vadd.f32 %v1405, %v1529
        %v1560 = vadd.f32 %v1406, %v1534
        %v1561 = vadd.f32 %v1407, %v1537
        %v1562 = vadd.f32 %v1408, %v1542
        %v1563 = vadd.f32 %v1409, %v1545
        %v1564 = vadd.f32 %v1410, %v1550
        %v1565 = vadd.f32 %v1411, %v1553
        %v1566 = vld [vmem:[%s514 + $0x4] sm:$0xe]
        %v1567 = vld [vmem:[%s514 + $0x8] sm:$0xf]
        %v1568 = vld [vmem:[%s514 + $0xc] sm:$0xf]
        %v1569 = vld [vmem:[%s514 + $0x10] sm:$0xf]
        %v1570 = vld [vmem:[%s514 + $0x14] sm:$0xf]
        %v1571 = vld [vmem:[%s514 + $0x18] sm:$0xf]
        %v1572 = vld [vmem:[%s514 + $0x1c] sm:$0xf]
        %v1573 = vld [vmem:[%s514 + $0x20] sm:$0xf]
        %v1574 = vld [vmem:[%s514 + $0x24] sm:$0xf]
        %v1575 = vld [vmem:[%s514 + $0x28] sm:$0xf]
        %v1576 = vld [vmem:[%s514 + $0x2c] sm:$0x1]
        %s1577 = scalar_lea.vmem %s490, 14
        %v1578 = vld [vmem:[%s1577] sm:$0x3]
        %v1590 = vunpack.c.l.b16 %v1566
        %v1591 = vunpack.c.l.b16 %v1567
        %v1592 = vunpack.c.l.b16 %v1568
        %v1593 = vunpack.c.l.b16 %v1569
        %v1594 = vunpack.c.l.b16 %v1570
        %v1595 = vunpack.c.l.b16 %v1571
        %v1596 = vunpack.c.l.b16 %v1572
        %v1597 = vunpack.c.l.b16 %v1573
        %v1598 = vunpack.c.l.b16 %v1574
        %v1599 = vunpack.c.l.b16 %v1575
        %v1600 = vunpack.c.l.b16 %v1576
        %v1601 = vpack.c.b16 %v1591, %v1590
        %v1602 = vpack.c.b16 %v1593, %v1592
        %v1603 = vpack.c.b16 %v1595, %v1594
        %v1604 = vpack.c.b16 %v1597, %v1596
        %v1605 = vpack.c.b16 %v1599, %v1598
        %v1606 = vpack.c.b16 %v1600, %v1600
        %v1607 = vrot.slane %v1601, 1
        %v1608 = vrot.slane %v1602, 1
        %v1609 = vsel %vm1453, %v1607, %v1608
        %v1610 = vrot.slane %v1603, 1
        %v1611 = vsel %vm1453, %v1608, %v1610
        %v1612 = vrot.slane %v1604, 1
        %v1613 = vsel %vm1453, %v1610, %v1612
        %v1614 = vrot.slane %v1605, 1
        %v1615 = vsel %vm1453, %v1612, %v1614
        %v1616 = vrot.slane %v1606, 1
        %v1617 = vsel %vm1453, %v1614, %v1616
        %v1619 = vsel %vm552, %v1609, 0
        %v1622 = vsel %vm552, %v1611, 0
        %v1625 = vsel %vm552, %v1613, 0
        %v1628 = vsel %vm552, %v1615, 0
        %v1631 = vsel %vm552, %v1617, 0
        %v1634 = vsel %vm568, %v1578, 0
        %1636 = vmatprep.subr.bf16.mxu0 0
        %1637 = vmatpush1.bf16.msra.mxu0 0
        %1638 = vmatprep.subr.bf16.mxu0 0
        %1639 = vmatpush1.bf16.msra.mxu0 0
        %1640 = vmatprep.subr.bf16.mxu0 0
        %1641 = vmatpush1.bf16.msra.mxu0 0
        %1642 = vmatprep.subr.bf16.mxu0 0
        %1643 = vmatpush1.bf16.msra.mxu0 0
        %1644 = vmatprep.subr.bf16.mxu0 0
        %1645 = vmatpush1.bf16.msra.mxu0 0
        %1646 = vmatprep.subr.bf16.mxu0 0
        %1647 = vmatpush1.bf16.msra.mxu0 0
        %1648 = vmatprep.subr.bf16.mxu0 0
        %1649 = vmatpush1.bf16.msra.mxu0 0
        %1650 = vmatprep.subr.bf16.mxu0 0
        %1651 = vmatpush1.bf16.msra.mxu0 %v1634
        %1652 = vmatprep.subr.bf16.mxu0 0
        %1653 = vmatpush2.bf16.msra.mxu0 0
        %1654 = vmatprep.subr.bf16.mxu0 0
        %1655 = vmatpush2.bf16.msra.mxu0 0
        %1656 = vmatprep.subr.bf16.mxu0 0
        %1657 = vmatpush2.bf16.msra.mxu0 0
        %1658 = vmatprep.subr.bf16.mxu0 0
        %1659 = vmatpush2.bf16.msra.mxu0 0
        %1660 = vmatprep.subr.bf16.mxu0 0
        %1661 = vmatpush2.bf16.msra.mxu0 0
        %1662 = vmatprep.subr.bf16.mxu0 0
        %1663 = vmatpush2.bf16.msra.mxu0 0
        %1664 = vmatprep.subr.bf16.mxu0 0
        %1665 = vmatpush2.bf16.msra.mxu0 0
        %1666 = vmatprep.subr.bf16.mxu0 0
        %1667 = vmatpush2.bf16.msra.mxu0 0
        %1668 = vmatprep.mubr.bf16.mxu0 0
        %1669 = vmatmul.mubr.bf16.gmra.mxu0 %v1619
        %v1670 = vpop.f32.mrf.mxu0
        %v1671 = vadd.f32 0.0, %v1670
        %v1672 = vpop.f32.mrf.mxu0
        %v1673 = vpop.f32.mrf.mxu0
        %v1674 = vadd.f32 0.0, %v1673
        %v1675 = vpop.f32.mrf.mxu0
        %1676 = vmatprep.mubr.bf16.mxu0 0
        %1677 = vmatmul.mubr.bf16.gmra.mxu0 %v1622
        %v1678 = vpop.f32.mrf.mxu0
        %v1679 = vadd.f32 0.0, %v1678
        %v1680 = vpop.f32.mrf.mxu0
        %v1681 = vpop.f32.mrf.mxu0
        %v1682 = vadd.f32 0.0, %v1681
        %v1683 = vpop.f32.mrf.mxu0
        %1684 = vmatprep.mubr.bf16.mxu0 0
        %1685 = vmatmul.mubr.bf16.gmra.mxu0 %v1625
        %v1686 = vpop.f32.mrf.mxu0
        %v1687 = vadd.f32 0.0, %v1686
        %v1688 = vpop.f32.mrf.mxu0
        %v1689 = vpop.f32.mrf.mxu0
        %v1690 = vadd.f32 0.0, %v1689
        %v1691 = vpop.f32.mrf.mxu0
        %1692 = vmatprep.mubr.bf16.mxu0 0
        %1693 = vmatmul.mubr.bf16.gmra.mxu0 %v1628
        %v1694 = vpop.f32.mrf.mxu0
        %v1695 = vadd.f32 0.0, %v1694
        %v1696 = vpop.f32.mrf.mxu0
        %v1697 = vpop.f32.mrf.mxu0
        %v1698 = vadd.f32 0.0, %v1697
        %v1699 = vpop.f32.mrf.mxu0
        %1700 = vmatprep.mubr.bf16.mxu0 0
        %1701 = vmatmul.mubr.bf16.gmra.mxu0 %v1631
        %v1702 = vpop.f32.mrf.mxu0
        %v1703 = vadd.f32 0.0, %v1702
        %v1704 = vpop.f32.mrf.mxu0
        %v1705 = vpop.f32.mrf.mxu0
        %v1706 = vadd.f32 0.0, %v1705
        %v1707 = vpop.f32.mrf.mxu0
        %1708 = vdwg.mxu0
        %v1709 = vadd.f32 %v1556, %v1671
        %v1710 = vadd.f32 %v1557, %v1674
        %v1711 = vadd.f32 %v1558, %v1679
        %v1712 = vadd.f32 %v1559, %v1682
        %v1713 = vadd.f32 %v1560, %v1687
        %v1714 = vadd.f32 %v1561, %v1690
        %v1715 = vadd.f32 %v1562, %v1695
        %v1716 = vadd.f32 %v1563, %v1698
        %v1717 = vadd.f32 %v1564, %v1703
        %v1718 = vadd.f32 %v1565, %v1706
        %v1719 = vld [vmem:[%s456 + $0x2c] sm:$0x3]
        %s1720 = scalar_lea.vmem %s490, 16
        %v1721 = vld [vmem:[%s1720] sm:$0x3]
        %v1723 = vunpack.c.l.b16 %v1719
        %v1724 = vpack.c.b16 %v1723, %v1723
        %vm1725 = vsmask.f32 6400
        %v1727 = vshrl.u32 %v1447, 16
        %v1729 = vrot.slane %v1727, 1
        %v1730 = vshll.u32 %v1447, 16
        %v1732 = vrot.slane %v1730, 2
        %v1733 = vor.u32 %v1729, %v1732
        %v1735 = vshrl.u32 %v1448, 16
        %v1737 = vrot.slane %v1735, 1
        %v1738 = vshll.u32 %v1448, 16
        %v1740 = vrot.slane %v1738, 2
        %v1741 = vor.u32 %v1737, %v1740
        %v1742 = vsel %vm1725, %v1733, %v1741
        %v1744 = vshrl.u32 %v1449, 16
        %v1746 = vrot.slane %v1744, 1
        %v1747 = vshll.u32 %v1449, 16
        %v1749 = vrot.slane %v1747, 2
        %v1750 = vor.u32 %v1746, %v1749
        %v1751 = vsel %vm1725, %v1741, %v1750
        %v1753 = vshrl.u32 %v1450, 16
        %v1755 = vrot.slane %v1753, 1
        %v1756 = vshll.u32 %v1450, 16
        %v1758 = vrot.slane %v1756, 2
        %v1759 = vor.u32 %v1755, %v1758
        %v1760 = vsel %vm1725, %v1750, %v1759
        %v1762 = vshrl.u32 %v1451, 16
        %v1764 = vrot.slane %v1762, 1
        %v1765 = vshll.u32 %v1451, 16
        %v1767 = vrot.slane %v1765, 2
        %v1768 = vor.u32 %v1764, %v1767
        %v1769 = vsel %vm1725, %v1759, %v1768
        %v1771 = vshrl.u32 %v1724, 16
        %v1773 = vrot.slane %v1771, 1
        %v1774 = vshll.u32 %v1724, 16
        %v1776 = vrot.slane %v1774, 2
        %v1777 = vor.u32 %v1773, %v1776
        %v1778 = vsel %vm1725, %v1768, %v1777
        %v1780 = vsel %vm552, %v1742, 0
        %v1783 = vsel %vm552, %v1751, 0
        %v1786 = vsel %vm552, %v1760, 0
        %v1789 = vsel %vm552, %v1769, 0
        %v1792 = vsel %vm552, %v1778, 0
        %v1795 = vsel %vm568, %v1721, 0
        %1797 = vmatprep.subr.bf16.mxu0 0
        %1798 = vmatpush1.bf16.msra.mxu0 0
        %1799 = vmatprep.subr.bf16.mxu0 0
        %1800 = vmatpush1.bf16.msra.mxu0 0
        %1801 = vmatprep.subr.bf16.mxu0 0
        %1802 = vmatpush1.bf16.msra.mxu0 0
        %1803 = vmatprep.subr.bf16.mxu0 0
        %1804 = vmatpush1.bf16.msra.mxu0 0
        %1805 = vmatprep.subr.bf16.mxu0 0
        %1806 = vmatpush1.bf16.msra.mxu0 0
        %1807 = vmatprep.subr.bf16.mxu0 0
        %1808 = vmatpush1.bf16.msra.mxu0 0
        %1809 = vmatprep.subr.bf16.mxu0 0
        %1810 = vmatpush1.bf16.msra.mxu0 0
        %1811 = vmatprep.subr.bf16.mxu0 0
        %1812 = vmatpush1.bf16.msra.mxu0 %v1795
        %1813 = vmatprep.subr.bf16.mxu0 0
        %1814 = vmatpush2.bf16.msra.mxu0 0
        %1815 = vmatprep.subr.bf16.mxu0 0
        %1816 = vmatpush2.bf16.msra.mxu0 0
        %1817 = vmatprep.subr.bf16.mxu0 0
        %1818 = vmatpush2.bf16.msra.mxu0 0
        %1819 = vmatprep.subr.bf16.mxu0 0
        %1820 = vmatpush2.bf16.msra.mxu0 0
        %1821 = vmatprep.subr.bf16.mxu0 0
        %1822 = vmatpush2.bf16.msra.mxu0 0
        %1823 = vmatprep.subr.bf16.mxu0 0
        %1824 = vmatpush2.bf16.msra.mxu0 0
        %1825 = vmatprep.subr.bf16.mxu0 0
        %1826 = vmatpush2.bf16.msra.mxu0 0
        %1827 = vmatprep.subr.bf16.mxu0 0
        %1828 = vmatpush2.bf16.msra.mxu0 0
        %1829 = vmatprep.mubr.bf16.mxu0 0
        %1830 = vmatmul.mubr.bf16.gmra.mxu0 %v1780
        %v1831 = vpop.f32.mrf.mxu0
        %v1832 = vadd.f32 0.0, %v1831
        %v1833 = vpop.f32.mrf.mxu0
        %v1834 = vpop.f32.mrf.mxu0
        %v1835 = vadd.f32 0.0, %v1834
        %v1836 = vpop.f32.mrf.mxu0
        %1837 = vmatprep.mubr.bf16.mxu0 0
        %1838 = vmatmul.mubr.bf16.gmra.mxu0 %v1783
        %v1839 = vpop.f32.mrf.mxu0
        %v1840 = vadd.f32 0.0, %v1839
        %v1841 = vpop.f32.mrf.mxu0
        %v1842 = vpop.f32.mrf.mxu0
        %v1843 = vadd.f32 0.0, %v1842
        %v1844 = vpop.f32.mrf.mxu0
        %1845 = vmatprep.mubr.bf16.mxu0 0
        %1846 = vmatmul.mubr.bf16.gmra.mxu0 %v1786
        %v1847 = vpop.f32.mrf.mxu0
        %v1848 = vadd.f32 0.0, %v1847
        %v1849 = vpop.f32.mrf.mxu0
        %v1850 = vpop.f32.mrf.mxu0
        %v1851 = vadd.f32 0.0, %v1850
        %v1852 = vpop.f32.mrf.mxu0
        %1853 = vmatprep.mubr.bf16.mxu0 0
        %1854 = vmatmul.mubr.bf16.gmra.mxu0 %v1789
        %v1855 = vpop.f32.mrf.mxu0
        %v1856 = vadd.f32 0.0, %v1855
        %v1857 = vpop.f32.mrf.mxu0
        %v1858 = vpop.f32.mrf.mxu0
        %v1859 = vadd.f32 0.0, %v1858
        %v1860 = vpop.f32.mrf.mxu0
        %1861 = vmatprep.mubr.bf16.mxu0 0
        %1862 = vmatmul.mubr.bf16.gmra.mxu0 %v1792
        %v1863 = vpop.f32.mrf.mxu0
        %v1864 = vadd.f32 0.0, %v1863
        %v1865 = vpop.f32.mrf.mxu0
        %v1866 = vpop.f32.mrf.mxu0
        %v1867 = vadd.f32 0.0, %v1866
        %v1868 = vpop.f32.mrf.mxu0
        %1869 = vdwg.mxu0
        %v1870 = vadd.f32 %v1709, %v1832
        %v1871 = vadd.f32 %v1710, %v1835
        %v1872 = vadd.f32 %v1711, %v1840
        %v1873 = vadd.f32 %v1712, %v1843
        %v1874 = vadd.f32 %v1713, %v1848
        %v1875 = vadd.f32 %v1714, %v1851
        %v1876 = vadd.f32 %v1715, %v1856
        %v1877 = vadd.f32 %v1716, %v1859
        %v1878 = vadd.f32 %v1717, %v1864
        %v1879 = vadd.f32 %v1718, %v1867
        %v1880 = vld [vmem:[%s493] sm:$0x1]
        %v1882 = vlaneseq
        %v1883 = vshrl.u32 %v1882, 7
        %v1884 = vsub.s32 0, %v1883
        %v1885 = vrot.slane %v1880, %v1884
        %v1887 = vadd.f32 %v1870, %v1885
        %v1888 = vadd.f32 %v1871, %v1885
        %v1889 = vadd.f32 %v1872, %v1885
        %v1890 = vadd.f32 %v1873, %v1885
        %v1891 = vadd.f32 %v1874, %v1885
        %v1892 = vadd.f32 %v1875, %v1885
        %v1893 = vadd.f32 %v1876, %v1885
        %v1894 = vadd.f32 %v1877, %v1885
        %v1895 = vadd.f32 %v1878, %v1885
        %v1896 = vadd.f32 %v1879, %v1885
        %v1897 = vmax.f32 %v1887, 0.0
        %v1898 = vmax.f32 %v1888, 0.0
        %v1899 = vmax.f32 %v1889, 0.0
        %v1900 = vmax.f32 %v1890, 0.0
        %v1901 = vmax.f32 %v1891, 0.0
        %v1902 = vmax.f32 %v1892, 0.0
        %v1903 = vmax.f32 %v1893, 0.0
        %v1904 = vmax.f32 %v1894, 0.0
        %v1905 = vmax.f32 %v1895, 0.0
        %v1906 = vmax.f32 %v1896, 0.0
        %v1907 = vlaneseq
        %v1908 = vshrl.u32 %v1907, 7
        %v1909 = vadd.s32 %v1908, 8
        %v1910 = vadd.s32 %v1908, 16
        %v1911 = vadd.s32 %v1908, 24
        %v1912 = vadd.s32 %v1908, 32
        %v1913 = vadd.s32 %v1908, 40
        %v1914 = vadd.s32 %v1908, 48
        %v1915 = vadd.s32 %v1908, 56
        %v1916 = vadd.s32 %v1908, 64
        %v1917 = vadd.s32 %v1908, 72
        %vm1918 = vcmp.lt.s32.totalorder %v1908, 0
        %v1919 = vsub.s32 0, %v1908
        %v1920 = vsel %vm1918, %v1919, %v1908
        %v1921 = vmul.u32.u64.compose %v1920, 3435973837
        %v1922 = vextract.low.u32 %v1921
        %v1923 = vextract.high.u32 %v1921
        %v1924 = vshrl.u32 %v1923, 3
        %v1925 = vmul.u32 %v1924, 10
        %v1926 = vsub.s32 %v1920, %v1925
        %v1927 = vsub.s32 0, %v1926
        %v1928 = vsel %vm1918, %v1927, %v1926
        %vm1929 = vcmp.lt.s32.totalorder %v1909, 0
        %v1930 = vsub.s32 0, %v1909
        %v1931 = vsel %vm1929, %v1930, %v1909
        %v1932 = vmul.u32.u64.compose %v1931, 3435973837
        %v1933 = vextract.low.u32 %v1932
        %v1934 = vextract.high.u32 %v1932
        %v1935 = vshrl.u32 %v1934, 3
        %v1936 = vmul.u32 %v1935, 10
        %v1937 = vsub.s32 %v1931, %v1936
        %v1938 = vsub.s32 0, %v1937
        %v1939 = vsel %vm1929, %v1938, %v1937
        %vm1940 = vcmp.lt.s32.totalorder %v1910, 0
        %v1941 = vsub.s32 0, %v1910
        %v1942 = vsel %vm1940, %v1941, %v1910
        %v1943 = vmul.u32.u64.compose %v1942, 3435973837
        %v1944 = vextract.low.u32 %v1943
        %v1945 = vextract.high.u32 %v1943
        %v1946 = vshrl.u32 %v1945, 3
        %v1947 = vmul.u32 %v1946, 10
        %v1948 = vsub.s32 %v1942, %v1947
        %v1949 = vsub.s32 0, %v1948
        %v1950 = vsel %vm1940, %v1949, %v1948
        %vm1951 = vcmp.lt.s32.totalorder %v1911, 0
        %v1952 = vsub.s32 0, %v1911
        %v1953 = vsel %vm1951, %v1952, %v1911
        %v1954 = vmul.u32.u64.compose %v1953, 3435973837
        %v1955 = vextract.low.u32 %v1954
        %v1956 = vextract.high.u32 %v1954
        %v1957 = vshrl.u32 %v1956, 3
        %v1958 = vmul.u32 %v1957, 10
        %v1959 = vsub.s32 %v1953, %v1958
        %v1960 = vsub.s32 0, %v1959
        %v1961 = vsel %vm1951, %v1960, %v1959
        %vm1962 = vcmp.lt.s32.totalorder %v1912, 0
        %v1963 = vsub.s32 0, %v1912
        %v1964 = vsel %vm1962, %v1963, %v1912
        %v1965 = vmul.u32.u64.compose %v1964, 3435973837
        %v1966 = vextract.low.u32 %v1965
        %v1967 = vextract.high.u32 %v1965
        %v1968 = vshrl.u32 %v1967, 3
        %v1969 = vmul.u32 %v1968, 10
        %v1970 = vsub.s32 %v1964, %v1969
        %v1971 = vsub.s32 0, %v1970
        %v1972 = vsel %vm1962, %v1971, %v1970
        %vm1973 = vcmp.lt.s32.totalorder %v1913, 0
        %v1974 = vsub.s32 0, %v1913
        %v1975 = vsel %vm1973, %v1974, %v1913
        %v1976 = vmul.u32.u64.compose %v1975, 3435973837
        %v1977 = vextract.low.u32 %v1976
        %v1978 = vextract.high.u32 %v1976
        %v1979 = vshrl.u32 %v1978, 3
        %v1980 = vmul.u32 %v1979, 10
        %v1981 = vsub.s32 %v1975, %v1980
        %v1982 = vsub.s32 0, %v1981
        %v1983 = vsel %vm1973, %v1982, %v1981
        %vm1984 = vcmp.lt.s32.totalorder %v1914, 0
        %v1985 = vsub.s32 0, %v1914
        %v1986 = vsel %vm1984, %v1985, %v1914
        %v1987 = vmul.u32.u64.compose %v1986, 3435973837
        %v1988 = vextract.low.u32 %v1987
        %v1989 = vextract.high.u32 %v1987
        %v1990 = vshrl.u32 %v1989, 3
        %v1991 = vmul.u32 %v1990, 10
        %v1992 = vsub.s32 %v1986, %v1991
        %v1993 = vsub.s32 0, %v1992
        %v1994 = vsel %vm1984, %v1993, %v1992
        %vm1995 = vcmp.lt.s32.totalorder %v1915, 0
        %v1996 = vsub.s32 0, %v1915
        %v1997 = vsel %vm1995, %v1996, %v1915
        %v1998 = vmul.u32.u64.compose %v1997, 3435973837
        %v1999 = vextract.low.u32 %v1998
        %v2000 = vextract.high.u32 %v1998
        %v2001 = vshrl.u32 %v2000, 3
        %v2002 = vmul.u32 %v2001, 10
        %v2003 = vsub.s32 %v1997, %v2002
        %v2004 = vsub.s32 0, %v2003
        %v2005 = vsel %vm1995, %v2004, %v2003
        %vm2006 = vcmp.lt.s32.totalorder %v1916, 0
        %v2007 = vsub.s32 0, %v1916
        %v2008 = vsel %vm2006, %v2007, %v1916
        %v2009 = vmul.u32.u64.compose %v2008, 3435973837
        %v2010 = vextract.low.u32 %v2009
        %v2011 = vextract.high.u32 %v2009
        %v2012 = vshrl.u32 %v2011, 3
        %v2013 = vmul.u32 %v2012, 10
        %v2014 = vsub.s32 %v2008, %v2013
        %v2015 = vsub.s32 0, %v2014
        %v2016 = vsel %vm2006, %v2015, %v2014
        %vm2017 = vcmp.lt.s32.totalorder %v1917, 0
        %v2018 = vsub.s32 0, %v1917
        %v2019 = vsel %vm2017, %v2018, %v1917
        %v2020 = vmul.u32.u64.compose %v2019, 3435973837
        %v2021 = vextract.low.u32 %v2020
        %v2022 = vextract.high.u32 %v2020
        %v2023 = vshrl.u32 %v2022, 3
        %v2024 = vmul.u32 %v2023, 10
        %v2025 = vsub.s32 %v2019, %v2024
        %v2026 = vsub.s32 0, %v2025
        %v2027 = vsel %vm2017, %v2026, %v2025
        %vm2028 = vcmp.ne.s32.totalorder %v1928, 0
        %vm2029 = vcmp.ne.s32.totalorder %v1939, 0
        %vm2030 = vcmp.ne.s32.totalorder %v1950, 0
        %vm2031 = vcmp.ne.s32.totalorder %v1961, 0
        %vm2032 = vcmp.ne.s32.totalorder %v1972, 0
        %vm2033 = vcmp.ne.s32.totalorder %v1983, 0
        %vm2034 = vcmp.ne.s32.totalorder %v1994, 0
        %vm2035 = vcmp.ne.s32.totalorder %v2005, 0
        %vm2036 = vcmp.ne.s32.totalorder %v2016, 0
        %vm2037 = vcmp.ne.s32.totalorder %v2027, 0
        %vm2038 = vcmp.lt.s32.totalorder %v1928, 0
        %vm2039 = vcmp.lt.s32.totalorder %v1939, 0
        %vm2040 = vcmp.lt.s32.totalorder %v1950, 0
        %vm2041 = vcmp.lt.s32.totalorder %v1961, 0
        %vm2042 = vcmp.lt.s32.totalorder %v1972, 0
        %vm2043 = vcmp.lt.s32.totalorder %v1983, 0
        %vm2044 = vcmp.lt.s32.totalorder %v1994, 0
        %vm2045 = vcmp.lt.s32.totalorder %v2005, 0
        %vm2046 = vcmp.lt.s32.totalorder %v2016, 0
        %vm2047 = vcmp.lt.s32.totalorder %v2027, 0
        %vm2048 = vmand %vm2038, %vm2028
        %vm2049 = vmand %vm2039, %vm2029
        %vm2050 = vmand %vm2040, %vm2030
        %vm2051 = vmand %vm2041, %vm2031
        %vm2052 = vmand %vm2042, %vm2032
        %vm2053 = vmand %vm2043, %vm2033
        %vm2054 = vmand %vm2044, %vm2034
        %vm2055 = vmand %vm2045, %vm2035
        %vm2056 = vmand %vm2046, %vm2036
        %vm2057 = vmand %vm2047, %vm2037
        %v2058 = vadd.s32 %v1928, 10
        %v2059 = vadd.s32 %v1939, 10
        %v2060 = vadd.s32 %v1950, 10
        %v2061 = vadd.s32 %v1961, 10
        %v2062 = vadd.s32 %v1972, 10
        %v2063 = vadd.s32 %v1983, 10
        %v2064 = vadd.s32 %v1994, 10
        %v2065 = vadd.s32 %v2005, 10
        %v2066 = vadd.s32 %v2016, 10
        %v2067 = vadd.s32 %v2027, 10
        %v2068 = vsel %vm2048, %v2058, %v1928
        %v2069 = vsel %vm2049, %v2059, %v1939
        %v2070 = vsel %vm2050, %v2060, %v1950
        %v2071 = vsel %vm2051, %v2061, %v1961
        %v2072 = vsel %vm2052, %v2062, %v1972
        %v2073 = vsel %vm2053, %v2063, %v1983
        %v2074 = vsel %vm2054, %v2064, %v1994
        %v2075 = vsel %vm2055, %v2065, %v2005
        %v2076 = vsel %vm2056, %v2066, %v2016
        %v2077 = vsel %vm2057, %v2067, %v2027
        %vm2078 = vcmp.lt.s32.totalorder %v2068, 8
        %vm2079 = vcmp.lt.s32.totalorder %v2069, 8
        %vm2080 = vcmp.lt.s32.totalorder %v2070, 8
        %vm2081 = vcmp.lt.s32.totalorder %v2071, 8
        %vm2082 = vcmp.lt.s32.totalorder %v2072, 8
        %vm2083 = vcmp.lt.s32.totalorder %v2073, 8
        %vm2084 = vcmp.lt.s32.totalorder %v2074, 8
        %vm2085 = vcmp.lt.s32.totalorder %v2075, 8
        %vm2086 = vcmp.lt.s32.totalorder %v2076, 8
        %vm2087 = vcmp.lt.s32.totalorder %v2077, 8
        %v2088 = vsel %vm2078, 1, 0
        %v2089 = vsel %vm2079, 1, 0
        %v2090 = vsel %vm2080, 1, 0
        %v2091 = vsel %vm2081, 1, 0
        %v2092 = vsel %vm2082, 1, 0
        %v2093 = vsel %vm2083, 1, 0
        %v2094 = vsel %vm2084, 1, 0
        %v2095 = vsel %vm2085, 1, 0
        %v2096 = vsel %vm2086, 1, 0
        %v2097 = vsel %vm2087, 1, 0
        %vm2098 = vcmp.eq.s32.totalorder %v2088, 1
        %vm2099 = vcmp.eq.s32.totalorder %v2089, 1
        %vm2100 = vcmp.eq.s32.totalorder %v2090, 1
        %vm2101 = vcmp.eq.s32.totalorder %v2091, 1
        %vm2102 = vcmp.eq.s32.totalorder %v2092, 1
        %vm2103 = vcmp.eq.s32.totalorder %v2093, 1
        %vm2104 = vcmp.eq.s32.totalorder %v2094, 1
        %vm2105 = vcmp.eq.s32.totalorder %v2095, 1
        %vm2106 = vcmp.eq.s32.totalorder %v2096, 1
        %vm2107 = vcmp.eq.s32.totalorder %v2097, 1
        %v2108 = vsel %vm2098, %v1897, 0.0
        %v2109 = vsel %vm2099, %v1898, 0.0
        %v2110 = vsel %vm2100, %v1899, 0.0
        %v2111 = vsel %vm2101, %v1900, 0.0
        %v2112 = vsel %vm2102, %v1901, 0.0
        %v2113 = vsel %vm2103, %v1902, 0.0
        %v2114 = vsel %vm2104, %v1903, 0.0
        %v2115 = vsel %vm2105, %v1904, 0.0
        %v2116 = vsel %vm2106, %v1905, 0.0
        %v2117 = vsel %vm2107, %v1906, 0.0
        %v2118 = vpack.c.bf16 %v2109, %v2108
        %v2119 = vpack.c.bf16 %v2111, %v2110
        %v2120 = vpack.c.bf16 %v2113, %v2112
        %v2121 = vpack.c.bf16 %v2115, %v2114
        %v2122 = vpack.c.bf16 %v2117, %v2116
        %2123 = vst [vmem:[%s501] sm:$0xf] 0
        %2124 = vst [vmem:[%s501 + $0x4] sm:$0xf] 0
        %v2130 = vunpack.c.l.b16 %v2118
        %v2131 = vunpack.c.h.b16 %v2118
        %v2132 = vunpack.c.l.b16 %v2119
        %v2133 = vunpack.c.h.b16 %v2119
        %v2134 = vunpack.c.l.b16 %v2120
        %v2135 = vunpack.c.h.b16 %v2120
        %v2136 = vunpack.c.l.b16 %v2121
        %v2137 = vunpack.c.h.b16 %v2121
        %v2138 = vunpack.c.l.b16 %v2122
        %v2139 = vunpack.c.h.b16 %v2122
        %v2140 = vpack.c.b16 %v2130, %v2130
        %v2141 = vpack.c.b16 %v2131, %v2131
        %v2142 = vpack.c.b16 %v2132, %v2132
        %v2143 = vpack.c.b16 %v2133, %v2133
        %v2144 = vpack.c.b16 %v2134, %v2134
        %v2145 = vpack.c.b16 %v2135, %v2135
        %v2146 = vpack.c.b16 %v2136, %v2136
        %v2147 = vpack.c.b16 %v2137, %v2137
        %v2148 = vpack.c.b16 %v2138, %v2138
        %v2149 = vpack.c.b16 %v2139, %v2139
        %2160 = vst [vmem:[%s501 + $0x8] sm:$0xf] %v2140
        %2161 = vst [vmem:[%s501 + $0xc] sm:$0xf] %v2141
        %2162 = vst [vmem:[%s501 + $0x10] sm:$0xf] %v2142
        %2163 = vst [vmem:[%s501 + $0x14] sm:$0xf] %v2143
        %2164 = vst [vmem:[%s501 + $0x18] sm:$0xf] %v2144
        %2165 = vst [vmem:[%s501 + $0x1c] sm:$0xf] %v2145
        %2166 = vst [vmem:[%s501 + $0x20] sm:$0xf] %v2146
        %2167 = vst [vmem:[%s501 + $0x24] sm:$0xf] %v2147
        %2168 = vst [vmem:[%s501 + $0x28] sm:$0xf] %v2148
        %2169 = vst [vmem:[%s501 + $0x2c] sm:$0xf] %v2149
        %2170 = vst [vmem:[%s501 + $0x30] sm:$0xf] 0
        %2171 = vst [vmem:[%s501 + $0x34] sm:$0xf] 0
        %p2172 = scmp.lt.s32.totalorder %s19, 1
        %s2173 = scalar_select %p2172, %s19, 1
        %p2174 = scmp.lt.s32.totalorder %s18, 0
        %s2175 = scalar_select %p2174, %s18, 0
        %s2176 = smul.addr %s2173, 14
        %s2177 = sadd.s32 %s2175, %s2176
        %s2178 = smul.addr %s2177, 4
        %s2179 = scalar_lea.vmem %s3, %s2178
        // Predicated region
        $region74: #{block_forward.2} parent=68 // pred_check
          %p2180 = pneg %p124
        $region75: #{block_forward.2} parent=68 // pred_check_branch
          %2182 = sbr.rel (%p2180) target = $region77
        $region76: #{block_forward.2} parent=68 // pred_region
          _
        $region77: #{block_forward.2} parent=68 // pred_fallthru
          _
      $region69: #{block_forward.2} parent=5 // pred_fallthru
        _
      %p2183 = scmp.le.s32.totalorder 2, %s9
      // Predicated region
      $region78: #{block_forward.2} parent=5 // pred_check
        %p2184 = pneg %p2183
      $region79: #{block_forward.2} parent=5 // pred_check_branch
        %2186 = sbr.rel (%p2184) target = $region81
      $region80: #{block_forward.2} parent=5 // pred_region
        %s2187 = ssub.s32 %s9, 2
        // Predicated region
        $region82: #{block_forward.2} parent=80 // pred_check
          %p2188 = pneg %p130
        $region83: #{block_forward.2} parent=80 // pred_check_branch
          %2190 = sbr.rel (%p2188) target = $region85
        $region84: #{block_forward.2} parent=80 // pred_region
          %p2191 = scmp.lt.s32.totalorder %s21, 1
          %s2192 = scalar_select %p2191, %s21, 1
          %p2193 = scmp.lt.s32.totalorder %s20, 0
          %s2194 = scalar_select %p2193, %s20, 0
          %s2195 = smul.addr %s2192, 14
          %s2196 = sadd.s32 %s2194, %s2195
          %s2197 = smul.addr %s2196, 4
          %s2198 = scalar_lea.vmem %s3, %s2197
        $region85: #{block_forward.2} parent=80 // pred_fallthru
          _
      $region81: #{block_forward.2} parent=5 // pred_fallthru
        _
    $region6: #{block_forward.2} parent=1 // loop_footer
      %s13 = sadd.s32 1, %s9
    $region7: #{block_forward.2} parent=1 // loop_footer_branch
      %8 = sbr.rel target = $region3
    $region8: #{block_forward.2} parent=1 // loop_exit
      _

// kernel: block_forward.3
$region0: #{block_forward.3}
  #allocation0 [shape = 'u32[]', space=smem, size = 0x4, offset = 0x4, fixed_abs, tag = 'smem constant byte address 0x4 - core index']
  #allocation1 [shape = 'u32[144,128]{1,0:T(1,128)}', space=vmem, size = 0x12000, scoped, tag = 'internal scratch']
  %s0 = inlined_call_operand.vmem [shape: bf16[1,2,112,128], index: 0, kind: input, shape index: {}]
  %s1 = inlined_call_operand.vmem [shape: bf16[3,384,128], index: 1, kind: input, shape index: {}]
  %s2 = inlined_call_operand.vmem [shape: f32[1,128], index: 2, kind: input, shape index: {}]
  %s3 = inlined_call_operand.vmem [shape: bf16[2,80,4], index: 3, kind: input, shape index: {}]
  %s4 = inlined_call_operand.vmem [shape: bf16[4,128], index: 4, kind: input, shape index: {}]
  %s5 = inlined_call_operand.vmem [shape: f32[1,128], index: 5, kind: input, shape index: {}]
  %s6 = inlined_call_operand.vmem [shape: bf16[2,80,128], index: 6, kind: output, shape index: {}]
  %s7 = sld [smem:[#allocation0]]
  $region57: #{block_forward.3} parent=0
    _
  %s9 = ssub.s32 1, %s7
  %s10 = scalar_select 0, %s9, %s7
  loop: start=0, step=1, limit=4
  $region2: #{block_forward.3} parent=0 // loop_pre_header
    _
  $region3: #{block_forward.3} parent=0 // loop_header
    %s12 = sphi 0, %s16
    %p13 = scmp.ge.s32.totalorder %s12, 4
    %s19 = sphi 0, %s31
    %s20 = sphi 0, %s27
    %s21 = sphi 0, %s19
    %s22 = sphi 0, %s20
    %s23 = sphi 0, %s21
    %s24 = sphi 0, %s22
    %s34 = sphi 0, %s36
    %s37 = sphi 0, %s34
    %s38 = sphi 0, %s37
    %s54 = sphi 0, %s38
    %s60 = sphi 0, %s62
    %s63 = sphi 0, %s60
    %s64 = sphi 0, %s63
    %s80 = sphi 0, %s64
    %s86 = sphi 0, %s88
    %s89 = sphi 0, %s86
    %s90 = sphi 0, %s89
    %s106 = sphi 0, %s90
    %s112 = sphi 0, %s114
    %s115 = sphi 0, %s112
    %s116 = sphi 0, %s115
    %s132 = sphi 0, %s116
    %s138 = sphi 0, %s140
    %s141 = sphi 0, %s138
    %s142 = sphi 0, %s141
    %s158 = sphi 0, %s142
    %s164 = sphi 0, %s166
    %s167 = sphi 0, %s164
    %s168 = sphi 0, %s167
    %s184 = sphi 0, %s168
    %s192 = sphi 0, %s194
    %s195 = sphi 0, %s192
    %s196 = sphi 0, %s195
    %s212 = sphi 0, %s196
  $region4: #{block_forward.3} parent=0 // loop_header_branch
    %15 = sbr.rel (%p13) target = $region8
  $region5: #{block_forward.3} parent=0 // loop_body
    %s17 = ssub.s32 %s12, 1
    %s18 = ssub.s32 %s12, 2
    %s25 = sadd.s32 1, %s20
    %p26 = scmp.ge.s32.totalorder %s25, 2
    %s27 = scalar_select %p26, 0, %s25
    %s28 = sadd.s32 1, %s19
    %s29 = scalar_select %p26, %s28, %s19
    %p30 = scmp.ge.s32.totalorder %s29, 1
    %s31 = scalar_select %p30, 0, %s29
    %s32 = ssub.s32 %s20, %s27
    %p33 = scmp.eq.s32.totalorder %s32, 0
    %s35 = sadd.s32 %s34, 1
    %s36 = scalar_select %p33, %s34, %s35
    %p39 = pneg %p33
    %p40 = scmp.eq.s32.totalorder %s12, 1
    %p41 = por %p39, %p40
    %p42 = scmp.ne.s32.totalorder %s34, %s37
    %p43 = scmp.eq.s32.totalorder %s12, 0
    %p44 = por %p42, %p43
    %p45 = scmp.ne.s32.totalorder %s34, %s37
    %p46 = scmp.eq.s32.totalorder %s17, 1
    %p47 = por %p45, %p46
    %p48 = scmp.ne.s32.totalorder %s37, %s38
    %p49 = scmp.eq.s32.totalorder %s17, 0
    %p50 = por %p48, %p49
    %p51 = scmp.ne.s32.totalorder %s37, %s38
    %p52 = scmp.eq.s32.totalorder %s18, 1
    %p53 = por %p51, %p52
    %p55 = scmp.ne.s32.totalorder %s38, %s54
    %p56 = scmp.eq.s32.totalorder %s18, 0
    %p57 = por %p55, %p56
    %s58 = ssub.s32 %s19, %s31
    %p59 = scmp.eq.s32.totalorder %s58, 0
    %s61 = sadd.s32 %s60, 1
    %s62 = scalar_select %p59, %s60, %s61
    %p65 = pneg %p59
    %p66 = scmp.eq.s32.totalorder %s12, 1
    %p67 = por %p65, %p66
    %p68 = scmp.ne.s32.totalorder %s60, %s63
    %p69 = scmp.eq.s32.totalorder %s12, 0
    %p70 = por %p68, %p69
    %p71 = scmp.ne.s32.totalorder %s60, %s63
    %p72 = scmp.eq.s32.totalorder %s17, 1
    %p73 = por %p71, %p72
    %p74 = scmp.ne.s32.totalorder %s63, %s64
    %p75 = scmp.eq.s32.totalorder %s17, 0
    %p76 = por %p74, %p75
    %p77 = scmp.ne.s32.totalorder %s63, %s64
    %p78 = scmp.eq.s32.totalorder %s18, 1
    %p79 = por %p77, %p78
    %p81 = scmp.ne.s32.totalorder %s64, %s80
    %p82 = scmp.eq.s32.totalorder %s18, 0
    %p83 = por %p81, %p82
    %s84 = ssub.s32 %s19, %s31
    %p85 = scmp.eq.s32.totalorder %s84, 0
    %s87 = sadd.s32 %s86, 1
    %s88 = scalar_select %p85, %s86, %s87
    %p91 = pneg %p85
    %p92 = scmp.eq.s32.totalorder %s12, 1
    %p93 = por %p91, %p92
    %p94 = scmp.ne.s32.totalorder %s86, %s89
    %p95 = scmp.eq.s32.totalorder %s12, 0
    %p96 = por %p94, %p95
    %p97 = scmp.ne.s32.totalorder %s86, %s89
    %p98 = scmp.eq.s32.totalorder %s17, 1
    %p99 = por %p97, %p98
    %p100 = scmp.ne.s32.totalorder %s89, %s90
    %p101 = scmp.eq.s32.totalorder %s17, 0
    %p102 = por %p100, %p101
    %p103 = scmp.ne.s32.totalorder %s89, %s90
    %p104 = scmp.eq.s32.totalorder %s18, 1
    %p105 = por %p103, %p104
    %p107 = scmp.ne.s32.totalorder %s90, %s106
    %p108 = scmp.eq.s32.totalorder %s18, 0
    %p109 = por %p107, %p108
    %s110 = ssub.s32 %s20, %s27
    %p111 = scmp.eq.s32.totalorder %s110, 0
    %s113 = sadd.s32 %s112, 1
    %s114 = scalar_select %p111, %s112, %s113
    %p117 = pneg %p111
    %p118 = scmp.eq.s32.totalorder %s12, 1
    %p119 = por %p117, %p118
    %p120 = scmp.ne.s32.totalorder %s112, %s115
    %p121 = scmp.eq.s32.totalorder %s12, 0
    %p122 = por %p120, %p121
    %p123 = scmp.ne.s32.totalorder %s112, %s115
    %p124 = scmp.eq.s32.totalorder %s17, 1
    %p125 = por %p123, %p124
    %p126 = scmp.ne.s32.totalorder %s115, %s116
    %p127 = scmp.eq.s32.totalorder %s17, 0
    %p128 = por %p126, %p127
    %p129 = scmp.ne.s32.totalorder %s115, %s116
    %p130 = scmp.eq.s32.totalorder %s18, 1
    %p131 = por %p129, %p130
    %p133 = scmp.ne.s32.totalorder %s116, %s132
    %p134 = scmp.eq.s32.totalorder %s18, 0
    %p135 = por %p133, %p134
    %s136 = ssub.s32 %s19, %s31
    %p137 = scmp.eq.s32.totalorder %s136, 0
    %s139 = sadd.s32 %s138, 1
    %s140 = scalar_select %p137, %s138, %s139
    %p143 = pneg %p137
    %p144 = scmp.eq.s32.totalorder %s12, 1
    %p145 = por %p143, %p144
    %p146 = scmp.ne.s32.totalorder %s138, %s141
    %p147 = scmp.eq.s32.totalorder %s12, 0
    %p148 = por %p146, %p147
    %p149 = scmp.ne.s32.totalorder %s138, %s141
    %p150 = scmp.eq.s32.totalorder %s17, 1
    %p151 = por %p149, %p150
    %p152 = scmp.ne.s32.totalorder %s141, %s142
    %p153 = scmp.eq.s32.totalorder %s17, 0
    %p154 = por %p152, %p153
    %p155 = scmp.ne.s32.totalorder %s141, %s142
    %p156 = scmp.eq.s32.totalorder %s18, 1
    %p157 = por %p155, %p156
    %p159 = scmp.ne.s32.totalorder %s142, %s158
    %p160 = scmp.eq.s32.totalorder %s18, 0
    %p161 = por %p159, %p160
    %s162 = ssub.s32 %s19, %s31
    %p163 = scmp.eq.s32.totalorder %s162, 0
    %s165 = sadd.s32 %s164, 1
    %s166 = scalar_select %p163, %s164, %s165
    %p169 = pneg %p163
    %p170 = scmp.eq.s32.totalorder %s12, 1
    %p171 = por %p169, %p170
    %p172 = scmp.ne.s32.totalorder %s164, %s167
    %p173 = scmp.eq.s32.totalorder %s12, 0
    %p174 = por %p172, %p173
    %p175 = scmp.ne.s32.totalorder %s164, %s167
    %p176 = scmp.eq.s32.totalorder %s17, 1
    %p177 = por %p175, %p176
    %p178 = scmp.ne.s32.totalorder %s167, %s168
    %p179 = scmp.eq.s32.totalorder %s17, 0
    %p180 = por %p178, %p179
    %p181 = scmp.ne.s32.totalorder %s167, %s168
    %p182 = scmp.eq.s32.totalorder %s18, 1
    %p183 = por %p181, %p182
    %p185 = scmp.ne.s32.totalorder %s168, %s184
    %p186 = scmp.eq.s32.totalorder %s18, 0
    %p187 = por %p185, %p186
    %s188 = ssub.s32 %s20, %s27
    %s189 = ssub.s32 %s19, %s31
    %s190 = sor.u32 %s188, %s189
    %p191 = scmp.eq.s32.totalorder %s190, 0
    %s193 = sadd.s32 %s192, 1
    %s194 = scalar_select %p191, %s192, %s193
    %p197 = pneg %p191
    %p198 = scmp.eq.s32.totalorder %s12, 1
    %p199 = por %p197, %p198
    %p200 = scmp.ne.s32.totalorder %s192, %s195
    %p201 = scmp.eq.s32.totalorder %s12, 0
    %p202 = por %p200, %p201
    %p203 = scmp.ne.s32.totalorder %s192, %s195
    %p204 = scmp.eq.s32.totalorder %s17, 1
    %p205 = por %p203, %p204
    %p206 = scmp.ne.s32.totalorder %s195, %s196
    %p207 = scmp.eq.s32.totalorder %s17, 0
    %p208 = por %p206, %p207
    %p209 = scmp.ne.s32.totalorder %s195, %s196
    %p210 = scmp.eq.s32.totalorder %s18, 1
    %p211 = por %p209, %p210
    %p213 = scmp.ne.s32.totalorder %s196, %s212
    %p214 = scmp.eq.s32.totalorder %s18, 0
    %p215 = por %p213, %p214
    %p216 = scmp.le.s32.totalorder 1, %s12
    %p217 = scmp.lt.s32.totalorder %s12, 3
    %p218 = pnand %p216, %p217
    %p219 = pneg %p218
    // Predicated region
    $region9: #{block_forward.3} parent=5 // pred_check
      _
    $region10: #{block_forward.3} parent=5 // pred_check_branch
      %221 = sbr.rel (%p218) target = $region12
    $region11: #{block_forward.3} parent=5 // pred_region
      %s222 = ssub.s32 %s12, 1
      // Predicated region
      $region13: #{block_forward.3} parent=11 // pred_check
        %p223 = pneg %p76
      $region14: #{block_forward.3} parent=11 // pred_check_branch
        %225 = sbr.rel (%p223) target = $region16
      $region15: #{block_forward.3} parent=11 // pred_region
        %p226 = scmp.lt.s32.totalorder %s21, 0
        %s227 = scalar_select %p226, %s21, 0
        %s228 = smul.addr %s227, 4
        %s229 = scalar_lea.vmem %s1, %s228
      $region16: #{block_forward.3} parent=11 // pred_fallthru
        _
      // Predicated region
      $region17: #{block_forward.3} parent=11 // pred_check
        %p230 = pneg %p102
      $region18: #{block_forward.3} parent=11 // pred_check_branch
        %232 = sbr.rel (%p230) target = $region20
      $region19: #{block_forward.3} parent=11 // pred_region
        %p233 = scmp.lt.s32.totalorder %s21, 0
        %s234 = scalar_select %p233, %s21, 0
        %s235 = scalar_lea.vmem %s2, %s234
      $region20: #{block_forward.3} parent=11 // pred_fallthru
        _
      // Predicated region
      $region21: #{block_forward.3} parent=11 // pred_check
        %p236 = pneg %p154
      $region22: #{block_forward.3} parent=11 // pred_check_branch
        %238 = sbr.rel (%p236) target = $region24
      $region23: #{block_forward.3} parent=11 // pred_region
        %p239 = scmp.lt.s32.totalorder %s21, 0
        %s240 = scalar_select %p239, %s21, 0
        %s241 = smul.addr %s240, 2
        %s242 = scalar_lea.vmem %s4, %s241
      $region24: #{block_forward.3} parent=11 // pred_fallthru
        _
      // Predicated region
      $region25: #{block_forward.3} parent=11 // pred_check
        %p243 = pneg %p180
      $region26: #{block_forward.3} parent=11 // pred_check_branch
        %245 = sbr.rel (%p243) target = $region28
      $region27: #{block_forward.3} parent=11 // pred_region
        %p246 = scmp.lt.s32.totalorder %s21, 0
        %s247 = scalar_select %p246, %s21, 0
        %s248 = scalar_lea.vmem %s5, %s247
      $region28: #{block_forward.3} parent=11 // pred_fallthru
        _
    $region12: #{block_forward.3} parent=5 // pred_fallthru
      _
    %p249 = scmp.lt.s32.totalorder %s12, 2
    // Predicated region
    $region29: #{block_forward.3} parent=5 // pred_check
      %p250 = pneg %p249
    $region30: #{block_forward.3} parent=5 // pred_check_branch
      %252 = sbr.rel (%p250) target = $region32
    $region31: #{block_forward.3} parent=5 // pred_region
      // Predicated region
      $region33: #{block_forward.3} parent=31 // pred_check
        %p253 = pneg %p44
      $region34: #{block_forward.3} parent=31 // pred_check_branch
        %255 = sbr.rel (%p253) target = $region36
      $region35: #{block_forward.3} parent=31 // pred_region
        %p256 = scmp.lt.s32.totalorder %s20, 1
        %s257 = scalar_select %p256, %s20, 1
        %s258 = smul.addr %s257, 14
        %s259 = smul.addr %s258, 4
        %s260 = scalar_lea.vmem %s0, %s259
      $region36: #{block_forward.3} parent=31 // pred_fallthru
        _
      // Predicated region
      $region37: #{block_forward.3} parent=31 // pred_check
        %p261 = pneg %p122
      $region38: #{block_forward.3} parent=31 // pred_check_branch
        %263 = sbr.rel (%p261) target = $region40
      $region39: #{block_forward.3} parent=31 // pred_region
        %p264 = scmp.lt.s32.totalorder %s20, 1
        %s265 = scalar_select %p264, %s20, 1
        %s266 = smul.addr %s265, 10
        %s267 = smul.addr %s266, 4
        %s268 = scalar_lea.vmem %s3, %s267
      $region40: #{block_forward.3} parent=31 // pred_fallthru
        _
    $region32: #{block_forward.3} parent=5 // pred_fallthru
      _
    %p269 = scmp.le.s32.totalorder 1, %s12
    %p270 = scmp.lt.s32.totalorder %s12, 3
    %p271 = pnand %p269, %p270
    %p272 = pneg %p271
    // Predicated region
    $region41: #{block_forward.3} parent=5 // pred_check
      _
    $region42: #{block_forward.3} parent=5 // pred_check_branch
      %274 = sbr.rel (%p271) target = $region44
    $region43: #{block_forward.3} parent=5 // pred_region
      %s275 = ssub.s32 %s12, 1
      %p276 = scmp.lt.s32.totalorder %s22, 1
      %s277 = scalar_select %p276, %s22, 1
      %s278 = smul.addr %s277, 14
      %s279 = smul.addr %s278, 4
      %s280 = scalar_lea.vmem %s0, %s279
      %p281 = pneg %p50
      %p282 = pneg %p47
      %p283 = scmp.lt.s32.totalorder %s21, 0
      %s284 = scalar_select %p283, %s21, 0
      %s285 = smul.addr %s284, 4
      %s286 = scalar_lea.vmem %s1, %s285
      %p287 = pneg %p76
      %p288 = pneg %p73
      %p289 = scmp.lt.s32.totalorder %s21, 0
      %s290 = scalar_select %p289, %s21, 0
      %s291 = scalar_lea.vmem %s2, %s290
      %p292 = pneg %p102
      %p293 = pneg %p99
      %p294 = scmp.lt.s32.totalorder %s22, 1
      %s295 = scalar_select %p294, %s22, 1
      %s296 = smul.addr %s295, 10
      %s297 = smul.addr %s296, 4
      %s298 = scalar_lea.vmem %s3, %s297
      %p299 = pneg %p128
      %p300 = pneg %p125
      %p301 = scmp.lt.s32.totalorder %s21, 0
      %s302 = scalar_select %p301, %s21, 0
      %s303 = smul.addr %s302, 2
      %s304 = scalar_lea.vmem %s4, %s303
      %p305 = pneg %p154
      %p306 = pneg %p151
      %p307 = scmp.lt.s32.totalorder %s21, 0
      %s308 = scalar_select %p307, %s21, 0
      %s309 = scalar_lea.vmem %s5, %s308
      %p310 = pneg %p180
      %p311 = pneg %p177
      %p312 = pneg %p208
      %p313 = pneg %p205
      %p314 = scmp.lt.s32.totalorder %s22, 1
      %s315 = scalar_select %p314, %s22, 1
      %p316 = scmp.lt.s32.totalorder %s21, 0
      %s317 = scalar_select %p316, %s21, 0
      %s318 = smul.addr %s315, 10
      %s319 = sadd.s32 %s317, %s318
      %s320 = smul.addr %s319, 4
      %s321 = scalar_lea.vmem %s6, %s320
      %p322 = scmp.lt.s32.totalorder %s22, 1
      %s323 = scalar_select %p322, %s22, 1
      %s324 = smul.addr %s323, 14
      %s325 = smul.addr %s324, 4
      %s326 = scalar_lea.vmem %s0, %s325
      %p327 = scmp.lt.s32.totalorder %s21, 0
      %s328 = scalar_select %p327, %s21, 0
      %s329 = smul.addr %s328, 4
      %s330 = scalar_lea.vmem %s1, %s329
      %p331 = scmp.lt.s32.totalorder %s21, 0
      %s332 = scalar_select %p331, %s21, 0
      %s333 = scalar_lea.vmem %s2, %s332
      %p334 = scmp.lt.s32.totalorder %s22, 1
      %s335 = scalar_select %p334, %s22, 1
      %s336 = smul.addr %s335, 10
      %s337 = smul.addr %s336, 4
      %s338 = scalar_lea.vmem %s3, %s337
      %p339 = scmp.lt.s32.totalorder %s21, 0
      %s340 = scalar_select %p339, %s21, 0
      %s341 = smul.addr %s340, 2
      %s342 = scalar_lea.vmem %s4, %s341
      %p343 = scmp.lt.s32.totalorder %s21, 0
      %s344 = scalar_select %p343, %s21, 0
      %s345 = scalar_lea.vmem %s5, %s344
      %p346 = scmp.lt.s32.totalorder %s22, 1
      %s347 = scalar_select %p346, %s22, 1
      %p348 = scmp.lt.s32.totalorder %s21, 0
      %s349 = scalar_select %p348, %s21, 0
      %s350 = smul.addr %s347, 10
      %s351 = sadd.s32 %s349, %s350
      %s352 = smul.addr %s351, 4
      %s353 = scalar_lea.vmem %s6, %s352
      %v355 = vld [vmem:[%s326] sm:$0xc]
      %v356 = vld [vmem:[%s326 + $0x4] sm:$0xf]
      %v357 = vld [vmem:[%s326 + $0x8] sm:$0xf]
      %v358 = vld [vmem:[%s326 + $0xc] sm:$0xf]
      %v359 = vld [vmem:[%s326 + $0x10] sm:$0xf]
      %v360 = vld [vmem:[%s326 + $0x14] sm:$0xf]
      %v361 = vld [vmem:[%s326 + $0x18] sm:$0xf]
      %v362 = vld [vmem:[%s326 + $0x1c] sm:$0xf]
      %v363 = vld [vmem:[%s326 + $0x20] sm:$0xf]
      %v364 = vld [vmem:[%s326 + $0x24] sm:$0xf]
      %v365 = vld [vmem:[%s326 + $0x28] sm:$0x7]
      %v366 = vld [vmem:[%s326] sm:$0x8]
      %v367 = vld [vmem:[%s326 + $0x28] sm:$0xf]
      %v379 = vunpack.c.l.b16 %v355
      %v380 = vunpack.c.l.b16 %v356
      %v381 = vunpack.c.l.b16 %v357
      %v382 = vunpack.c.l.b16 %v358
      %v383 = vunpack.c.l.b16 %v359
      %v384 = vunpack.c.l.b16 %v360
      %v385 = vunpack.c.l.b16 %v361
      %v386 = vunpack.c.l.b16 %v362
      %v387 = vunpack.c.l.b16 %v363
      %v388 = vunpack.c.l.b16 %v364
      %v389 = vunpack.c.l.b16 %v365
      %v390 = vpack.c.b16 %v380, %v379
      %v391 = vpack.c.b16 %v382, %v381
      %v392 = vpack.c.b16 %v384, %v383
      %v393 = vpack.c.b16 %v386, %v385
      %v394 = vpack.c.b16 %v388, %v387
      %v395 = vpack.c.b16 %v389, %v389
      %v397 = vunpack.c.l.b16 %v366
      %v398 = vpack.c.b16 %v380, %v397
      %vm399 = vsmask.f32 7424
      %v401 = vshrl.u32 %v398, 16
      %v403 = vshll.u32 %v398, 16
      %v405 = vrot.slane %v403, 1
      %v406 = vor.u32 %v401, %v405
      %v408 = vshll.u32 %v391, 16
      %v410 = vrot.slane %v408, 1
      %v411 = vsel %vm399, %v406, %v410
      %v412 = vshrl.u32 %v391, 16
      %v414 = vor.u32 %v412, %v410
      %v416 = vshll.u32 %v392, 16
      %v418 = vrot.slane %v416, 1
      %v419 = vsel %vm399, %v414, %v418
      %v420 = vshrl.u32 %v392, 16
      %v422 = vor.u32 %v420, %v418
      %v424 = vshll.u32 %v393, 16
      %v426 = vrot.slane %v424, 1
      %v427 = vsel %vm399, %v422, %v426
      %v428 = vshrl.u32 %v393, 16
      %v430 = vor.u32 %v428, %v426
      %v432 = vshll.u32 %v394, 16
      %v434 = vrot.slane %v432, 1
      %v435 = vsel %vm399, %v430, %v434
      %v436 = vshrl.u32 %v394, 16
      %v438 = vor.u32 %v436, %v434
      %v440 = vshll.u32 %v395, 16
      %v442 = vrot.slane %v440, 1
      %v443 = vsel %vm399, %v438, %v442
      %v444 = vshrl.u32 %v395, 16
      %v446 = vor.u32 %v444, %v442
      %v448 = vunpack.c.l.b16 %v367
      %v449 = vpack.c.b16 %v448, %v448
      %vm450 = vcmask 1046528
      %v451 = vrot.slane %v398, 1
      %v452 = vrot.slane %v391, 1
      %v453 = vsel %vm450, %v451, %v452
      %v454 = vrot.slane %v392, 1
      %v455 = vsel %vm450, %v452, %v454
      %v456 = vrot.slane %v393, 1
      %v457 = vsel %vm450, %v454, %v456
      %v458 = vrot.slane %v394, 1
      %v459 = vsel %vm450, %v456, %v458
      %v460 = vrot.slane %v449, 1
      %v461 = vsel %vm450, %v458, %v460
      %v462 = vld [vmem:[%s330] sm:$0xf]
      %v463 = vld [vmem:[%s330 + $0x4] sm:$0xf]
      %v464 = vld [vmem:[%s330 + $0x8] sm:$0xf]
      %v465 = vld [vmem:[%s330 + $0xc] sm:$0xf]
      %v466 = vld [vmem:[%s330 + $0x10] sm:$0xf]
      %v467 = vld [vmem:[%s330 + $0x14] sm:$0xf]
      %v468 = vld [vmem:[%s330 + $0x18] sm:$0xf]
      %v469 = vld [vmem:[%s330 + $0x1c] sm:$0xf]
      %v470 = vld [vmem:[%s330 + $0x20] sm:$0xf]
      %v471 = vld [vmem:[%s330 + $0x24] sm:$0xf]
      %v472 = vld [vmem:[%s330 + $0x28] sm:$0xf]
      %v473 = vld [vmem:[%s330 + $0x2c] sm:$0xf]
      %v474 = vld [vmem:[%s330 + $0x30] sm:$0xf]
      %v475 = vld [vmem:[%s330 + $0x34] sm:$0xf]
      %v476 = vld [vmem:[%s330 + $0x38] sm:$0xf]
      %v477 = vld [vmem:[%s330 + $0x3c] sm:$0xf]
      %v478 = vld [vmem:[%s330 + $0x40] sm:$0xf]
      %v479 = vld [vmem:[%s330 + $0x44] sm:$0xf]
      %v480 = vld [vmem:[%s330 + $0x48] sm:$0xf]
      %v481 = vld [vmem:[%s330 + $0x4c] sm:$0xf]
      %v482 = vld [vmem:[%s330 + $0x50] sm:$0xf]
      %v483 = vld [vmem:[%s330 + $0x54] sm:$0xf]
      %v484 = vld [vmem:[%s330 + $0x58] sm:$0xf]
      %v485 = vld [vmem:[%s330 + $0x5c] sm:$0xf]
      %v486 = vld [vmem:[%s330 + $0x60] sm:$0xf]
      %v487 = vld [vmem:[%s330 + $0x64] sm:$0xf]
      %v488 = vld [vmem:[%s330 + $0x68] sm:$0xf]
      %v489 = vld [vmem:[%s330 + $0x6c] sm:$0xf]
      %v490 = vld [vmem:[%s330 + $0x70] sm:$0xf]
      %v491 = vld [vmem:[%s330 + $0x74] sm:$0xf]
      %v492 = vld [vmem:[%s330 + $0x78] sm:$0xf]
      %v493 = vld [vmem:[%s330 + $0x7c] sm:$0xf]
      %v494 = vld [vmem:[%s330 + $0x80] sm:$0xf]
      %v495 = vld [vmem:[%s330 + $0x84] sm:$0xf]
      %v496 = vld [vmem:[%s330 + $0x88] sm:$0xf]
      %v497 = vld [vmem:[%s330 + $0x8c] sm:$0xf]
      %v498 = vld [vmem:[%s330 + $0x90] sm:$0xf]
      %v499 = vld [vmem:[%s330 + $0x94] sm:$0xf]
      %v500 = vld [vmem:[%s330 + $0x98] sm:$0xf]
      %v501 = vld [vmem:[%s330 + $0x9c] sm:$0xf]
      %v502 = vld [vmem:[%s330 + $0xa0] sm:$0xf]
      %v503 = vld [vmem:[%s330 + $0xa4] sm:$0xf]
      %v504 = vld [vmem:[%s330 + $0xa8] sm:$0xf]
      %v505 = vld [vmem:[%s330 + $0xac] sm:$0xf]
      %v506 = vld [vmem:[%s330 + $0xb0] sm:$0xf]
      %v507 = vld [vmem:[%s330 + $0xb4] sm:$0xf]
      %v508 = vld [vmem:[%s330 + $0xb8] sm:$0xf]
      %v509 = vld [vmem:[%s330 + $0xbc] sm:$0xf]
      %v510 = vld [vmem:[%s326 + $0x4] sm:$0x8]
      %v511 = vld [vmem:[%s326 + $0x2c] sm:$0xf]
      %v512 = vld [vmem:[%s326 + $0x30] sm:$0x1]
      %v515 = vunpack.c.l.b16 %v510
      %v516 = vunpack.c.l.b16 %v511
      %v517 = vpack.c.b16 %v381, %v515
      %v518 = vpack.c.b16 %v383, %v382
      %v519 = vpack.c.b16 %v385, %v384
      %v520 = vpack.c.b16 %v387, %v386
      %v521 = vpack.c.b16 %v448, %v388
      %v522 = vpack.c.b16 %v516, %v516
      %v523 = vpack.c.b16 %v516, %v448
      %vm524 = vsmask.f32 3328
      %v525 = vrot.slane %v412, 4
      %v526 = vrot.slane %v408, 5
      %v527 = vor.u32 %v525, %v526
      %v528 = vrot.slane %v420, 4
      %v529 = vrot.slane %v416, 5
      %v530 = vor.u32 %v528, %v529
      %v531 = vsel %vm524, %v527, %v530
      %v532 = vrot.slane %v428, 4
      %v533 = vrot.slane %v424, 5
      %v534 = vor.u32 %v532, %v533
      %v535 = vsel %vm524, %v530, %v534
      %v536 = vrot.slane %v436, 4
      %v537 = vrot.slane %v432, 5
      %v538 = vor.u32 %v536, %v537
      %v539 = vsel %vm524, %v534, %v538
      %v541 = vshrl.u32 %v523, 16
      %v543 = vrot.slane %v541, 4
      %v544 = vshll.u32 %v523, 16
      %v546 = vrot.slane %v544, 5
      %v547 = vor.u32 %v543, %v546
      %v548 = vsel %vm524, %v538, %v547
      %v550 = vunpack.c.l.b16 %v512
      %v551 = vpack.c.b16 %v550, %v550
      %vm552 = vcmask 1042432
      %v553 = vrot.slane %v391, 5
      %v554 = vrot.slane %v392, 5
      %v555 = vsel %vm552, %v553, %v554
      %v556 = vrot.slane %v393, 5
      %v557 = vsel %vm552, %v554, %v556
      %v558 = vrot.slane %v394, 5
      %v559 = vsel %vm552, %v556, %v558
      %v560 = vrot.slane %v523, 5
      %v561 = vsel %vm552, %v558, %v560
      %v562 = vrot.slane %v551, 5
      %v563 = vsel %vm552, %v560, %v562
      %s564 = scalar_lea.vmem %s330, 192
      %v565 = vld [vmem:[%s564] sm:$0xf]
      %v566 = vld [vmem:[%s564 + $0x4] sm:$0xf]
      %v567 = vld [vmem:[%s564 + $0x8] sm:$0xf]
      %v568 = vld [vmem:[%s564 + $0xc] sm:$0xf]
      %v569 = vld [vmem:[%s564 + $0x10] sm:$0xf]
      %v570 = vld [vmem:[%s564 + $0x14] sm:$0xf]
      %v571 = vld [vmem:[%s564 + $0x18] sm:$0xf]
      %v572 = vld [vmem:[%s564 + $0x1c] sm:$0xf]
      %v573 = vld [vmem:[%s564 + $0x20] sm:$0xf]
      %v574 = vld [vmem:[%s564 + $0x24] sm:$0xf]
      %v575 = vld [vmem:[%s564 + $0x28] sm:$0xf]
      %v576 = vld [vmem:[%s564 + $0x2c] sm:$0xf]
      %v577 = vld [vmem:[%s564 + $0x30] sm:$0xf]
      %v578 = vld [vmem:[%s564 + $0x34] sm:$0xf]
      %v579 = vld [vmem:[%s564 + $0x38] sm:$0xf]
      %v580 = vld [vmem:[%s564 + $0x3c] sm:$0xf]
      %v581 = vld [vmem:[%s564 + $0x40] sm:$0xf]
      %v582 = vld [vmem:[%s564 + $0x44] sm:$0xf]
      %v583 = vld [vmem:[%s564 + $0x48] sm:$0xf]
      %v584 = vld [vmem:[%s564 + $0x4c] sm:$0xf]
      %v585 = vld [vmem:[%s564 + $0x50] sm:$0xf]
      %v586 = vld [vmem:[%s564 + $0x54] sm:$0xf]
      %v587 = vld [vmem:[%s564 + $0x58] sm:$0xf]
      %v588 = vld [vmem:[%s564 + $0x5c] sm:$0xf]
      %v589 = vld [vmem:[%s564 + $0x60] sm:$0xf]
      %v590 = vld [vmem:[%s564 + $0x64] sm:$0xf]
      %v591 = vld [vmem:[%s564 + $0x68] sm:$0xf]
      %v592 = vld [vmem:[%s564 + $0x6c] sm:$0xf]
      %v593 = vld [vmem:[%s564 + $0x70] sm:$0xf]
      %v594 = vld [vmem:[%s564 + $0x74] sm:$0xf]
      %v595 = vld [vmem:[%s564 + $0x78] sm:$0xf]
      %v596 = vld [vmem:[%s564 + $0x7c] sm:$0xf]
      %v597 = vld [vmem:[%s564 + $0x80] sm:$0xf]
      %v598 = vld [vmem:[%s564 + $0x84] sm:$0xf]
      %v599 = vld [vmem:[%s564 + $0x88] sm:$0xf]
      %v600 = vld [vmem:[%s564 + $0x8c] sm:$0xf]
      %v601 = vld [vmem:[%s564 + $0x90] sm:$0xf]
      %v602 = vld [vmem:[%s564 + $0x94] sm:$0xf]
      %v603 = vld [vmem:[%s564 + $0x98] sm:$0xf]
      %v604 = vld [vmem:[%s564 + $0x9c] sm:$0xf]
      %v605 = vld [vmem:[%s564 + $0xa0] sm:$0xf]
      %v606 = vld [vmem:[%s564 + $0xa4] sm:$0xf]
      %v607 = vld [vmem:[%s564 + $0xa8] sm:$0xf]
      %v608 = vld [vmem:[%s564 + $0xac] sm:$0xf]
      %v609 = vld [vmem:[%s564 + $0xb0] sm:$0xf]
      %v610 = vld [vmem:[%s564 + $0xb4] sm:$0xf]
      %v611 = vld [vmem:[%s564 + $0xb8] sm:$0xf]
      %v612 = vld [vmem:[%s564 + $0xbc] sm:$0xf]
      %vm613 = vsmask.f32 4352
      %v615 = vshrl.u32 %v517, 16
      %v617 = vrot.slane %v615, 3
      %v618 = vshll.u32 %v517, 16
      %v620 = vrot.slane %v618, 4
      %v621 = vor.u32 %v617, %v620
      %v623 = vshrl.u32 %v518, 16
      %v625 = vrot.slane %v623, 3
      %v626 = vshll.u32 %v518, 16
      %v628 = vrot.slane %v626, 4
      %v629 = vor.u32 %v625, %v628
      %v630 = vsel %vm613, %v621, %v629
      %v632 = vshrl.u32 %v527, 16
      %v634 = vrot.slane %v632, 3
      %v635 = vshll.u32 %v527, 16
      %v637 = vrot.slane %v635, 4
      %v638 = vor.u32 %v634, %v637
      %v640 = vshrl.u32 %v531, 16
      %v642 = vrot.slane %v640, 3
      %v643 = vshll.u32 %v531, 16
      %v645 = vrot.slane %v643, 4
      %v646 = vor.u32 %v642, %v645
      %v647 = vsel %vm613, %v638, %v646
      %v649 = vshrl.u32 %v553, 16
      %v651 = vrot.slane %v649, 3
      %v652 = vshll.u32 %v553, 16
      %v654 = vrot.slane %v652, 4
      %v655 = vor.u32 %v651, %v654
      %v657 = vshrl.u32 %v555, 16
      %v659 = vrot.slane %v657, 3
      %v660 = vshll.u32 %v555, 16
      %v662 = vrot.slane %v660, 4
      %v663 = vor.u32 %v659, %v662
      %v664 = vsel %vm613, %v655, %v663
      %v666 = vshrl.u32 %v519, 16
      %v668 = vrot.slane %v666, 3
      %v669 = vshll.u32 %v519, 16
      %v671 = vrot.slane %v669, 4
      %v672 = vor.u32 %v668, %v671
      %v673 = vsel %vm613, %v629, %v672
      %v675 = vshrl.u32 %v535, 16
      %v677 = vrot.slane %v675, 3
      %v678 = vshll.u32 %v535, 16
      %v680 = vrot.slane %v678, 4
      %v681 = vor.u32 %v677, %v680
      %v682 = vsel %vm613, %v646, %v681
      %v684 = vshrl.u32 %v557, 16
      %v686 = vrot.slane %v684, 3
      %v687 = vshll.u32 %v557, 16
      %v689 = vrot.slane %v687, 4
      %v690 = vor.u32 %v686, %v689
      %v691 = vsel %vm613, %v663, %v690
      %v693 = vshrl.u32 %v520, 16
      %v695 = vrot.slane %v693, 3
      %v696 = vshll.u32 %v520, 16
      %v698 = vrot.slane %v696, 4
      %v699 = vor.u32 %v695, %v698
      %v700 = vsel %vm613, %v672, %v699
      %v702 = vshrl.u32 %v539, 16
      %v704 = vrot.slane %v702, 3
      %v705 = vshll.u32 %v539, 16
      %v707 = vrot.slane %v705, 4
      %v708 = vor.u32 %v704, %v707
      %v709 = vsel %vm613, %v681, %v708
      %v711 = vshrl.u32 %v559, 16
      %v713 = vrot.slane %v711, 3
      %v714 = vshll.u32 %v559, 16
      %v716 = vrot.slane %v714, 4
      %v717 = vor.u32 %v713, %v716
      %v718 = vsel %vm613, %v690, %v717
      %v720 = vshrl.u32 %v521, 16
      %v722 = vrot.slane %v720, 3
      %v723 = vshll.u32 %v521, 16
      %v725 = vrot.slane %v723, 4
      %v726 = vor.u32 %v722, %v725
      %v727 = vsel %vm613, %v699, %v726
      %v729 = vshrl.u32 %v548, 16
      %v731 = vrot.slane %v729, 3
      %v732 = vshll.u32 %v548, 16
      %v734 = vrot.slane %v732, 4
      %v735 = vor.u32 %v731, %v734
      %v736 = vsel %vm613, %v708, %v735
      %v738 = vshrl.u32 %v561, 16
      %v740 = vrot.slane %v738, 3
      %v741 = vshll.u32 %v561, 16
      %v743 = vrot.slane %v741, 4
      %v744 = vor.u32 %v740, %v743
      %v745 = vsel %vm613, %v717, %v744
      %v747 = vshrl.u32 %v522, 16
      %v749 = vrot.slane %v747, 3
      %v750 = vshll.u32 %v522, 16
      %v752 = vrot.slane %v750, 4
      %v753 = vor.u32 %v749, %v752
      %v754 = vsel %vm613, %v726, %v753
      %v756 = vshrl.u32 %v547, 16
      %v758 = vrot.slane %v756, 3
      %v759 = vshll.u32 %v547, 16
      %v761 = vrot.slane %v759, 4
      %v762 = vor.u32 %v758, %v761
      %v763 = vsel %vm613, %v735, %v762
      %v765 = vshrl.u32 %v563, 16
      %v767 = vrot.slane %v765, 3
      %v768 = vshll.u32 %v563, 16
      %v770 = vrot.slane %v768, 4
      %v771 = vor.u32 %v767, %v770
      %v772 = vsel %vm613, %v744, %v771
      %v836 = vunpack.c.l.b16 %v565
      %v837 = vunpack.c.l.b16 %v566
      %v838 = vunpack.c.l.b16 %v567
      %v839 = vunpack.c.l.b16 %v568
      %v840 = vunpack.c.l.b16 %v569
      %v841 = vunpack.c.l.b16 %v570
      %v842 = vunpack.c.l.b16 %v571
      %v843 = vunpack.c.l.b16 %v572
      %v844 = vunpack.c.l.b16 %v573
      %v845 = vunpack.c.l.b16 %v574
      %v846 = vunpack.c.l.b16 %v575
      %v847 = vunpack.c.l.b16 %v576
      %v848 = vunpack.c.l.b16 %v577
      %v849 = vunpack.c.l.b16 %v578
      %v850 = vunpack.c.l.b16 %v579
      %v851 = vunpack.c.l.b16 %v580
      %v852 = vunpack.c.l.b16 %v581
      %v853 = vunpack.c.l.b16 %v582
      %v854 = vunpack.c.l.b16 %v583
      %v855 = vunpack.c.l.b16 %v584
      %v856 = vunpack.c.l.b16 %v585
      %v857 = vunpack.c.l.b16 %v586
      %v858 = vunpack.c.l.b16 %v587
      %v859 = vunpack.c.l.b16 %v588
      %v860 = vunpack.c.l.b16 %v589
      %v861 = vunpack.c.l.b16 %v590
      %v862 = vunpack.c.l.b16 %v591
      %v863 = vunpack.c.l.b16 %v592
      %v864 = vunpack.c.l.b16 %v593
      %v865 = vunpack.c.l.b16 %v594
      %v866 = vunpack.c.l.b16 %v595
      %v867 = vunpack.c.l.b16 %v596
      %v868 = vunpack.c.l.b16 %v597
      %v869 = vunpack.c.l.b16 %v598
      %v870 = vunpack.c.l.b16 %v599
      %v871 = vunpack.c.l.b16 %v600
      %v872 = vunpack.c.l.b16 %v601
      %v873 = vunpack.c.l.b16 %v602
      %v874 = vunpack.c.l.b16 %v603
      %v875 = vunpack.c.l.b16 %v604
      %v876 = vunpack.c.l.b16 %v605
      %v877 = vunpack.c.l.b16 %v606
      %v878 = vunpack.c.l.b16 %v607
      %v879 = vunpack.c.l.b16 %v608
      %v880 = vunpack.c.l.b16 %v609
      %v881 = vunpack.c.l.b16 %v610
      %v882 = vunpack.c.l.b16 %v611
      %v883 = vunpack.c.l.b16 %v612
      %v884 = vpack.c.b16 %v837, %v836
      %v885 = vpack.c.b16 %v839, %v838
      %v886 = vpack.c.b16 %v841, %v840
      %v887 = vpack.c.b16 %v843, %v842
      %v888 = vpack.c.b16 %v845, %v844
      %v889 = vpack.c.b16 %v847, %v846
      %v890 = vpack.c.b16 %v849, %v848
      %v891 = vpack.c.b16 %v851, %v850
      %v892 = vpack.c.b16 %v853, %v852
      %v893 = vpack.c.b16 %v855, %v854
      %v894 = vpack.c.b16 %v857, %v856
      %v895 = vpack.c.b16 %v859, %v858
      %v896 = vpack.c.b16 %v861, %v860
      %v897 = vpack.c.b16 %v863, %v862
      %v898 = vpack.c.b16 %v865, %v864
      %v899 = vpack.c.b16 %v867, %v866
      %v900 = vpack.c.b16 %v869, %v868
      %v901 = vpack.c.b16 %v871, %v870
      %v902 = vpack.c.b16 %v873, %v872
      %v903 = vpack.c.b16 %v875, %v874
      %v904 = vpack.c.b16 %v877, %v876
      %v905 = vpack.c.b16 %v879, %v878
      %v906 = vpack.c.b16 %v881, %v880
      %v907 = vpack.c.b16 %v883, %v882
      %932 = vmatprep.subr.bf16.mxu0 0
      %933 = vmatpush1.bf16.msra.mxu0 %v891
      %934 = vmatprep.subr.bf16.mxu0 0
      %935 = vmatpush1.bf16.msra.mxu0 %v890
      %936 = vmatprep.subr.bf16.mxu0 0
      %937 = vmatpush1.bf16.msra.mxu0 %v889
      %938 = vmatprep.subr.bf16.mxu0 0
      %939 = vmatpush1.bf16.msra.mxu0 %v888
      %940 = vmatprep.subr.bf16.mxu0 0
      %941 = vmatpush1.bf16.msra.mxu0 %v887
      %942 = vmatprep.subr.bf16.mxu0 0
      %943 = vmatpush1.bf16.msra.mxu0 %v886
      %944 = vmatprep.subr.bf16.mxu0 0
      %945 = vmatpush1.bf16.msra.mxu0 %v885
      %946 = vmatprep.subr.bf16.mxu0 0
      %947 = vmatpush1.bf16.msra.mxu0 %v884
      %948 = vmatprep.subr.bf16.mxu0 0
      %949 = vmatpush2.bf16.msra.mxu0 %v899
      %950 = vmatprep.subr.bf16.mxu0 0
      %951 = vmatpush2.bf16.msra.mxu0 %v898
      %952 = vmatprep.subr.bf16.mxu0 0
      %953 = vmatpush2.bf16.msra.mxu0 %v897
      %954 = vmatprep.subr.bf16.mxu0 0
      %955 = vmatpush2.bf16.msra.mxu0 %v896
      %956 = vmatprep.subr.bf16.mxu0 0
      %957 = vmatpush2.bf16.msra.mxu0 %v895
      %958 = vmatprep.subr.bf16.mxu0 0
      %959 = vmatpush2.bf16.msra.mxu0 %v894
      %960 = vmatprep.subr.bf16.mxu0 0
      %961 = vmatpush2.bf16.msra.mxu0 %v893
      %962 = vmatprep.subr.bf16.mxu0 0
      %963 = vmatpush2.bf16.msra.mxu0 %v892
      %964 = vmatprep.mubr.bf16.mxu0 %v647
      %965 = vmatmul.mubr.bf16.gmra.mxu0 %v630
      %v966 = vpop.f32.mrf.mxu0
      %v967 = vadd.f32 0.0, %v966
      %v968 = vpop.f32.mrf.mxu0
      %v969 = vpop.f32.mrf.mxu0
      %v970 = vadd.f32 0.0, %v969
      %v971 = vpop.f32.mrf.mxu0
      %972 = vmatprep.mubr.bf16.mxu0 %v682
      %973 = vmatmul.mubr.bf16.gmra.mxu0 %v673
      %v974 = vpop.f32.mrf.mxu0
      %v975 = vadd.f32 0.0, %v974
      %v976 = vpop.f32.mrf.mxu0
      %v977 = vpop.f32.mrf.mxu0
      %v978 = vadd.f32 0.0, %v977
      %v979 = vpop.f32.mrf.mxu0
      %980 = vmatprep.mubr.bf16.mxu0 %v709
      %981 = vmatmul.mubr.bf16.gmra.mxu0 %v700
      %v982 = vpop.f32.mrf.mxu0
      %v983 = vadd.f32 0.0, %v982
      %v984 = vpop.f32.mrf.mxu0
      %v985 = vpop.f32.mrf.mxu0
      %v986 = vadd.f32 0.0, %v985
      %v987 = vpop.f32.mrf.mxu0
      %988 = vmatprep.mubr.bf16.mxu0 %v736
      %989 = vmatmul.mubr.bf16.gmra.mxu0 %v727
      %v990 = vpop.f32.mrf.mxu0
      %v991 = vadd.f32 0.0, %v990
      %v992 = vpop.f32.mrf.mxu0
      %v993 = vpop.f32.mrf.mxu0
      %v994 = vadd.f32 0.0, %v993
      %v995 = vpop.f32.mrf.mxu0
      %996 = vmatprep.mubr.bf16.mxu0 %v763
      %997 = vmatmul.mubr.bf16.gmra.mxu0 %v754
      %v998 = vpop.f32.mrf.mxu0
      %v999 = vadd.f32 0.0, %v998
      %v1000 = vpop.f32.mrf.mxu0
      %v1001 = vpop.f32.mrf.mxu0
      %v1002 = vadd.f32 0.0, %v1001
      %v1003 = vpop.f32.mrf.mxu0
      %1004 = vdwg.mxu0
      %1005 = vmatprep.subr.bf16.mxu0 0
      %1006 = vmatpush1.bf16.msra.mxu0 %v907
      %1007 = vmatprep.subr.bf16.mxu0 0
      %1008 = vmatpush1.bf16.msra.mxu0 %v906
      %1009 = vmatprep.subr.bf16.mxu0 0
      %1010 = vmatpush1.bf16.msra.mxu0 %v905
      %1011 = vmatprep.subr.bf16.mxu0 0
      %1012 = vmatpush1.bf16.msra.mxu0 %v904
      %1013 = vmatprep.subr.bf16.mxu0 0
      %1014 = vmatpush1.bf16.msra.mxu0 %v903
      %1015 = vmatprep.subr.bf16.mxu0 0
      %1016 = vmatpush1.bf16.msra.mxu0 %v902
      %1017 = vmatprep.subr.bf16.mxu0 0
      %1018 = vmatpush1.bf16.msra.mxu0 %v901
      %1019 = vmatprep.subr.bf16.mxu0 0
      %1020 = vmatpush1.bf16.msra.mxu0 %v900
      %1021 = vmatprep.subr.bf16.mxu0 0
      %1022 = vmatpush2.bf16.msra.mxu0 0
      %1023 = vmatprep.subr.bf16.mxu0 0
      %1024 = vmatpush2.bf16.msra.mxu0 0
      %1025 = vmatprep.subr.bf16.mxu0 0
      %1026 = vmatpush2.bf16.msra.mxu0 0
      %1027 = vmatprep.subr.bf16.mxu0 0
      %1028 = vmatpush2.bf16.msra.mxu0 0
      %1029 = vmatprep.subr.bf16.mxu0 0
      %1030 = vmatpush2.bf16.msra.mxu0 0
      %1031 = vmatprep.subr.bf16.mxu0 0
      %1032 = vmatpush2.bf16.msra.mxu0 0
      %1033 = vmatprep.subr.bf16.mxu0 0
      %1034 = vmatpush2.bf16.msra.mxu0 0
      %1035 = vmatprep.subr.bf16.mxu0 0
      %1036 = vmatpush2.bf16.msra.mxu0 0
      %1037 = vmatprep.mubr.bf16.mxu0 0
      %1038 = vmatmul.mubr.bf16.gmra.mxu0 %v664
      %v1039 = vpop.f32.mrf.mxu0
      %v1040 = vadd.f32 %v967, %v1039
      %v1041 = vpop.f32.mrf.mxu0
      %v1042 = vpop.f32.mrf.mxu0
      %v1043 = vadd.f32 %v970, %v1042
      %v1044 = vpop.f32.mrf.mxu0
      %1045 = vmatprep.mubr.bf16.mxu0 0
      %1046 = vmatmul.mubr.bf16.gmra.mxu0 %v691
      %v1047 = vpop.f32.mrf.mxu0
      %v1048 = vadd.f32 %v975, %v1047
      %v1049 = vpop.f32.mrf.mxu0
      %v1050 = vpop.f32.mrf.mxu0
      %v1051 = vadd.f32 %v978, %v1050
      %v1052 = vpop.f32.mrf.mxu0
      %1053 = vmatprep.mubr.bf16.mxu0 0
      %1054 = vmatmul.mubr.bf16.gmra.mxu0 %v718
      %v1055 = vpop.f32.mrf.mxu0
      %v1056 = vadd.f32 %v983, %v1055
      %v1057 = vpop.f32.mrf.mxu0
      %v1058 = vpop.f32.mrf.mxu0
      %v1059 = vadd.f32 %v986, %v1058
      %v1060 = vpop.f32.mrf.mxu0
      %1061 = vmatprep.mubr.bf16.mxu0 0
      %1062 = vmatmul.mubr.bf16.gmra.mxu0 %v745
      %v1063 = vpop.f32.mrf.mxu0
      %v1064 = vadd.f32 %v991, %v1063
      %v1065 = vpop.f32.mrf.mxu0
      %v1066 = vpop.f32.mrf.mxu0
      %v1067 = vadd.f32 %v994, %v1066
      %v1068 = vpop.f32.mrf.mxu0
      %1069 = vmatprep.mubr.bf16.mxu0 0
      %1070 = vmatmul.mubr.bf16.gmra.mxu0 %v772
      %v1071 = vpop.f32.mrf.mxu0
      %v1072 = vadd.f32 %v999, %v1071
      %v1073 = vpop.f32.mrf.mxu0
      %v1074 = vpop.f32.mrf.mxu0
      %v1075 = vadd.f32 %v1002, %v1074
      %v1076 = vpop.f32.mrf.mxu0
      %1077 = vdwg.mxu0
      %vm1078 = vsmask.f32 5376
      %v1080 = vshrl.u32 %v390, 16
      %v1082 = vrot.slane %v1080, 2
      %v1083 = vshll.u32 %v390, 16
      %v1085 = vrot.slane %v1083, 3
      %v1086 = vor.u32 %v1082, %v1085
      %v1087 = vrot.slane %v412, 2
      %v1088 = vrot.slane %v408, 3
      %v1089 = vor.u32 %v1087, %v1088
      %v1090 = vsel %vm1078, %v1086, %v1089
      %v1092 = vshrl.u32 %v411, 16
      %v1094 = vrot.slane %v1092, 2
      %v1095 = vshll.u32 %v411, 16
      %v1097 = vrot.slane %v1095, 3
      %v1098 = vor.u32 %v1094, %v1097
      %v1100 = vshrl.u32 %v419, 16
      %v1102 = vrot.slane %v1100, 2
      %v1103 = vshll.u32 %v419, 16
      %v1105 = vrot.slane %v1103, 3
      %v1106 = vor.u32 %v1102, %v1105
      %v1107 = vsel %vm1078, %v1098, %v1106
      %v1109 = vshrl.u32 %v453, 16
      %v1111 = vrot.slane %v1109, 2
      %v1112 = vshll.u32 %v453, 16
      %v1114 = vrot.slane %v1112, 3
      %v1115 = vor.u32 %v1111, %v1114
      %v1117 = vshrl.u32 %v455, 16
      %v1119 = vrot.slane %v1117, 2
      %v1120 = vshll.u32 %v455, 16
      %v1122 = vrot.slane %v1120, 3
      %v1123 = vor.u32 %v1119, %v1122
      %v1124 = vsel %vm1078, %v1115, %v1123
      %v1125 = vrot.slane %v420, 2
      %v1126 = vrot.slane %v416, 3
      %v1127 = vor.u32 %v1125, %v1126
      %v1128 = vsel %vm1078, %v1089, %v1127
      %v1130 = vshrl.u32 %v427, 16
      %v1132 = vrot.slane %v1130, 2
      %v1133 = vshll.u32 %v427, 16
      %v1135 = vrot.slane %v1133, 3
      %v1136 = vor.u32 %v1132, %v1135
      %v1137 = vsel %vm1078, %v1106, %v1136
      %v1139 = vshrl.u32 %v457, 16
      %v1141 = vrot.slane %v1139, 2
      %v1142 = vshll.u32 %v457, 16
      %v1144 = vrot.slane %v1142, 3
      %v1145 = vor.u32 %v1141, %v1144
      %v1146 = vsel %vm1078, %v1123, %v1145
      %v1147 = vrot.slane %v428, 2
      %v1148 = vrot.slane %v424, 3
      %v1149 = vor.u32 %v1147, %v1148
      %v1150 = vsel %vm1078, %v1127, %v1149
      %v1152 = vshrl.u32 %v435, 16
      %v1154 = vrot.slane %v1152, 2
      %v1155 = vshll.u32 %v435, 16
      %v1157 = vrot.slane %v1155, 3
      %v1158 = vor.u32 %v1154, %v1157
      %v1159 = vsel %vm1078, %v1136, %v1158
      %v1161 = vshrl.u32 %v459, 16
      %v1163 = vrot.slane %v1161, 2
      %v1164 = vshll.u32 %v459, 16
      %v1166 = vrot.slane %v1164, 3
      %v1167 = vor.u32 %v1163, %v1166
      %v1168 = vsel %vm1078, %v1145, %v1167
      %v1169 = vrot.slane %v436, 2
      %v1170 = vrot.slane %v432, 3
      %v1171 = vor.u32 %v1169, %v1170
      %v1172 = vsel %vm1078, %v1149, %v1171
      %v1174 = vshrl.u32 %v443, 16
      %v1176 = vrot.slane %v1174, 2
      %v1177 = vshll.u32 %v443, 16
      %v1179 = vrot.slane %v1177, 3
      %v1180 = vor.u32 %v1176, %v1179
      %v1181 = vsel %vm1078, %v1158, %v1180
      %v1183 = vshrl.u32 %v461, 16
      %v1185 = vrot.slane %v1183, 2
      %v1186 = vshll.u32 %v461, 16
      %v1188 = vrot.slane %v1186, 3
      %v1189 = vor.u32 %v1185, %v1188
      %v1190 = vsel %vm1078, %v1167, %v1189
      %v1191 = vrot.slane %v444, 2
      %v1192 = vrot.slane %v440, 3
      %v1193 = vor.u32 %v1191, %v1192
      %v1194 = vsel %vm1078, %v1171, %v1193
      %v1196 = vshrl.u32 %v446, 16
      %v1198 = vrot.slane %v1196, 2
      %v1199 = vshll.u32 %v446, 16
      %v1201 = vrot.slane %v1199, 3
      %v1202 = vor.u32 %v1198, %v1201
      %v1203 = vsel %vm1078, %v1180, %v1202
      %v1205 = vshrl.u32 %v460, 16
      %v1207 = vrot.slane %v1205, 2
      %v1208 = vshll.u32 %v460, 16
      %v1210 = vrot.slane %v1208, 3
      %v1211 = vor.u32 %v1207, %v1210
      %v1212 = vsel %vm1078, %v1189, %v1211
      %v1276 = vunpack.c.l.b16 %v462
      %v1277 = vunpack.c.l.b16 %v463
      %v1278 = vunpack.c.l.b16 %v464
      %v1279 = vunpack.c.l.b16 %v465
      %v1280 = vunpack.c.l.b16 %v466
      %v1281 = vunpack.c.l.b16 %v467
      %v1282 = vunpack.c.l.b16 %v468
      %v1283 = vunpack.c.l.b16 %v469
      %v1284 = vunpack.c.l.b16 %v470
      %v1285 = vunpack.c.l.b16 %v471
      %v1286 = vunpack.c.l.b16 %v472
      %v1287 = vunpack.c.l.b16 %v473
      %v1288 = vunpack.c.l.b16 %v474
      %v1289 = vunpack.c.l.b16 %v475
      %v1290 = vunpack.c.l.b16 %v476
      %v1291 = vunpack.c.l.b16 %v477
      %v1292 = vunpack.c.l.b16 %v478
      %v1293 = vunpack.c.l.b16 %v479
      %v1294 = vunpack.c.l.b16 %v480
      %v1295 = vunpack.c.l.b16 %v481
      %v1296 = vunpack.c.l.b16 %v482
      %v1297 = vunpack.c.l.b16 %v483
      %v1298 = vunpack.c.l.b16 %v484
      %v1299 = vunpack.c.l.b16 %v485
      %v1300 = vunpack.c.l.b16 %v486
      %v1301 = vunpack.c.l.b16 %v487
      %v1302 = vunpack.c.l.b16 %v488
      %v1303 = vunpack.c.l.b16 %v489
      %v1304 = vunpack.c.l.b16 %v490
      %v1305 = vunpack.c.l.b16 %v491
      %v1306 = vunpack.c.l.b16 %v492
      %v1307 = vunpack.c.l.b16 %v493
      %v1308 = vunpack.c.l.b16 %v494
      %v1309 = vunpack.c.l.b16 %v495
      %v1310 = vunpack.c.l.b16 %v496
      %v1311 = vunpack.c.l.b16 %v497
      %v1312 = vunpack.c.l.b16 %v498
      %v1313 = vunpack.c.l.b16 %v499
      %v1314 = vunpack.c.l.b16 %v500
      %v1315 = vunpack.c.l.b16 %v501
      %v1316 = vunpack.c.l.b16 %v502
      %v1317 = vunpack.c.l.b16 %v503
      %v1318 = vunpack.c.l.b16 %v504
      %v1319 = vunpack.c.l.b16 %v505
      %v1320 = vunpack.c.l.b16 %v506
      %v1321 = vunpack.c.l.b16 %v507
      %v1322 = vunpack.c.l.b16 %v508
      %v1323 = vunpack.c.l.b16 %v509
      %v1324 = vpack.c.b16 %v1277, %v1276
      %v1325 = vpack.c.b16 %v1279, %v1278
      %v1326 = vpack.c.b16 %v1281, %v1280
      %v1327 = vpack.c.b16 %v1283, %v1282
      %v1328 = vpack.c.b16 %v1285, %v1284
      %v1329 = vpack.c.b16 %v1287, %v1286
      %v1330 = vpack.c.b16 %v1289, %v1288
      %v1331 = vpack.c.b16 %v1291, %v1290
      %v1332 = vpack.c.b16 %v1293, %v1292
      %v1333 = vpack.c.b16 %v1295, %v1294
      %v1334 = vpack.c.b16 %v1297, %v1296
      %v1335 = vpack.c.b16 %v1299, %v1298
      %v1336 = vpack.c.b16 %v1301, %v1300
      %v1337 = vpack.c.b16 %v1303, %v1302
      %v1338 = vpack.c.b16 %v1305, %v1304
      %v1339 = vpack.c.b16 %v1307, %v1306
      %v1340 = vpack.c.b16 %v1309, %v1308
      %v1341 = vpack.c.b16 %v1311, %v1310
      %v1342 = vpack.c.b16 %v1313, %v1312
      %v1343 = vpack.c.b16 %v1315, %v1314
      %v1344 = vpack.c.b16 %v1317, %v1316
      %v1345 = vpack.c.b16 %v1319, %v1318
      %v1346 = vpack.c.b16 %v1321, %v1320
      %v1347 = vpack.c.b16 %v1323, %v1322
      %1372 = vmatprep.subr.bf16.mxu0 0
      %1373 = vmatpush1.bf16.msra.mxu0 %v1331
      %1374 = vmatprep.subr.bf16.mxu0 0
      %1375 = vmatpush1.bf16.msra.mxu0 %v1330
      %1376 = vmatprep.subr.bf16.mxu0 0
      %1377 = vmatpush1.bf16.msra.mxu0 %v1329
      %1378 = vmatprep.subr.bf16.mxu0 0
      %1379 = vmatpush1.bf16.msra.mxu0 %v1328
      %1380 = vmatprep.subr.bf16.mxu0 0
      %1381 = vmatpush1.bf16.msra.mxu0 %v1327
      %1382 = vmatprep.subr.bf16.mxu0 0
      %1383 = vmatpush1.bf16.msra.mxu0 %v1326
      %1384 = vmatprep.subr.bf16.mxu0 0
      %1385 = vmatpush1.bf16.msra.mxu0 %v1325
      %1386 = vmatprep.subr.bf16.mxu0 0
      %1387 = vmatpush1.bf16.msra.mxu0 %v1324
      %1388 = vmatprep.subr.bf16.mxu0 0
      %1389 = vmatpush2.bf16.msra.mxu0 %v1339
      %1390 = vmatprep.subr.bf16.mxu0 0
      %1391 = vmatpush2.bf16.msra.mxu0 %v1338
      %1392 = vmatprep.subr.bf16.mxu0 0
      %1393 = vmatpush2.bf16.msra.mxu0 %v1337
      %1394 = vmatprep.subr.bf16.mxu0 0
      %1395 = vmatpush2.bf16.msra.mxu0 %v1336
      %1396 = vmatprep.subr.bf16.mxu0 0
      %1397 = vmatpush2.bf16.msra.mxu0 %v1335
      %1398 = vmatprep.subr.bf16.mxu0 0
      %1399 = vmatpush2.bf16.msra.mxu0 %v1334
      %1400 = vmatprep.subr.bf16.mxu0 0
      %1401 = vmatpush2.bf16.msra.mxu0 %v1333
      %1402 = vmatprep.subr.bf16.mxu0 0
      %1403 = vmatpush2.bf16.msra.mxu0 %v1332
      %1404 = vmatprep.mubr.bf16.mxu0 %v1107
      %1405 = vmatmul.mubr.bf16.gmra.mxu0 %v1090
      %v1406 = vpop.f32.mrf.mxu0
      %v1407 = vadd.f32 %v1040, %v1406
      %v1408 = vpop.f32.mrf.mxu0
      %v1409 = vpop.f32.mrf.mxu0
      %v1410 = vadd.f32 %v1043, %v1409
      %v1411 = vpop.f32.mrf.mxu0
      %1412 = vmatprep.mubr.bf16.mxu0 %v1137
      %1413 = vmatmul.mubr.bf16.gmra.mxu0 %v1128
      %v1414 = vpop.f32.mrf.mxu0
      %v1415 = vadd.f32 %v1048, %v1414
      %v1416 = vpop.f32.mrf.mxu0
      %v1417 = vpop.f32.mrf.mxu0
      %v1418 = vadd.f32 %v1051, %v1417
      %v1419 = vpop.f32.mrf.mxu0
      %1420 = vmatprep.mubr.bf16.mxu0 %v1159
      %1421 = vmatmul.mubr.bf16.gmra.mxu0 %v1150
      %v1422 = vpop.f32.mrf.mxu0
      %v1423 = vadd.f32 %v1056, %v1422
      %v1424 = vpop.f32.mrf.mxu0
      %v1425 = vpop.f32.mrf.mxu0
      %v1426 = vadd.f32 %v1059, %v1425
      %v1427 = vpop.f32.mrf.mxu0
      %1428 = vmatprep.mubr.bf16.mxu0 %v1181
      %1429 = vmatmul.mubr.bf16.gmra.mxu0 %v1172
      %v1430 = vpop.f32.mrf.mxu0
      %v1431 = vadd.f32 %v1064, %v1430
      %v1432 = vpop.f32.mrf.mxu0
      %v1433 = vpop.f32.mrf.mxu0
      %v1434 = vadd.f32 %v1067, %v1433
      %v1435 = vpop.f32.mrf.mxu0
      %1436 = vmatprep.mubr.bf16.mxu0 %v1203
      %1437 = vmatmul.mubr.bf16.gmra.mxu0 %v1194
      %v1438 = vpop.f32.mrf.mxu0
      %v1439 = vadd.f32 %v1072, %v1438
      %v1440 = vpop.f32.mrf.mxu0
      %v1441 = vpop.f32.mrf.mxu0
      %v1442 = vadd.f32 %v1075, %v1441
      %v1443 = vpop.f32.mrf.mxu0
      %1444 = vdwg.mxu0
      %1445 = vmatprep.subr.bf16.mxu0 0
      %1446 = vmatpush1.bf16.msra.mxu0 %v1347
      %1447 = vmatprep.subr.bf16.mxu0 0
      %1448 = vmatpush1.bf16.msra.mxu0 %v1346
      %1449 = vmatprep.subr.bf16.mxu0 0
      %1450 = vmatpush1.bf16.msra.mxu0 %v1345
      %1451 = vmatprep.subr.bf16.mxu0 0
      %1452 = vmatpush1.bf16.msra.mxu0 %v1344
      %1453 = vmatprep.subr.bf16.mxu0 0
      %1454 = vmatpush1.bf16.msra.mxu0 %v1343
      %1455 = vmatprep.subr.bf16.mxu0 0
      %1456 = vmatpush1.bf16.msra.mxu0 %v1342
      %1457 = vmatprep.subr.bf16.mxu0 0
      %1458 = vmatpush1.bf16.msra.mxu0 %v1341
      %1459 = vmatprep.subr.bf16.mxu0 0
      %1460 = vmatpush1.bf16.msra.mxu0 %v1340
      %1461 = vmatprep.subr.bf16.mxu0 0
      %1462 = vmatpush2.bf16.msra.mxu0 0
      %1463 = vmatprep.subr.bf16.mxu0 0
      %1464 = vmatpush2.bf16.msra.mxu0 0
      %1465 = vmatprep.subr.bf16.mxu0 0
      %1466 = vmatpush2.bf16.msra.mxu0 0
      %1467 = vmatprep.subr.bf16.mxu0 0
      %1468 = vmatpush2.bf16.msra.mxu0 0
      %1469 = vmatprep.subr.bf16.mxu0 0
      %1470 = vmatpush2.bf16.msra.mxu0 0
      %1471 = vmatprep.subr.bf16.mxu0 0
      %1472 = vmatpush2.bf16.msra.mxu0 0
      %1473 = vmatprep.subr.bf16.mxu0 0
      %1474 = vmatpush2.bf16.msra.mxu0 0
      %1475 = vmatprep.subr.bf16.mxu0 0
      %1476 = vmatpush2.bf16.msra.mxu0 0
      %1477 = vmatprep.mubr.bf16.mxu0 0
      %1478 = vmatmul.mubr.bf16.gmra.mxu0 %v1124
      %v1479 = vpop.f32.mrf.mxu0
      %v1480 = vadd.f32 %v1407, %v1479
      %v1481 = vpop.f32.mrf.mxu0
      %v1482 = vpop.f32.mrf.mxu0
      %v1483 = vadd.f32 %v1410, %v1482
      %v1484 = vpop.f32.mrf.mxu0
      %1485 = vmatprep.mubr.bf16.mxu0 0
      %1486 = vmatmul.mubr.bf16.gmra.mxu0 %v1146
      %v1487 = vpop.f32.mrf.mxu0
      %v1488 = vadd.f32 %v1415, %v1487
      %v1489 = vpop.f32.mrf.mxu0
      %v1490 = vpop.f32.mrf.mxu0
      %v1491 = vadd.f32 %v1418, %v1490
      %v1492 = vpop.f32.mrf.mxu0
      %1493 = vmatprep.mubr.bf16.mxu0 0
      %1494 = vmatmul.mubr.bf16.gmra.mxu0 %v1168
      %v1495 = vpop.f32.mrf.mxu0
      %v1496 = vadd.f32 %v1423, %v1495
      %v1497 = vpop.f32.mrf.mxu0
      %v1498 = vpop.f32.mrf.mxu0
      %v1499 = vadd.f32 %v1426, %v1498
      %v1500 = vpop.f32.mrf.mxu0
      %1501 = vmatprep.mubr.bf16.mxu0 0
      %1502 = vmatmul.mubr.bf16.gmra.mxu0 %v1190
      %v1503 = vpop.f32.mrf.mxu0
      %v1504 = vadd.f32 %v1431, %v1503
      %v1505 = vpop.f32.mrf.mxu0
      %v1506 = vpop.f32.mrf.mxu0
      %v1507 = vadd.f32 %v1434, %v1506
      %v1508 = vpop.f32.mrf.mxu0
      %1509 = vmatprep.mubr.bf16.mxu0 0
      %1510 = vmatmul.mubr.bf16.gmra.mxu0 %v1212
      %v1511 = vpop.f32.mrf.mxu0
      %v1512 = vadd.f32 %v1439, %v1511
      %v1513 = vpop.f32.mrf.mxu0
      %v1514 = vpop.f32.mrf.mxu0
      %v1515 = vadd.f32 %v1442, %v1514
      %v1516 = vpop.f32.mrf.mxu0
      %1517 = vdwg.mxu0
      %v1518 = vld [vmem:[%s326 + $0xc] sm:$0xf]
      %v1519 = vld [vmem:[%s326 + $0x10] sm:$0xf]
      %v1520 = vld [vmem:[%s326 + $0x14] sm:$0xf]
      %v1521 = vld [vmem:[%s326 + $0x18] sm:$0xf]
      %v1522 = vld [vmem:[%s326 + $0x1c] sm:$0xf]
      %v1523 = vld [vmem:[%s326 + $0x20] sm:$0xf]
      %v1524 = vld [vmem:[%s326 + $0x24] sm:$0xf]
      %v1525 = vld [vmem:[%s326 + $0x28] sm:$0xf]
      %v1526 = vld [vmem:[%s326 + $0x2c] sm:$0xf]
      %v1527 = vld [vmem:[%s326 + $0x30] sm:$0xf]
      %v1528 = vld [vmem:[%s326 + $0x34] sm:$0x1]
      %v1529 = vld [vmem:[%s326 + $0xc] sm:$0xe]
      %v1530 = vld [vmem:[%s326 + $0x34] sm:$0x3]
      %v1542 = vunpack.c.l.b16 %v1518
      %v1543 = vunpack.c.l.b16 %v1519
      %v1544 = vunpack.c.l.b16 %v1520
      %v1545 = vunpack.c.l.b16 %v1521
      %v1546 = vunpack.c.l.b16 %v1522
      %v1547 = vunpack.c.l.b16 %v1523
      %v1548 = vunpack.c.l.b16 %v1524
      %v1549 = vunpack.c.l.b16 %v1525
      %v1550 = vunpack.c.l.b16 %v1526
      %v1551 = vunpack.c.l.b16 %v1527
      %v1552 = vunpack.c.l.b16 %v1528
      %v1553 = vpack.c.b16 %v1543, %v1542
      %v1554 = vpack.c.b16 %v1545, %v1544
      %v1555 = vpack.c.b16 %v1547, %v1546
      %v1556 = vpack.c.b16 %v1549, %v1548
      %v1557 = vpack.c.b16 %v1551, %v1550
      %v1558 = vpack.c.b16 %v1552, %v1552
      %v1560 = vunpack.c.l.b16 %v1529
      %v1561 = vpack.c.b16 %v1543, %v1560
      %v1563 = vshrl.u32 %v1561, 16
      %v1565 = vshll.u32 %v1561, 16
      %v1567 = vrot.slane %v1565, 1
      %v1568 = vor.u32 %v1563, %v1567
      %v1570 = vshll.u32 %v1554, 16
      %v1572 = vrot.slane %v1570, 1
      %v1573 = vsel %vm399, %v1568, %v1572
      %v1574 = vshrl.u32 %v1554, 16
      %v1576 = vor.u32 %v1574, %v1572
      %v1578 = vshll.u32 %v1555, 16
      %v1580 = vrot.slane %v1578, 1
      %v1581 = vsel %vm399, %v1576, %v1580
      %v1582 = vshrl.u32 %v1555, 16
      %v1584 = vor.u32 %v1582, %v1580
      %v1586 = vshll.u32 %v1556, 16
      %v1588 = vrot.slane %v1586, 1
      %v1589 = vsel %vm399, %v1584, %v1588
      %v1590 = vshrl.u32 %v1556, 16
      %v1592 = vor.u32 %v1590, %v1588
      %v1594 = vshll.u32 %v1557, 16
      %v1596 = vrot.slane %v1594, 1
      %v1597 = vsel %vm399, %v1592, %v1596
      %v1598 = vshrl.u32 %v1557, 16
      %v1600 = vor.u32 %v1598, %v1596
      %v1602 = vshll.u32 %v1558, 16
      %v1604 = vrot.slane %v1602, 1
      %v1605 = vsel %vm399, %v1600, %v1604
      %v1606 = vshrl.u32 %v1558, 16
      %v1609 = vunpack.c.l.b16 %v1530
      %v1610 = vpack.c.b16 %v1609, %v1609
      %v1611 = vrot.slane %v1561, 1
      %v1612 = vrot.slane %v1554, 1
      %v1613 = vsel %vm450, %v1611, %v1612
      %v1614 = vrot.slane %v1555, 1
      %v1615 = vsel %vm450, %v1612, %v1614
      %v1616 = vrot.slane %v1556, 1
      %v1617 = vsel %vm450, %v1614, %v1616
      %v1618 = vrot.slane %v1557, 1
      %v1619 = vsel %vm450, %v1616, %v1618
      %v1620 = vrot.slane %v1610, 1
      %v1621 = vsel %vm450, %v1618, %v1620
      %s1622 = scalar_lea.vmem %s330, 384
      %v1623 = vld [vmem:[%s1622] sm:$0xf]
      %v1624 = vld [vmem:[%s1622 + $0x4] sm:$0xf]
      %v1625 = vld [vmem:[%s1622 + $0x8] sm:$0xf]
      %v1626 = vld [vmem:[%s1622 + $0xc] sm:$0xf]
      %v1627 = vld [vmem:[%s1622 + $0x10] sm:$0xf]
      %v1628 = vld [vmem:[%s1622 + $0x14] sm:$0xf]
      %v1629 = vld [vmem:[%s1622 + $0x18] sm:$0xf]
      %v1630 = vld [vmem:[%s1622 + $0x1c] sm:$0xf]
      %v1631 = vld [vmem:[%s1622 + $0x20] sm:$0xf]
      %v1632 = vld [vmem:[%s1622 + $0x24] sm:$0xf]
      %v1633 = vld [vmem:[%s1622 + $0x28] sm:$0xf]
      %v1634 = vld [vmem:[%s1622 + $0x2c] sm:$0xf]
      %v1635 = vld [vmem:[%s1622 + $0x30] sm:$0xf]
      %v1636 = vld [vmem:[%s1622 + $0x34] sm:$0xf]
      %v1637 = vld [vmem:[%s1622 + $0x38] sm:$0xf]
      %v1638 = vld [vmem:[%s1622 + $0x3c] sm:$0xf]
      %v1639 = vld [vmem:[%s1622 + $0x40] sm:$0xf]
      %v1640 = vld [vmem:[%s1622 + $0x44] sm:$0xf]
      %v1641 = vld [vmem:[%s1622 + $0x48] sm:$0xf]
      %v1642 = vld [vmem:[%s1622 + $0x4c] sm:$0xf]
      %v1643 = vld [vmem:[%s1622 + $0x50] sm:$0xf]
      %v1644 = vld [vmem:[%s1622 + $0x54] sm:$0xf]
      %v1645 = vld [vmem:[%s1622 + $0x58] sm:$0xf]
      %v1646 = vld [vmem:[%s1622 + $0x5c] sm:$0xf]
      %v1647 = vld [vmem:[%s1622 + $0x60] sm:$0xf]
      %v1648 = vld [vmem:[%s1622 + $0x64] sm:$0xf]
      %v1649 = vld [vmem:[%s1622 + $0x68] sm:$0xf]
      %v1650 = vld [vmem:[%s1622 + $0x6c] sm:$0xf]
      %v1651 = vld [vmem:[%s1622 + $0x70] sm:$0xf]
      %v1652 = vld [vmem:[%s1622 + $0x74] sm:$0xf]
      %v1653 = vld [vmem:[%s1622 + $0x78] sm:$0xf]
      %v1654 = vld [vmem:[%s1622 + $0x7c] sm:$0xf]
      %v1655 = vld [vmem:[%s1622 + $0x80] sm:$0xf]
      %v1656 = vld [vmem:[%s1622 + $0x84] sm:$0xf]
      %v1657 = vld [vmem:[%s1622 + $0x88] sm:$0xf]
      %v1658 = vld [vmem:[%s1622 + $0x8c] sm:$0xf]
      %v1659 = vld [vmem:[%s1622 + $0x90] sm:$0xf]
      %v1660 = vld [vmem:[%s1622 + $0x94] sm:$0xf]
      %v1661 = vld [vmem:[%s1622 + $0x98] sm:$0xf]
      %v1662 = vld [vmem:[%s1622 + $0x9c] sm:$0xf]
      %v1663 = vld [vmem:[%s1622 + $0xa0] sm:$0xf]
      %v1664 = vld [vmem:[%s1622 + $0xa4] sm:$0xf]
      %v1665 = vld [vmem:[%s1622 + $0xa8] sm:$0xf]
      %v1666 = vld [vmem:[%s1622 + $0xac] sm:$0xf]
      %v1667 = vld [vmem:[%s1622 + $0xb0] sm:$0xf]
      %v1668 = vld [vmem:[%s1622 + $0xb4] sm:$0xf]
      %v1669 = vld [vmem:[%s1622 + $0xb8] sm:$0xf]
      %v1670 = vld [vmem:[%s1622 + $0xbc] sm:$0xf]
      %v1672 = vshrl.u32 %v1553, 16
      %v1674 = vshll.u32 %v1553, 16
      %v1676 = vrot.slane %v1674, 1
      %v1677 = vor.u32 %v1672, %v1676
      %v1678 = vsel %vm399, %v1677, %v1572
      %v1680 = vshrl.u32 %v1573, 16
      %v1682 = vshll.u32 %v1573, 16
      %v1684 = vrot.slane %v1682, 1
      %v1685 = vor.u32 %v1680, %v1684
      %v1687 = vshll.u32 %v1581, 16
      %v1689 = vrot.slane %v1687, 1
      %v1690 = vsel %vm399, %v1685, %v1689
      %v1692 = vshrl.u32 %v1613, 16
      %v1694 = vshll.u32 %v1613, 16
      %v1696 = vrot.slane %v1694, 1
      %v1697 = vor.u32 %v1692, %v1696
      %v1699 = vshll.u32 %v1615, 16
      %v1701 = vrot.slane %v1699, 1
      %v1702 = vsel %vm399, %v1697, %v1701
      %v1703 = vshrl.u32 %v1581, 16
      %v1705 = vor.u32 %v1703, %v1689
      %v1707 = vshll.u32 %v1589, 16
      %v1709 = vrot.slane %v1707, 1
      %v1710 = vsel %vm399, %v1705, %v1709
      %v1711 = vshrl.u32 %v1615, 16
      %v1713 = vor.u32 %v1711, %v1701
      %v1715 = vshll.u32 %v1617, 16
      %v1717 = vrot.slane %v1715, 1
      %v1718 = vsel %vm399, %v1713, %v1717
      %v1719 = vshrl.u32 %v1589, 16
      %v1721 = vor.u32 %v1719, %v1709
      %v1723 = vshll.u32 %v1597, 16
      %v1725 = vrot.slane %v1723, 1
      %v1726 = vsel %vm399, %v1721, %v1725
      %v1727 = vshrl.u32 %v1617, 16
      %v1729 = vor.u32 %v1727, %v1717
      %v1731 = vshll.u32 %v1619, 16
      %v1733 = vrot.slane %v1731, 1
      %v1734 = vsel %vm399, %v1729, %v1733
      %v1735 = vshrl.u32 %v1597, 16
      %v1737 = vor.u32 %v1735, %v1725
      %v1739 = vshll.u32 %v1605, 16
      %v1741 = vrot.slane %v1739, 1
      %v1742 = vsel %vm399, %v1737, %v1741
      %v1743 = vshrl.u32 %v1619, 16
      %v1745 = vor.u32 %v1743, %v1733
      %v1747 = vshll.u32 %v1621, 16
      %v1749 = vrot.slane %v1747, 1
      %v1750 = vsel %vm399, %v1745, %v1749
      %v1751 = vshrl.u32 %v1605, 16
      %v1753 = vor.u32 %v1751, %v1741
      %v1755 = vshll.u32 %v1606, 16
      %v1757 = vrot.slane %v1755, 1
      %v1758 = vsel %vm399, %v1753, %v1757
      %v1759 = vshrl.u32 %v1621, 16
      %v1761 = vor.u32 %v1759, %v1749
      %v1763 = vshll.u32 %v1620, 16
      %v1765 = vrot.slane %v1763, 1
      %v1766 = vsel %vm399, %v1761, %v1765
      %v1830 = vunpack.c.l.b16 %v1623
      %v1831 = vunpack.c.l.b16 %v1624
      %v1832 = vunpack.c.l.b16 %v1625
      %v1833 = vunpack.c.l.b16 %v1626
      %v1834 = vunpack.c.l.b16 %v1627
      %v1835 = vunpack.c.l.b16 %v1628
      %v1836 = vunpack.c.l.b16 %v1629
      %v1837 = vunpack.c.l.b16 %v1630
      %v1838 = vunpack.c.l.b16 %v1631
      %v1839 = vunpack.c.l.b16 %v1632
      %v1840 = vunpack.c.l.b16 %v1633
      %v1841 = vunpack.c.l.b16 %v1634
      %v1842 = vunpack.c.l.b16 %v1635
      %v1843 = vunpack.c.l.b16 %v1636
      %v1844 = vunpack.c.l.b16 %v1637
      %v1845 = vunpack.c.l.b16 %v1638
      %v1846 = vunpack.c.l.b16 %v1639
      %v1847 = vunpack.c.l.b16 %v1640
      %v1848 = vunpack.c.l.b16 %v1641
      %v1849 = vunpack.c.l.b16 %v1642
      %v1850 = vunpack.c.l.b16 %v1643
      %v1851 = vunpack.c.l.b16 %v1644
      %v1852 = vunpack.c.l.b16 %v1645
      %v1853 = vunpack.c.l.b16 %v1646
      %v1854 = vunpack.c.l.b16 %v1647
      %v1855 = vunpack.c.l.b16 %v1648
      %v1856 = vunpack.c.l.b16 %v1649
      %v1857 = vunpack.c.l.b16 %v1650
      %v1858 = vunpack.c.l.b16 %v1651
      %v1859 = vunpack.c.l.b16 %v1652
      %v1860 = vunpack.c.l.b16 %v1653
      %v1861 = vunpack.c.l.b16 %v1654
      %v1862 = vunpack.c.l.b16 %v1655
      %v1863 = vunpack.c.l.b16 %v1656
      %v1864 = vunpack.c.l.b16 %v1657
      %v1865 = vunpack.c.l.b16 %v1658
      %v1866 = vunpack.c.l.b16 %v1659
      %v1867 = vunpack.c.l.b16 %v1660
      %v1868 = vunpack.c.l.b16 %v1661
      %v1869 = vunpack.c.l.b16 %v1662
      %v1870 = vunpack.c.l.b16 %v1663
      %v1871 = vunpack.c.l.b16 %v1664
      %v1872 = vunpack.c.l.b16 %v1665
      %v1873 = vunpack.c.l.b16 %v1666
      %v1874 = vunpack.c.l.b16 %v1667
      %v1875 = vunpack.c.l.b16 %v1668
      %v1876 = vunpack.c.l.b16 %v1669
      %v1877 = vunpack.c.l.b16 %v1670
      %v1878 = vpack.c.b16 %v1831, %v1830
      %v1879 = vpack.c.b16 %v1833, %v1832
      %v1880 = vpack.c.b16 %v1835, %v1834
      %v1881 = vpack.c.b16 %v1837, %v1836
      %v1882 = vpack.c.b16 %v1839, %v1838
      %v1883 = vpack.c.b16 %v1841, %v1840
      %v1884 = vpack.c.b16 %v1843, %v1842
      %v1885 = vpack.c.b16 %v1845, %v1844
      %v1886 = vpack.c.b16 %v1847, %v1846
      %v1887 = vpack.c.b16 %v1849, %v1848
      %v1888 = vpack.c.b16 %v1851, %v1850
      %v1889 = vpack.c.b16 %v1853, %v1852
      %v1890 = vpack.c.b16 %v1855, %v1854
      %v1891 = vpack.c.b16 %v1857, %v1856
      %v1892 = vpack.c.b16 %v1859, %v1858
      %v1893 = vpack.c.b16 %v1861, %v1860
      %v1894 = vpack.c.b16 %v1863, %v1862
      %v1895 = vpack.c.b16 %v1865, %v1864
      %v1896 = vpack.c.b16 %v1867, %v1866
      %v1897 = vpack.c.b16 %v1869, %v1868
      %v1898 = vpack.c.b16 %v1871, %v1870
      %v1899 = vpack.c.b16 %v1873, %v1872
      %v1900 = vpack.c.b16 %v1875, %v1874
      %v1901 = vpack.c.b16 %v1877, %v1876
      %1926 = vmatprep.subr.bf16.mxu0 0
      %1927 = vmatpush1.bf16.msra.mxu0 %v1885
      %1928 = vmatprep.subr.bf16.mxu0 0
      %1929 = vmatpush1.bf16.msra.mxu0 %v1884
      %1930 = vmatprep.subr.bf16.mxu0 0
      %1931 = vmatpush1.bf16.msra.mxu0 %v1883
      %1932 = vmatprep.subr.bf16.mxu0 0
      %1933 = vmatpush1.bf16.msra.mxu0 %v1882
      %1934 = vmatprep.subr.bf16.mxu0 0
      %1935 = vmatpush1.bf16.msra.mxu0 %v1881
      %1936 = vmatprep.subr.bf16.mxu0 0
      %1937 = vmatpush1.bf16.msra.mxu0 %v1880
      %1938 = vmatprep.subr.bf16.mxu0 0
      %1939 = vmatpush1.bf16.msra.mxu0 %v1879
      %1940 = vmatprep.subr.bf16.mxu0 0
      %1941 = vmatpush1.bf16.msra.mxu0 %v1878
      %1942 = vmatprep.subr.bf16.mxu0 0
      %1943 = vmatpush2.bf16.msra.mxu0 %v1893
      %1944 = vmatprep.subr.bf16.mxu0 0
      %1945 = vmatpush2.bf16.msra.mxu0 %v1892
      %1946 = vmatprep.subr.bf16.mxu0 0
      %1947 = vmatpush2.bf16.msra.mxu0 %v1891
      %1948 = vmatprep.subr.bf16.mxu0 0
      %1949 = vmatpush2.bf16.msra.mxu0 %v1890
      %1950 = vmatprep.subr.bf16.mxu0 0
      %1951 = vmatpush2.bf16.msra.mxu0 %v1889
      %1952 = vmatprep.subr.bf16.mxu0 0
      %1953 = vmatpush2.bf16.msra.mxu0 %v1888
      %1954 = vmatprep.subr.bf16.mxu0 0
      %1955 = vmatpush2.bf16.msra.mxu0 %v1887
      %1956 = vmatprep.subr.bf16.mxu0 0
      %1957 = vmatpush2.bf16.msra.mxu0 %v1886
      %1958 = vmatprep.mubr.bf16.mxu0 %v1690
      %1959 = vmatmul.mubr.bf16.gmra.mxu0 %v1678
      %v1960 = vpop.f32.mrf.mxu0
      %v1961 = vadd.f32 0.0, %v1960
      %v1962 = vpop.f32.mrf.mxu0
      %v1963 = vpop.f32.mrf.mxu0
      %v1964 = vadd.f32 0.0, %v1963
      %v1965 = vpop.f32.mrf.mxu0
      %1966 = vmatprep.mubr.bf16.mxu0 %v1710
      %1967 = vmatmul.mubr.bf16.gmra.mxu0 %v1581
      %v1968 = vpop.f32.mrf.mxu0
      %v1969 = vadd.f32 0.0, %v1968
      %v1970 = vpop.f32.mrf.mxu0
      %v1971 = vpop.f32.mrf.mxu0
      %v1972 = vadd.f32 0.0, %v1971
      %v1973 = vpop.f32.mrf.mxu0
      %1974 = vmatprep.mubr.bf16.mxu0 %v1726
      %1975 = vmatmul.mubr.bf16.gmra.mxu0 %v1589
      %v1976 = vpop.f32.mrf.mxu0
      %v1977 = vadd.f32 0.0, %v1976
      %v1978 = vpop.f32.mrf.mxu0
      %v1979 = vpop.f32.mrf.mxu0
      %v1980 = vadd.f32 0.0, %v1979
      %v1981 = vpop.f32.mrf.mxu0
      %1982 = vmatprep.mubr.bf16.mxu0 %v1742
      %1983 = vmatmul.mubr.bf16.gmra.mxu0 %v1597
      %v1984 = vpop.f32.mrf.mxu0
      %v1985 = vadd.f32 0.0, %v1984
      %v1986 = vpop.f32.mrf.mxu0
      %v1987 = vpop.f32.mrf.mxu0
      %v1988 = vadd.f32 0.0, %v1987
      %v1989 = vpop.f32.mrf.mxu0
      %1990 = vmatprep.mubr.bf16.mxu0 %v1758
      %1991 = vmatmul.mubr.bf16.gmra.mxu0 %v1605
      %v1992 = vpop.f32.mrf.mxu0
      %v1993 = vadd.f32 0.0, %v1992
      %v1994 = vpop.f32.mrf.mxu0
      %v1995 = vpop.f32.mrf.mxu0
      %v1996 = vadd.f32 0.0, %v1995
      %v1997 = vpop.f32.mrf.mxu0
      %1998 = vdwg.mxu0
      %1999 = vmatprep.subr.bf16.mxu0 0
      %2000 = vmatpush1.bf16.msra.mxu0 %v1901
      %2001 = vmatprep.subr.bf16.mxu0 0
      %2002 = vmatpush1.bf16.msra.mxu0 %v1900
      %2003 = vmatprep.subr.bf16.mxu0 0
      %2004 = vmatpush1.bf16.msra.mxu0 %v1899
      %2005 = vmatprep.subr.bf16.mxu0 0
      %2006 = vmatpush1.bf16.msra.mxu0 %v1898
      %2007 = vmatprep.subr.bf16.mxu0 0
      %2008 = vmatpush1.bf16.msra.mxu0 %v1897
      %2009 = vmatprep.subr.bf16.mxu0 0
      %2010 = vmatpush1.bf16.msra.mxu0 %v1896
      %2011 = vmatprep.subr.bf16.mxu0 0
      %2012 = vmatpush1.bf16.msra.mxu0 %v1895
      %2013 = vmatprep.subr.bf16.mxu0 0
      %2014 = vmatpush1.bf16.msra.mxu0 %v1894
      %2015 = vmatprep.subr.bf16.mxu0 0
      %2016 = vmatpush2.bf16.msra.mxu0 0
      %2017 = vmatprep.subr.bf16.mxu0 0
      %2018 = vmatpush2.bf16.msra.mxu0 0
      %2019 = vmatprep.subr.bf16.mxu0 0
      %2020 = vmatpush2.bf16.msra.mxu0 0
      %2021 = vmatprep.subr.bf16.mxu0 0
      %2022 = vmatpush2.bf16.msra.mxu0 0
      %2023 = vmatprep.subr.bf16.mxu0 0
      %2024 = vmatpush2.bf16.msra.mxu0 0
      %2025 = vmatprep.subr.bf16.mxu0 0
      %2026 = vmatpush2.bf16.msra.mxu0 0
      %2027 = vmatprep.subr.bf16.mxu0 0
      %2028 = vmatpush2.bf16.msra.mxu0 0
      %2029 = vmatprep.subr.bf16.mxu0 0
      %2030 = vmatpush2.bf16.msra.mxu0 0
      %2031 = vmatprep.mubr.bf16.mxu0 0
      %2032 = vmatmul.mubr.bf16.gmra.mxu0 %v1702
      %v2033 = vpop.f32.mrf.mxu0
      %v2034 = vadd.f32 %v1961, %v2033
      %v2035 = vpop.f32.mrf.mxu0
      %v2036 = vpop.f32.mrf.mxu0
      %v2037 = vadd.f32 %v1964, %v2036
      %v2038 = vpop.f32.mrf.mxu0
      %2039 = vmatprep.mubr.bf16.mxu0 0
      %2040 = vmatmul.mubr.bf16.gmra.mxu0 %v1718
      %v2041 = vpop.f32.mrf.mxu0
      %v2042 = vadd.f32 %v1969, %v2041
      %v2043 = vpop.f32.mrf.mxu0
      %v2044 = vpop.f32.mrf.mxu0
      %v2045 = vadd.f32 %v1972, %v2044
      %v2046 = vpop.f32.mrf.mxu0
      %2047 = vmatprep.mubr.bf16.mxu0 0
      %2048 = vmatmul.mubr.bf16.gmra.mxu0 %v1734
      %v2049 = vpop.f32.mrf.mxu0
      %v2050 = vadd.f32 %v1977, %v2049
      %v2051 = vpop.f32.mrf.mxu0
      %v2052 = vpop.f32.mrf.mxu0
      %v2053 = vadd.f32 %v1980, %v2052
      %v2054 = vpop.f32.mrf.mxu0
      %2055 = vmatprep.mubr.bf16.mxu0 0
      %2056 = vmatmul.mubr.bf16.gmra.mxu0 %v1750
      %v2057 = vpop.f32.mrf.mxu0
      %v2058 = vadd.f32 %v1985, %v2057
      %v2059 = vpop.f32.mrf.mxu0
      %v2060 = vpop.f32.mrf.mxu0
      %v2061 = vadd.f32 %v1988, %v2060
      %v2062 = vpop.f32.mrf.mxu0
      %2063 = vmatprep.mubr.bf16.mxu0 0
      %2064 = vmatmul.mubr.bf16.gmra.mxu0 %v1766
      %v2065 = vpop.f32.mrf.mxu0
      %v2066 = vadd.f32 %v1993, %v2065
      %v2067 = vpop.f32.mrf.mxu0
      %v2068 = vpop.f32.mrf.mxu0
      %v2069 = vadd.f32 %v1996, %v2068
      %v2070 = vpop.f32.mrf.mxu0
      %2071 = vdwg.mxu0
      %v2072 = vadd.f32 %v1480, %v2034
      %v2073 = vadd.f32 %v1483, %v2037
      %v2074 = vadd.f32 %v1488, %v2042
      %v2075 = vadd.f32 %v1491, %v2045
      %v2076 = vadd.f32 %v1496, %v2050
      %v2077 = vadd.f32 %v1499, %v2053
      %v2078 = vadd.f32 %v1504, %v2058
      %v2079 = vadd.f32 %v1507, %v2061
      %v2080 = vadd.f32 %v1512, %v2066
      %v2081 = vadd.f32 %v1515, %v2069
      %v2082 = vld [vmem:[%s338] sm:$0xf]
      %v2083 = vld [vmem:[%s338 + $0x4] sm:$0xf]
      %v2084 = vld [vmem:[%s338 + $0x8] sm:$0xf]
      %v2085 = vld [vmem:[%s338 + $0xc] sm:$0xf]
      %v2086 = vld [vmem:[%s338 + $0x10] sm:$0xf]
      %v2087 = vld [vmem:[%s338 + $0x14] sm:$0xf]
      %v2088 = vld [vmem:[%s338 + $0x18] sm:$0xf]
      %v2089 = vld [vmem:[%s338 + $0x1c] sm:$0xf]
      %v2090 = vld [vmem:[%s338 + $0x20] sm:$0xf]
      %v2091 = vld [vmem:[%s338 + $0x24] sm:$0xf]
      %v2092 = vld [vmem:[%s342] sm:$0x3]
      %v2103 = vunpack.c.l.b16 %v2082
      %v2104 = vunpack.c.l.b16 %v2083
      %v2105 = vunpack.c.l.b16 %v2084
      %v2106 = vunpack.c.l.b16 %v2085
      %v2107 = vunpack.c.l.b16 %v2086
      %v2108 = vunpack.c.l.b16 %v2087
      %v2109 = vunpack.c.l.b16 %v2088
      %v2110 = vunpack.c.l.b16 %v2089
      %v2111 = vunpack.c.l.b16 %v2090
      %v2112 = vunpack.c.l.b16 %v2091
      %v2113 = vpack.c.b16 %v2104, %v2103
      %v2114 = vpack.c.b16 %v2106, %v2105
      %v2115 = vpack.c.b16 %v2108, %v2107
      %v2116 = vpack.c.b16 %v2110, %v2109
      %v2117 = vpack.c.b16 %v2112, %v2111
      %vm2118 = vcmask 31744
      %v2120 = vsel %vm2118, %v2113, 0
      %v2123 = vsel %vm2118, %v2114, 0
      %v2126 = vsel %vm2118, %v2115, 0
      %v2129 = vsel %vm2118, %v2116, 0
      %v2132 = vsel %vm2118, %v2117, 0
      %vm2134 = vcmask 1041408
      %v2136 = vsel %vm2134, %v2092, 0
      %2138 = vmatprep.subr.bf16.mxu0 0
      %2139 = vmatpush1.bf16.msra.mxu0 0
      %2140 = vmatprep.subr.bf16.mxu0 0
      %2141 = vmatpush1.bf16.msra.mxu0 0
      %2142 = vmatprep.subr.bf16.mxu0 0
      %2143 = vmatpush1.bf16.msra.mxu0 0
      %2144 = vmatprep.subr.bf16.mxu0 0
      %2145 = vmatpush1.bf16.msra.mxu0 0
      %2146 = vmatprep.subr.bf16.mxu0 0
      %2147 = vmatpush1.bf16.msra.mxu0 0
      %2148 = vmatprep.subr.bf16.mxu0 0
      %2149 = vmatpush1.bf16.msra.mxu0 0
      %2150 = vmatprep.subr.bf16.mxu0 0
      %2151 = vmatpush1.bf16.msra.mxu0 0
      %2152 = vmatprep.subr.bf16.mxu0 0
      %2153 = vmatpush1.bf16.msra.mxu0 %v2136
      %2154 = vmatprep.subr.bf16.mxu0 0
      %2155 = vmatpush2.bf16.msra.mxu0 0
      %2156 = vmatprep.subr.bf16.mxu0 0
      %2157 = vmatpush2.bf16.msra.mxu0 0
      %2158 = vmatprep.subr.bf16.mxu0 0
      %2159 = vmatpush2.bf16.msra.mxu0 0
      %2160 = vmatprep.subr.bf16.mxu0 0
      %2161 = vmatpush2.bf16.msra.mxu0 0
      %2162 = vmatprep.subr.bf16.mxu0 0
      %2163 = vmatpush2.bf16.msra.mxu0 0
      %2164 = vmatprep.subr.bf16.mxu0 0
      %2165 = vmatpush2.bf16.msra.mxu0 0
      %2166 = vmatprep.subr.bf16.mxu0 0
      %2167 = vmatpush2.bf16.msra.mxu0 0
      %2168 = vmatprep.subr.bf16.mxu0 0
      %2169 = vmatpush2.bf16.msra.mxu0 0
      %2170 = vmatprep.mubr.bf16.mxu0 0
      %2171 = vmatmul.mubr.bf16.gmra.mxu0 %v2120
      %v2172 = vpop.f32.mrf.mxu0
      %v2173 = vadd.f32 0.0, %v2172
      %v2174 = vpop.f32.mrf.mxu0
      %v2175 = vpop.f32.mrf.mxu0
      %v2176 = vadd.f32 0.0, %v2175
      %v2177 = vpop.f32.mrf.mxu0
      %2178 = vmatprep.mubr.bf16.mxu0 0
      %2179 = vmatmul.mubr.bf16.gmra.mxu0 %v2123
      %v2180 = vpop.f32.mrf.mxu0
      %v2181 = vadd.f32 0.0, %v2180
      %v2182 = vpop.f32.mrf.mxu0
      %v2183 = vpop.f32.mrf.mxu0
      %v2184 = vadd.f32 0.0, %v2183
      %v2185 = vpop.f32.mrf.mxu0
      %2186 = vmatprep.mubr.bf16.mxu0 0
      %2187 = vmatmul.mubr.bf16.gmra.mxu0 %v2126
      %v2188 = vpop.f32.mrf.mxu0
      %v2189 = vadd.f32 0.0, %v2188
      %v2190 = vpop.f32.mrf.mxu0
      %v2191 = vpop.f32.mrf.mxu0
      %v2192 = vadd.f32 0.0, %v2191
      %v2193 = vpop.f32.mrf.mxu0
      %2194 = vmatprep.mubr.bf16.mxu0 0
      %2195 = vmatmul.mubr.bf16.gmra.mxu0 %v2129
      %v2196 = vpop.f32.mrf.mxu0
      %v2197 = vadd.f32 0.0, %v2196
      %v2198 = vpop.f32.mrf.mxu0
      %v2199 = vpop.f32.mrf.mxu0
      %v2200 = vadd.f32 0.0, %v2199
      %v2201 = vpop.f32.mrf.mxu0
      %2202 = vmatprep.mubr.bf16.mxu0 0
      %2203 = vmatmul.mubr.bf16.gmra.mxu0 %v2132
      %v2204 = vpop.f32.mrf.mxu0
      %v2205 = vadd.f32 0.0, %v2204
      %v2206 = vpop.f32.mrf.mxu0
      %v2207 = vpop.f32.mrf.mxu0
      %v2208 = vadd.f32 0.0, %v2207
      %v2209 = vpop.f32.mrf.mxu0
      %2210 = vdwg.mxu0
      %v2211 = vld [vmem:[%s333] sm:$0x1]
      %v2213 = vlaneseq
      %v2214 = vshrl.u32 %v2213, 7
      %v2215 = vsub.s32 0, %v2214
      %v2216 = vrot.slane %v2211, %v2215
      %v2218 = vadd.f32 %v2072, %v2216
      %v2219 = vadd.f32 %v2073, %v2216
      %v2220 = vadd.f32 %v2074, %v2216
      %v2221 = vadd.f32 %v2075, %v2216
      %v2222 = vadd.f32 %v2076, %v2216
      %v2223 = vadd.f32 %v2077, %v2216
      %v2224 = vadd.f32 %v2078, %v2216
      %v2225 = vadd.f32 %v2079, %v2216
      %v2226 = vadd.f32 %v2080, %v2216
      %v2227 = vadd.f32 %v2081, %v2216
      %v2228 = vadd.f32 %v2218, %v2173
      %v2229 = vadd.f32 %v2219, %v2176
      %v2230 = vadd.f32 %v2220, %v2181
      %v2231 = vadd.f32 %v2221, %v2184
      %v2232 = vadd.f32 %v2222, %v2189
      %v2233 = vadd.f32 %v2223, %v2192
      %v2234 = vadd.f32 %v2224, %v2197
      %v2235 = vadd.f32 %v2225, %v2200
      %v2236 = vadd.f32 %v2226, %v2205
      %v2237 = vadd.f32 %v2227, %v2208
      %v2238 = vld [vmem:[%s345] sm:$0x1]
      %v2240 = vlaneseq
      %v2241 = vshrl.u32 %v2240, 7
      %v2242 = vsub.s32 0, %v2241
      %v2243 = vrot.slane %v2238, %v2242
      %v2245 = vadd.f32 %v2228, %v2243
      %v2246 = vadd.f32 %v2229, %v2243
      %v2247 = vadd.f32 %v2230, %v2243
      %v2248 = vadd.f32 %v2231, %v2243
      %v2249 = vadd.f32 %v2232, %v2243
      %v2250 = vadd.f32 %v2233, %v2243
      %v2251 = vadd.f32 %v2234, %v2243
      %v2252 = vadd.f32 %v2235, %v2243
      %v2253 = vadd.f32 %v2236, %v2243
      %v2254 = vadd.f32 %v2237, %v2243
      %v2255 = vmax.f32 %v2245, 0.0
      %v2256 = vmax.f32 %v2246, 0.0
      %v2257 = vmax.f32 %v2247, 0.0
      %v2258 = vmax.f32 %v2248, 0.0
      %v2259 = vmax.f32 %v2249, 0.0
      %v2260 = vmax.f32 %v2250, 0.0
      %v2261 = vmax.f32 %v2251, 0.0
      %v2262 = vmax.f32 %v2252, 0.0
      %v2263 = vmax.f32 %v2253, 0.0
      %v2264 = vmax.f32 %v2254, 0.0
      %v2265 = vpack.c.bf16 %v2256, %v2255
      %v2266 = vpack.c.bf16 %v2258, %v2257
      %v2267 = vpack.c.bf16 %v2260, %v2259
      %v2268 = vpack.c.bf16 %v2262, %v2261
      %v2269 = vpack.c.bf16 %v2264, %v2263
      %v2275 = vunpack.c.l.b16 %v2265
      %v2276 = vunpack.c.h.b16 %v2265
      %v2277 = vunpack.c.l.b16 %v2266
      %v2278 = vunpack.c.h.b16 %v2266
      %v2279 = vunpack.c.l.b16 %v2267
      %v2280 = vunpack.c.h.b16 %v2267
      %v2281 = vunpack.c.l.b16 %v2268
      %v2282 = vunpack.c.h.b16 %v2268
      %v2283 = vunpack.c.l.b16 %v2269
      %v2284 = vunpack.c.h.b16 %v2269
      %v2285 = vpack.c.b16 %v2275, %v2275
      %v2286 = vpack.c.b16 %v2276, %v2276
      %v2287 = vpack.c.b16 %v2277, %v2277
      %v2288 = vpack.c.b16 %v2278, %v2278
      %v2289 = vpack.c.b16 %v2279, %v2279
      %v2290 = vpack.c.b16 %v2280, %v2280
      %v2291 = vpack.c.b16 %v2281, %v2281
      %v2292 = vpack.c.b16 %v2282, %v2282
      %v2293 = vpack.c.b16 %v2283, %v2283
      %v2294 = vpack.c.b16 %v2284, %v2284
      %2305 = vst [vmem:[%s353] sm:$0xf] %v2285
      %2306 = vst [vmem:[%s353 + $0x4] sm:$0xf] %v2286
      %2307 = vst [vmem:[%s353 + $0x8] sm:$0xf] %v2287
      %2308 = vst [vmem:[%s353 + $0xc] sm:$0xf] %v2288
      %2309 = vst [vmem:[%s353 + $0x10] sm:$0xf] %v2289
      %2310 = vst [vmem:[%s353 + $0x14] sm:$0xf] %v2290
      %2311 = vst [vmem:[%s353 + $0x18] sm:$0xf] %v2291
      %2312 = vst [vmem:[%s353 + $0x1c] sm:$0xf] %v2292
      %2313 = vst [vmem:[%s353 + $0x20] sm:$0xf] %v2293
      %2314 = vst [vmem:[%s353 + $0x24] sm:$0xf] %v2294
      %p2315 = scmp.lt.s32.totalorder %s22, 1
      %s2316 = scalar_select %p2315, %s22, 1
      %p2317 = scmp.lt.s32.totalorder %s21, 0
      %s2318 = scalar_select %p2317, %s21, 0
      %s2319 = smul.addr %s2316, 10
      %s2320 = sadd.s32 %s2318, %s2319
      %s2321 = smul.addr %s2320, 4
      %s2322 = scalar_lea.vmem %s6, %s2321
      // Predicated region
      $region45: #{block_forward.3} parent=43 // pred_check
        %p2323 = pneg %p205
      $region46: #{block_forward.3} parent=43 // pred_check_branch
        %2325 = sbr.rel (%p2323) target = $region48
      $region47: #{block_forward.3} parent=43 // pred_region
        _
      $region48: #{block_forward.3} parent=43 // pred_fallthru
        _
    $region44: #{block_forward.3} parent=5 // pred_fallthru
      _
    %p2326 = scmp.le.s32.totalorder 2, %s12
    // Predicated region
    $region49: #{block_forward.3} parent=5 // pred_check
      %p2327 = pneg %p2326
    $region50: #{block_forward.3} parent=5 // pred_check_branch
      %2329 = sbr.rel (%p2327) target = $region52
    $region51: #{block_forward.3} parent=5 // pred_region
      %s2330 = ssub.s32 %s12, 2
      // Predicated region
      $region53: #{block_forward.3} parent=51 // pred_check
        %p2331 = pneg %p211
      $region54: #{block_forward.3} parent=51 // pred_check_branch
        %2333 = sbr.rel (%p2331) target = $region56
      $region55: #{block_forward.3} parent=51 // pred_region
        %p2334 = scmp.lt.s32.totalorder %s24, 1
        %s2335 = scalar_select %p2334, %s24, 1
        %p2336 = scmp.lt.s32.totalorder %s23, 0
        %s2337 = scalar_select %p2336, %s23, 0
        %s2338 = smul.addr %s2335, 10
        %s2339 = sadd.s32 %s2337, %s2338
        %s2340 = smul.addr %s2339, 4
        %s2341 = scalar_lea.vmem %s6, %s2340
      $region56: #{block_forward.3} parent=51 // pred_fallthru
        _
    $region52: #{block_forward.3} parent=5 // pred_fallthru
      _
  $region6: #{block_forward.3} parent=0 // loop_footer
    %s16 = sadd.s32 1, %s12
  $region7: #{block_forward.3} parent=0 // loop_footer_branch
    %11 = sbr.rel target = $region3
  $region8: #{block_forward.3} parent=0 // loop_exit
    _

</llo_original>
